<compile_context>
chip_gen: v7x
topology: tpu7x:2x2x1
jax: 0.10.0
libtpu: 0.0.40
codegen_flags: <defaults>
</compile_context>

<pallas_src>
import functools

import jax
import jax.numpy as jnp
from jax.experimental import pallas as pl
from jax.experimental.pallas import tpu as pltpu

MXU_DTYPE = jnp.bfloat16          # matmul operand dtype (f32 accumulation)
ACT_DTYPE = jnp.bfloat16          # inter-stage activation storage dtype
BN_EPS = 1e-5


def _vmem_limit_bytes():
    # ~3/4 of physical VMEM: 96 MiB on v5e/v6e (128 MiB), 48 MiB on v7x (64 MiB).
    try:
        cap = int(pltpu.get_tpu_info().vmem_capacity_bytes)
    except Exception:
        cap = 64 * 1024 * 1024
    return int(min(96 * 1024 * 1024, cap * 3 // 4))


VMEM_LIMIT_BYTES = _vmem_limit_bytes()


# --------------------------------------------------------------------------
# Kernels
# --------------------------------------------------------------------------
def _write_stats(st_ref, yf):
    # Packed, lane-dense BN partial statistics: [sum | sum of squares].
    st_ref[...] = jnp.concatenate(
        [jnp.sum(yf, axis=0, keepdims=True),
         jnp.sum(yf * yf, axis=0, keepdims=True)], axis=-1).reshape(1, 1, -1)


def _conv1x1_stats_kernel(x_ref, w_ref, y_ref, st_ref):
    # y = x @ w (1x1 conv, no bias); BN statistics fused into the epilogue.
    # Stats are taken on the bf16-rounded value the next stage will read.
    y = jnp.dot(x_ref[...].astype(MXU_DTYPE), w_ref[...],
                preferred_element_type=jnp.float32)
    yb = y.astype(y_ref.dtype)
    y_ref[...] = yb
    _write_stats(st_ref, yb.astype(jnp.float32))


def _bn_relu_conv1x1_stats_kernel(x_ref, scale_ref, shift_ref, w_ref,
                                  y_ref, st_ref):
    # a = relu(x * scale + shift)  (previous BN folded into scale/shift, f32),
    # then y = a @ w, with the next BN's statistics fused into the epilogue.
    a = jnp.maximum(
        x_ref[...].astype(jnp.float32) * scale_ref[...] + shift_ref[...], 0.0)
    y = jnp.dot(a.astype(MXU_DTYPE), w_ref[...],
                preferred_element_type=jnp.float32)
    yb = y.astype(y_ref.dtype)
    y_ref[...] = yb
    _write_stats(st_ref, yb.astype(jnp.float32))


def _bn_relu_conv3x3_stats_kernel(x_ref, scale_ref, shift_ref, w_ref,
                                  y_ref, st_ref, *, width):
    # One image per grid step.  BN1 affine + ReLU (f32), then the 3x3 /
    # stride-1 / pad-1 conv as a single K-side im2col matmul:
    # patches (HW, 9*C) @ w2 (9*C, C), f32 accumulation on the MXU.
    HW, C = x_ref.shape
    W = width
    a = jnp.maximum(
        x_ref[...].astype(jnp.float32) * scale_ref[...] + shift_ref[...], 0.0)

    # w+-1 neighbour columns; boundary mask == the conv's zero padding.
    wpos = jax.lax.broadcasted_iota(jnp.int32, (HW, 1), 0) % W
    zrow = jnp.zeros((1, C), jnp.float32)
    left = jnp.where(wpos > 0,
                     jnp.concatenate([zrow, a[:HW - 1]], axis=0), 0.0)
    right = jnp.where(wpos < W - 1,
                      jnp.concatenate([a[1:], zrow], axis=0), 0.0)

    # Channel-axis im2col.  mid holds the (kw=0,1,2) taps of row h; the h-1 /
    # h+1 taps are the same slab shifted by one image row with zero fill.
    mid = jnp.concatenate([left.astype(MXU_DTYPE), a.astype(MXU_DTYPE),
                           right.astype(MXU_DTYPE)], axis=-1)      # (HW, 3C)
    zband = jnp.zeros((W, 3 * C), MXU_DTYPE)
    top = jnp.concatenate([zband, mid[:HW - W]], axis=0)           # row h-1
    bot = jnp.concatenate([mid[W:], zband], axis=0)                # row h+1
    patches = jnp.concatenate([top, mid, bot], axis=-1)            # (HW, 9C)

    y = jnp.dot(patches, w_ref[...], preferred_element_type=jnp.float32)
    yb = y.astype(y_ref.dtype)
    y_ref[...] = yb
    _write_stats(st_ref, yb.astype(jnp.float32))


def _bn_add_relu_kernel(y_ref, res_ref, scale_ref, shift_ref, o_ref):
    # BN3 affine + residual add + final ReLU (lane-dense Cout output tile).
    o_ref[...] = jnp.maximum(
        y_ref[...].astype(jnp.float32) * scale_ref[...] + shift_ref[...]
        + res_ref[...], 0.0).astype(o_ref.dtype)


# --------------------------------------------------------------------------
# Host-side helpers
# --------------------------------------------------------------------------
def _pick_row_tile(rows, target, bytes_per_row, vmem_limit):
    """Largest multiple-of-8 divisor of `rows` that is <= target, <= rows//2
    (>= 2 grid steps: double buffering + v7x megacore) and fits the VMEM
    budget (tiles are double-buffered, so keep ~1/4 of the limit per tile)."""
    assert rows % 8 == 0, "N*H*W must be a multiple of 8"
    budget_rows = max(8, (vmem_limit // 4) // max(bytes_per_row, 1))
    cap = min(target, max(rows // 2, 8), budget_rows)
    cap = max(8, cap - cap % 8)
    best = 8
    d = 8
    while d <= cap:
        if rows % d == 0:
            best = d
        d += 8
    return best


def _bn_affine(stats, count, gamma, beta):
    """Fold training-mode BN (batch mean, biased variance) into scale/shift.

    `stats` is the packed (tiles, 1, 2*C) [sum | sumsq] partials.  Variance is
    E[x^2]-E[x]^2 in f32 (clamped at 0); fine for unit-scale activations.
    """
    tot = jnp.sum(stats, axis=(0, 1))                    # (2C,)
    c = tot.shape[0] // 2
    mean = tot[:c] / count
    var = jnp.maximum(tot[c:] / count - mean * mean, 0.0)
    scale = gamma.reshape(-1) * jax.lax.rsqrt(var + BN_EPS)
    shift = beta.reshape(-1) - mean * scale
    return scale.reshape(1, -1), shift.reshape(1, -1)


def bottleneck_block_nhwc(x_nhwc, params, *, row_tile_target=2048):
    (w1, g1, b1, w2, g2, b2, w3, g3, b3) = params
    N, H, W, Cin = x_nhwc.shape
    Cmid = w1.shape[1]
    Cout = w3.shape[1]
    assert Cout == Cin, "identity_downsample is None => Cout must equal Cin"
    HW = H * W
    R = N * HW
    assert HW % 8 == 0

    # Heaviest per-row HBM footprint across the row-tiled stages (stage 4:
    # bf16 y3 + f32 residual + f32 out).
    bytes_per_row = max(10 * Cout, 4 * Cin + 2 * Cmid, 2 * Cmid + 2 * Cout)
    TR = _pick_row_tile(R, row_tile_target, bytes_per_row, VMEM_LIMIT_BYTES)
    nT = R // TR

    x2d = x_nhwc.reshape(R, Cin)                         # f32: matmul + residual
    w1b = w1.astype(MXU_DTYPE)                           # cast weights once
    w2b = w2.astype(MXU_DTYPE).reshape(9 * Cmid, Cmid)   # im2col weight layout
    w3b = w3.astype(MXU_DTYPE)

    cparams = pltpu.CompilerParams(
        dimension_semantics=("parallel",), vmem_limit_bytes=VMEM_LIMIT_BYTES)

    # ---- stage 1: conv1 (1x1) + BN1 statistics -----------------------------
    y1, st1 = pl.pallas_call(
        _conv1x1_stats_kernel,
        grid=(nT,),
        in_specs=[pl.BlockSpec((TR, Cin), lambda i: (i, 0)),
                  pl.BlockSpec((Cin, Cmid), lambda i: (0, 0))],
        out_specs=[pl.BlockSpec((TR, Cmid), lambda i: (i, 0)),
                   pl.BlockSpec((1, 1, 2 * Cmid), lambda i: (i, 0, 0))],
        out_shape=[jax.ShapeDtypeStruct((R, Cmid), ACT_DTYPE),
                   jax.ShapeDtypeStruct((nT, 1, 2 * Cmid), jnp.float32)],
        compiler_params=cparams,
    )(x2d, w1b)
    scale1, shift1 = _bn_affine(st1, R, g1, b1)

    # ---- stage 2: BN1 + ReLU + conv2 (3x3, pad 1, im2col) + BN2 stats -------
    y2, st2 = pl.pallas_call(
        functools.partial(_bn_relu_conv3x3_stats_kernel, width=W),
        grid=(N,),
        in_specs=[pl.BlockSpec((HW, Cmid), lambda n: (n, 0)),
                  pl.BlockSpec((1, Cmid), lambda n: (0, 0)),
                  pl.BlockSpec((1, Cmid), lambda n: (0, 0)),
                  pl.BlockSpec((9 * Cmid, Cmid), lambda n: (0, 0))],
        out_specs=[pl.BlockSpec((HW, Cmid), lambda n: (n, 0)),
                   pl.BlockSpec((1, 1, 2 * Cmid), lambda n: (n, 0, 0))],
        out_shape=[jax.ShapeDtypeStruct((R, Cmid), ACT_DTYPE),
                   jax.ShapeDtypeStruct((N, 1, 2 * Cmid), jnp.float32)],
        compiler_params=cparams,
    )(y1, scale1, shift1, w2b)
    scale2, shift2 = _bn_affine(st2, R, g2, b2)

    # ---- stage 3: BN2 + ReLU + conv3 (1x1) + BN3 statistics -----------------
    y3, st3 = pl.pallas_call(
        _bn_relu_conv1x1_stats_kernel,
        grid=(nT,),
        in_specs=[pl.BlockSpec((TR, Cmid), lambda i: (i, 0)),
                  pl.BlockSpec((1, Cmid), lambda i: (0, 0)),
                  pl.BlockSpec((1, Cmid), lambda i: (0, 0)),
                  pl.BlockSpec((Cmid, Cout), lambda i: (0, 0))],
        out_specs=[pl.BlockSpec((TR, Cout), lambda i: (i, 0)),
                   pl.BlockSpec((1, 1, 2 * Cout), lambda i: (i, 0, 0))],
        out_shape=[jax.ShapeDtypeStruct((R, Cout), ACT_DTYPE),
                   jax.ShapeDtypeStruct((nT, 1, 2 * Cout), jnp.float32)],
        compiler_params=cparams,
    )(y2, scale2, shift2, w3b)
    scale3, shift3 = _bn_affine(st3, R, g3, b3)

    # ---- stage 4: BN3 + residual add + final ReLU ---------------------------
    out2d = pl.pallas_call(
        _bn_add_relu_kernel,
        grid=(nT,),
        in_specs=[pl.BlockSpec((TR, Cout), lambda i: (i, 0)),
                  pl.BlockSpec((TR, Cout), lambda i: (i, 0)),
                  pl.BlockSpec((1, Cout), lambda i: (0, 0)),
                  pl.BlockSpec((1, Cout), lambda i: (0, 0))],
        out_specs=pl.BlockSpec((TR, Cout), lambda i: (i, 0)),
        out_shape=jax.ShapeDtypeStruct((R, Cout), jnp.float32),
        compiler_params=cparams,
    )(y3, x2d, scale3, shift3)

    return out2d.reshape(N, H, W, Cout)


def bottleneck_block_nchw(x_nchw, params, *, row_tile_target=2048):
    # NOTE: in a full network keep activations NHWC end-to-end and pay this
    # transpose once, not per block.
    x_nhwc = jnp.transpose(x_nchw, (0, 2, 3, 1))
    y_nhwc = bottleneck_block_nhwc(x_nhwc, params,
                                   row_tile_target=row_tile_target)
    return jnp.transpose(y_nhwc, (0, 3, 1, 2))


# ----------------- pure-JAX reference (different code path) -----------------
def reference_block_nhwc(x, params, mxu_dtype=MXU_DTYPE):
    # Matches the kernel's precision scheme: bf16 MXU operands with f32
    # accumulation, bf16 inter-stage storage (rounded before BN), f32 BN /
    # ReLU / residual math, training-mode BatchNorm (biased variance).
    (w1, g1, b1, w2, g2, b2, w3, g3, b3) = params
    dn = ('NHWC', 'HWIO', 'NHWC')

    def conv(a, w, pad):
        return jax.lax.conv_general_dilated(
            a.astype(mxu_dtype), w.astype(mxu_dtype), (1, 1), pad,
            dimension_numbers=dn, preferred_element_type=jnp.float32)

    def bn(y, g, b):
        mean = jnp.mean(y, axis=(0, 1, 2), keepdims=True)
        var = jnp.mean(jnp.square(y - mean), axis=(0, 1, 2), keepdims=True)
        return ((y - mean) * jax.lax.rsqrt(var + BN_EPS)
                * g.reshape(1, 1, 1, -1) + b.reshape(1, 1, 1, -1))

    def round_act(y):  # bf16 inter-stage storage
        return y.astype(ACT_DTYPE).astype(jnp.float32)

    y = round_act(conv(x, w1.reshape(1, 1, *w1.shape), 'VALID'))
    y = jax.nn.relu(bn(y, g1, b1))
    y = round_act(conv(y, w2, ((1, 1), (1, 1))))
    y = jax.nn.relu(bn(y, g2, b2))
    y = round_act(conv(y, w3.reshape(1, 1, *w3.shape), 'VALID'))
    y = bn(y, g3, b3)
    return jax.nn.relu(y + x)


def make_params(key, in_channels, intermediate_channels):
    expansion = 4
    cout = intermediate_channels * expansion
    ks = jax.random.split(key, 9)
    # conv weights in matmul-friendly layouts:
    #   w1: (Cin, Cmid)  == PyTorch (Cmid, Cin, 1, 1) transposed
    #   w2: (3, 3, Cmid, Cmid) HWIO
    #   w3: (Cmid, Cout)
    w1 = 0.1 * jax.random.normal(ks[0], (in_channels, intermediate_channels), jnp.float32)
    w2 = 0.1 * jax.random.normal(ks[1], (3, 3, intermediate_channels, intermediate_channels), jnp.float32)
    w3 = 0.1 * jax.random.normal(ks[2], (intermediate_channels, cout), jnp.float32)
    g1 = 1.0 + 0.1 * jax.random.normal(ks[3], (1, intermediate_channels), jnp.float32)
    b1 = 0.1 * jax.random.normal(ks[4], (1, intermediate_channels), jnp.float32)
    g2 = 1.0 + 0.1 * jax.random.normal(ks[5], (1, intermediate_channels), jnp.float32)
    b2 = 0.1 * jax.random.normal(ks[6], (1, intermediate_channels), jnp.float32)
    g3 = 1.0 + 0.1 * jax.random.normal(ks[7], (1, cout), jnp.float32)
    b3 = 0.1 * jax.random.normal(ks[8], (1, cout), jnp.float32)
    return (w1, g1, b1, w2, g2, b2, w3, g3, b3)


if __name__ == "__main__":
    key = jax.random.PRNGKey(0)
    k_x, k_p = jax.random.split(key)

    # block(in_channels=256, intermediate_channels=64, identity_downsample=None,
    #       stride=1): the ResNet layer1 bottleneck channel shape (lane-dense
    #       Cin/Cout=256, Cmid=64) at reduced spatial size.
    N, Cin, H, W = 2, 256, 16, 16
    Cmid = 64                        # expansion 4 -> Cout = 256 = Cin
    x_nchw = jax.random.normal(k_x, (N, Cin, H, W), jnp.float32)
    params = make_params(k_p, Cin, Cmid)

    # row_tile_target=128 -> 4 grid steps for the row-tiled stages (exercises
    # the double-buffered pipeline); default 2048 for large inputs.
    fwd = jax.jit(lambda x, p: bottleneck_block_nchw(x, p, row_tile_target=128))
    out = jax.block_until_ready(fwd(x_nchw, params))

    x_nhwc = jnp.transpose(x_nchw, (0, 2, 3, 1))
    ref = jnp.transpose(reference_block_nhwc(x_nhwc, params), (0, 3, 1, 2))
    assert out.shape == (N, Cin, H, W)
    err = float(jnp.max(jnp.abs(out - ref)))
    assert jnp.allclose(out, ref, atol=1e-2, rtol=1e-2), f"max abs err {err}"

    print("KERNEL_OK")
</pallas_src>

<mosaic_0001>
module attributes {stable_mosaic.version = 11 : i64} {
  func.func @_conv1x1_stats_kernel(%arg0: i32, %arg1: memref<128x256xf32, #tpu.memory_space<vmem>>, %arg2: memref<256x64xbf16, #tpu.memory_space<vmem>>, %arg3: memref<128x64xbf16, #tpu.memory_space<vmem>>, %arg4: memref<1x1x128xf32, #tpu.memory_space<vmem>>) attributes {dimension_semantics = [#tpu.dimension_semantics<parallel>], iteration_bounds = array<i64: 4>, scalar_prefetch = 0 : i64, scratch_operands = 0 : i64, tpu.core_type = #tpu.core_type<tc>, window_params = [{transform_indices = @transform_0, window_bounds = array<i64: 128, 256>}, {pipeline_mode = #tpu.pipeline_mode<synchronous>, transform_indices = @transform_1, window_bounds = array<i64: 256, 64>}, {transform_indices = @transform_2, window_bounds = array<i64: 128, 64>}, {transform_indices = @transform_3, window_bounds = array<i64: 1, 1, 128>}]} {
    %c0 = arith.constant 0 : index
    %c0_0 = arith.constant 0 : index
    %0 = vector.load %arg1[%c0, %c0_0] : memref<128x256xf32, #tpu.memory_space<vmem>>, vector<128x256xf32>
    %1 = arith.truncf %0 : vector<128x256xf32> to vector<128x256xbf16>
    %c0_1 = arith.constant 0 : index
    %c0_2 = arith.constant 0 : index
    %2 = vector.load %arg2[%c0_1, %c0_2] : memref<256x64xbf16, #tpu.memory_space<vmem>>, vector<256x64xbf16>
    %cst = arith.constant dense<0.000000e+00> : vector<128x64xf32>
    %3 = tpu.matmul %1, %2, %cst {dimension_numbers = #tpu.dot_dimension_numbers<[1], [0], [0], [1], [0, 0, 1, 1], [], []>} : vector<128x256xbf16>, vector<256x64xbf16>, vector<128x64xf32> -> vector<128x64xf32>
    %4 = arith.truncf %3 : vector<128x64xf32> to vector<128x64xbf16>
    %c0_3 = arith.constant 0 : index
    %c0_4 = arith.constant 0 : index
    %5 = vector.load %arg3[%c0_3, %c0_4] : memref<128x64xbf16, #tpu.memory_space<vmem>>, vector<128x64xbf16>
    tpu.vector_store %arg3[%c0_3, %c0_4], %4 {strides = array<i32>} : memref<128x64xbf16, #tpu.memory_space<vmem>>, vector<128x64xbf16>,
    %6 = arith.extf %4 : vector<128x64xbf16> to vector<128x64xf32>
    %cst_5 = arith.constant dense<0.000000e+00> : vector<64xf32>
    %7 = vector.multi_reduction <add>, %6, %cst_5 [0] : vector<128x64xf32> to vector<64xf32>
    %8 = vector.shape_cast %7 : vector<64xf32> to vector<1x64xf32>
    %9 = arith.mulf %6, %6 : vector<128x64xf32>
    %cst_6 = arith.constant dense<0.000000e+00> : vector<64xf32>
    %10 = vector.multi_reduction <add>, %9, %cst_6 [0] : vector<128x64xf32> to vector<64xf32>
    %11 = vector.shape_cast %10 : vector<64xf32> to vector<1x64xf32>
    %12 = tpu.concatenate %8, %11 in 1 : vector<1x64xf32>, vector<1x64xf32> -> vector<1x128xf32>
    %13 = vector.shape_cast %12 : vector<1x128xf32> to vector<1x1x128xf32>
    %c0_7 = arith.constant 0 : index
    %c0_8 = arith.constant 0 : index
    %c0_9 = arith.constant 0 : index
    %14 = vector.load %arg4[%c0_7, %c0_8, %c0_9] : memref<1x1x128xf32, #tpu.memory_space<vmem>>, vector<1x1x128xf32>
    tpu.vector_store %arg4[%c0_7, %c0_8, %c0_9], %13 {strides = array<i32>} : memref<1x1x128xf32, #tpu.memory_space<vmem>>, vector<1x1x128xf32>,
    return
  }
  func.func @transform_0(%arg0: i32) -> (i32, i32) {
    %c0_i32 = arith.constant 0 : i32
    %c0_i32_0 = arith.constant 0 : i32
    return %arg0, %c0_i32 : i32, i32
  }
  func.func @transform_1(%arg0: i32) -> (i32, i32) {
    %c0_i32 = arith.constant 0 : i32
    %c0_i32_0 = arith.constant 0 : i32
    %c0_i32_1 = arith.constant 0 : i32
    return %c0_i32, %c0_i32_0 : i32, i32
  }
  func.func @transform_2(%arg0: i32) -> (i32, i32) {
    %c0_i32 = arith.constant 0 : i32
    %c0_i32_0 = arith.constant 0 : i32
    return %arg0, %c0_i32 : i32, i32
  }
  func.func @transform_3(%arg0: i32) -> (i32, i32, i32) {
    %c0_i32 = arith.constant 0 : i32
    %c0_i32_0 = arith.constant 0 : i32
    %c0_i32_1 = arith.constant 0 : i32
    return %arg0, %c0_i32, %c0_i32_0 : i32, i32, i32
  }
}

module attributes {stable_mosaic.version = 11 : i64} {
  func.func @_bn_relu_conv3x3_stats_kernel(%arg0: i32, %arg1: memref<256x64xbf16, #tpu.memory_space<vmem>>, %arg2: memref<1x64xf32, #tpu.memory_space<vmem>>, %arg3: memref<1x64xf32, #tpu.memory_space<vmem>>, %arg4: memref<576x64xbf16, #tpu.memory_space<vmem>>, %arg5: memref<256x64xbf16, #tpu.memory_space<vmem>>, %arg6: memref<1x1x128xf32, #tpu.memory_space<vmem>>) attributes {dimension_semantics = [#tpu.dimension_semantics<parallel>], iteration_bounds = array<i64: 2>, scalar_prefetch = 0 : i64, scratch_operands = 0 : i64, tpu.core_type = #tpu.core_type<tc>, window_params = [{transform_indices = @transform_0, window_bounds = array<i64: 256, 64>}, {pipeline_mode = #tpu.pipeline_mode<synchronous>, transform_indices = @transform_1, window_bounds = array<i64: 1, 64>}, {pipeline_mode = #tpu.pipeline_mode<synchronous>, transform_indices = @transform_2, window_bounds = array<i64: 1, 64>}, {pipeline_mode = #tpu.pipeline_mode<synchronous>, transform_indices = @transform_3, window_bounds = array<i64: 576, 64>}, {transform_indices = @transform_4, window_bounds = array<i64: 256, 64>}, {transform_indices = @transform_5, window_bounds = array<i64: 1, 1, 128>}]} {
    %c0 = arith.constant 0 : index
    %c0_0 = arith.constant 0 : index
    %0 = vector.load %arg1[%c0, %c0_0] : memref<256x64xbf16, #tpu.memory_space<vmem>>, vector<256x64xbf16>
    %1 = arith.extf %0 : vector<256x64xbf16> to vector<256x64xf32>
    %c0_1 = arith.constant 0 : index
    %c0_2 = arith.constant 0 : index
    %2 = vector.load %arg2[%c0_1, %c0_2] : memref<1x64xf32, #tpu.memory_space<vmem>>, vector<1x64xf32>
    %3 = vector.broadcast %2 : vector<1x64xf32> to vector<256x64xf32>
    %4 = arith.mulf %1, %3 : vector<256x64xf32>
    %c0_3 = arith.constant 0 : index
    %c0_4 = arith.constant 0 : index
    %5 = vector.load %arg3[%c0_3, %c0_4] : memref<1x64xf32, #tpu.memory_space<vmem>>, vector<1x64xf32>
    %6 = vector.broadcast %5 : vector<1x64xf32> to vector<256x64xf32>
    %7 = arith.addf %4, %6 : vector<256x64xf32>
    %cst = arith.constant 0.000000e+00 : f32
    %8 = vector.broadcast %cst : f32 to vector<256x64xf32>
    %9 = arith.maximumf %7, %8 : vector<256x64xf32>
    %10 = tpu.iota {dimensions = array<i32: 0>} : vector<256x1xi32>
    %c16_i32 = arith.constant 16 : i32
    %c0_i32 = arith.constant 0 : i32
    %11 = arith.cmpi eq, %c16_i32, %c0_i32 : i32
    %c1_i32 = arith.constant 1 : i32
    %12 = arith.select %11, %c1_i32, %c16_i32 : i32
    %13 = vector.broadcast %12 : i32 to vector<256x1xi32>
    %14 = arith.remsi %10, %13 : vector<256x1xi32>
    %c0_i32_5 = arith.constant 0 : i32
    %15 = vector.broadcast %c0_i32_5 : i32 to vector<256x1xi32>
    %16 = arith.cmpi ne, %14, %15 : vector<256x1xi32>
    %c0_i32_6 = arith.constant 0 : i32
    %17 = vector.broadcast %c0_i32_6 : i32 to vector<256x1xi32>
    %18 = arith.cmpi slt, %14, %17 : vector<256x1xi32>
    %c0_i32_7 = arith.constant 0 : i32
    %19 = arith.cmpi slt, %12, %c0_i32_7 : i32
    %20 = vector.broadcast %19 : i1 to vector<256x1xi1>
    %21 = vector.broadcast %20 : vector<256x1xi1> to vector<256x1xi1>
    %22 = arith.xori %18, %21 : vector<256x1xi1>
    %23 = arith.andi %22, %16 : vector<256x1xi1>
    %24 = vector.broadcast %12 : i32 to vector<256x1xi32>
    %25 = arith.addi %14, %24 : vector<256x1xi32>
    %26 = arith.select %23, %25, %14 : vector<256x1xi1>, vector<256x1xi32>
    %cst_8 = arith.constant 0.000000e+00 : f32
    %27 = vector.broadcast %cst_8 : f32 to vector<1x64xf32>
    %c0_i32_9 = arith.constant 0 : i32
    %28 = vector.broadcast %c0_i32_9 : i32 to vector<256x1xi32>
    %29 = arith.cmpi sgt, %26, %28 : vector<256x1xi32>
    %30 = vector.extract_strided_slice %9 {offsets = [0, 0], sizes = [255, 64], strides = [1, 1]} : vector<256x64xf32> to vector<255x64xf32>
    %31 = tpu.concatenate %27, %30 in 0 : vector<1x64xf32>, vector<255x64xf32> -> vector<256x64xf32>
    %cst_10 = arith.constant 0.000000e+00 : f32
    %32 = vector.shape_cast %29 : vector<256x1xi1> to vector<256x1xi1>
    %33 = vector.broadcast %32 : vector<256x1xi1> to vector<256x64xi1>
    %34 = vector.broadcast %cst_10 : f32 to vector<256x64xf32>
    %35 = arith.select %33, %31, %34 : vector<256x64xi1>, vector<256x64xf32>
    %c15_i32 = arith.constant 15 : i32
    %36 = vector.broadcast %c15_i32 : i32 to vector<256x1xi32>
    %37 = arith.cmpi slt, %26, %36 : vector<256x1xi32>
    %38 = vector.extract_strided_slice %9 {offsets = [1, 0], sizes = [255, 64], strides = [1, 1]} : vector<256x64xf32> to vector<255x64xf32>
    %39 = tpu.concatenate %38, %27 in 0 : vector<255x64xf32>, vector<1x64xf32> -> vector<256x64xf32>
    %cst_11 = arith.constant 0.000000e+00 : f32
    %40 = vector.shape_cast %37 : vector<256x1xi1> to vector<256x1xi1>
    %41 = vector.broadcast %40 : vector<256x1xi1> to vector<256x64xi1>
    %42 = vector.broadcast %cst_11 : f32 to vector<256x64xf32>
    %43 = arith.select %41, %39, %42 : vector<256x64xi1>, vector<256x64xf32>
    %44 = arith.truncf %35 : vector<256x64xf32> to vector<256x64xbf16>
    %45 = arith.truncf %9 : vector<256x64xf32> to vector<256x64xbf16>
    %46 = arith.truncf %43 : vector<256x64xf32> to vector<256x64xbf16>
    %47 = tpu.concatenate %44, %45, %46 in 1 : vector<256x64xbf16>, vector<256x64xbf16>, vector<256x64xbf16> -> vector<256x192xbf16>
    %cst_12 = arith.constant 0.000000e+00 : bf16
    %48 = vector.broadcast %cst_12 : bf16 to vector<16x192xbf16>
    %49 = vector.extract_strided_slice %47 {offsets = [0, 0], sizes = [240, 192], strides = [1, 1]} : vector<256x192xbf16> to vector<240x192xbf16>
    %50 = tpu.concatenate %48, %49 in 0 : vector<16x192xbf16>, vector<240x192xbf16> -> vector<256x192xbf16>
    %51 = vector.extract_strided_slice %47 {offsets = [16, 0], sizes = [240, 192], strides = [1, 1]} : vector<256x192xbf16> to vector<240x192xbf16>
    %52 = tpu.concatenate %51, %48 in 0 : vector<240x192xbf16>, vector<16x192xbf16> -> vector<256x192xbf16>
    %53 = tpu.concatenate %50, %47, %52 in 1 : vector<256x192xbf16>, vector<256x192xbf16>, vector<256x192xbf16> -> vector<256x576xbf16>
    %c0_13 = arith.constant 0 : index
    %c0_14 = arith.constant 0 : index
    %54 = vector.load %arg4[%c0_13, %c0_14] : memref<576x64xbf16, #tpu.memory_space<vmem>>, vector<576x64xbf16>
    %cst_15 = arith.constant dense<0.000000e+00> : vector<256x64xf32>
    %55 = tpu.matmul %53, %54, %cst_15 {dimension_numbers = #tpu.dot_dimension_numbers<[1], [0], [0], [1], [0, 0, 1, 1], [], []>} : vector<256x576xbf16>, vector<576x64xbf16>, vector<256x64xf32> -> vector<256x64xf32>
    %56 = arith.truncf %55 : vector<256x64xf32> to vector<256x64xbf16>
    %c0_16 = arith.constant 0 : index
    %c0_17 = arith.constant 0 : index
    %57 = vector.load %arg5[%c0_16, %c0_17] : memref<256x64xbf16, #tpu.memory_space<vmem>>, vector<256x64xbf16>
    tpu.vector_store %arg5[%c0_16, %c0_17], %56 {strides = array<i32>} : memref<256x64xbf16, #tpu.memory_space<vmem>>, vector<256x64xbf16>,
    %58 = arith.extf %56 : vector<256x64xbf16> to vector<256x64xf32>
    %cst_18 = arith.constant dense<0.000000e+00> : vector<64xf32>
    %59 = vector.multi_reduction <add>, %58, %cst_18 [0] : vector<256x64xf32> to vector<64xf32>
    %60 = vector.shape_cast %59 : vector<64xf32> to vector<1x64xf32>
    %61 = arith.mulf %58, %58 : vector<256x64xf32>
    %cst_19 = arith.constant dense<0.000000e+00> : vector<64xf32>
    %62 = vector.multi_reduction <add>, %61, %cst_19 [0] : vector<256x64xf32> to vector<64xf32>
    %63 = vector.shape_cast %62 : vector<64xf32> to vector<1x64xf32>
    %64 = tpu.concatenate %60, %63 in 1 : vector<1x64xf32>, vector<1x64xf32> -> vector<1x128xf32>
    %65 = vector.shape_cast %64 : vector<1x128xf32> to vector<1x1x128xf32>
    %c0_20 = arith.constant 0 : index
    %c0_21 = arith.constant 0 : index
    %c0_22 = arith.constant 0 : index
    %66 = vector.load %arg6[%c0_20, %c0_21, %c0_22] : memref<1x1x128xf32, #tpu.memory_space<vmem>>, vector<1x1x128xf32>
    tpu.vector_store %arg6[%c0_20, %c0_21, %c0_22], %65 {strides = array<i32>} : memref<1x1x128xf32, #tpu.memory_space<vmem>>, vector<1x1x128xf32>,
    return
  }
  func.func @transform_0(%arg0: i32) -> (i32, i32) {
    %c0_i32 = arith.constant 0 : i32
    %c0_i32_0 = arith.constant 0 : i32
    return %arg0, %c0_i32 : i32, i32
  }
  func.func @transform_1(%arg0: i32) -> (i32, i32) {
    %c0_i32 = arith.constant 0 : i32
    %c0_i32_0 = arith.constant 0 : i32
    %c0_i32_1 = arith.constant 0 : i32
    return %c0_i32, %c0_i32_0 : i32, i32
  }
  func.func @transform_2(%arg0: i32) -> (i32, i32) {
    %c0_i32 = arith.constant 0 : i32
    %c0_i32_0 = arith.constant 0 : i32
    %c0_i32_1 = arith.constant 0 : i32
    return %c0_i32, %c0_i32_0 : i32, i32
  }
  func.func @transform_3(%arg0: i32) -> (i32, i32) {
    %c0_i32 = arith.constant 0 : i32
    %c0_i32_0 = arith.constant 0 : i32
    %c0_i32_1 = arith.constant 0 : i32
    return %c0_i32, %c0_i32_0 : i32, i32
  }
  func.func @transform_4(%arg0: i32) -> (i32, i32) {
    %c0_i32 = arith.constant 0 : i32
    %c0_i32_0 = arith.constant 0 : i32
    return %arg0, %c0_i32 : i32, i32
  }
  func.func @transform_5(%arg0: i32) -> (i32, i32, i32) {
    %c0_i32 = arith.constant 0 : i32
    %c0_i32_0 = arith.constant 0 : i32
    %c0_i32_1 = arith.constant 0 : i32
    return %arg0, %c0_i32, %c0_i32_0 : i32, i32, i32
  }
}

module attributes {stable_mosaic.version = 11 : i64} {
  func.func @_bn_relu_conv1x1_stats_kernel(%arg0: i32, %arg1: memref<128x64xbf16, #tpu.memory_space<vmem>>, %arg2: memref<1x64xf32, #tpu.memory_space<vmem>>, %arg3: memref<1x64xf32, #tpu.memory_space<vmem>>, %arg4: memref<64x256xbf16, #tpu.memory_space<vmem>>, %arg5: memref<128x256xbf16, #tpu.memory_space<vmem>>, %arg6: memref<1x1x512xf32, #tpu.memory_space<vmem>>) attributes {dimension_semantics = [#tpu.dimension_semantics<parallel>], iteration_bounds = array<i64: 4>, scalar_prefetch = 0 : i64, scratch_operands = 0 : i64, tpu.core_type = #tpu.core_type<tc>, window_params = [{transform_indices = @transform_0, window_bounds = array<i64: 128, 64>}, {pipeline_mode = #tpu.pipeline_mode<synchronous>, transform_indices = @transform_1, window_bounds = array<i64: 1, 64>}, {pipeline_mode = #tpu.pipeline_mode<synchronous>, transform_indices = @transform_2, window_bounds = array<i64: 1, 64>}, {pipeline_mode = #tpu.pipeline_mode<synchronous>, transform_indices = @transform_3, window_bounds = array<i64: 64, 256>}, {transform_indices = @transform_4, window_bounds = array<i64: 128, 256>}, {transform_indices = @transform_5, window_bounds = array<i64: 1, 1, 512>}]} {
    %c0 = arith.constant 0 : index
    %c0_0 = arith.constant 0 : index
    %0 = vector.load %arg1[%c0, %c0_0] : memref<128x64xbf16, #tpu.memory_space<vmem>>, vector<128x64xbf16>
    %1 = arith.extf %0 : vector<128x64xbf16> to vector<128x64xf32>
    %c0_1 = arith.constant 0 : index
    %c0_2 = arith.constant 0 : index
    %2 = vector.load %arg2[%c0_1, %c0_2] : memref<1x64xf32, #tpu.memory_space<vmem>>, vector<1x64xf32>
    %3 = vector.broadcast %2 : vector<1x64xf32> to vector<128x64xf32>
    %4 = arith.mulf %1, %3 : vector<128x64xf32>
    %c0_3 = arith.constant 0 : index
    %c0_4 = arith.constant 0 : index
    %5 = vector.load %arg3[%c0_3, %c0_4] : memref<1x64xf32, #tpu.memory_space<vmem>>, vector<1x64xf32>
    %6 = vector.broadcast %5 : vector<1x64xf32> to vector<128x64xf32>
    %7 = arith.addf %4, %6 : vector<128x64xf32>
    %cst = arith.constant 0.000000e+00 : f32
    %8 = vector.broadcast %cst : f32 to vector<128x64xf32>
    %9 = arith.maximumf %7, %8 : vector<128x64xf32>
    %10 = arith.truncf %9 : vector<128x64xf32> to vector<128x64xbf16>
    %c0_5 = arith.constant 0 : index
    %c0_6 = arith.constant 0 : index
    %11 = vector.load %arg4[%c0_5, %c0_6] : memref<64x256xbf16, #tpu.memory_space<vmem>>, vector<64x256xbf16>
    %cst_7 = arith.constant dense<0.000000e+00> : vector<128x256xf32>
    %12 = tpu.matmul %10, %11, %cst_7 {dimension_numbers = #tpu.dot_dimension_numbers<[1], [0], [0], [1], [0, 0, 1, 1], [], []>} : vector<128x64xbf16>, vector<64x256xbf16>, vector<128x256xf32> -> vector<128x256xf32>
    %13 = arith.truncf %12 : vector<128x256xf32> to vector<128x256xbf16>
    %c0_8 = arith.constant 0 : index
    %c0_9 = arith.constant 0 : index
    %14 = vector.load %arg5[%c0_8, %c0_9] : memref<128x256xbf16, #tpu.memory_space<vmem>>, vector<128x256xbf16>
    tpu.vector_store %arg5[%c0_8, %c0_9], %13 {strides = array<i32>} : memref<128x256xbf16, #tpu.memory_space<vmem>>, vector<128x256xbf16>,
    %15 = arith.extf %13 : vector<128x256xbf16> to vector<128x256xf32>
    %cst_10 = arith.constant dense<0.000000e+00> : vector<256xf32>
    %16 = vector.multi_reduction <add>, %15, %cst_10 [0] : vector<128x256xf32> to vector<256xf32>
    %17 = vector.shape_cast %16 : vector<256xf32> to vector<1x256xf32>
    %18 = arith.mulf %15, %15 : vector<128x256xf32>
    %cst_11 = arith.constant dense<0.000000e+00> : vector<256xf32>
    %19 = vector.multi_reduction <add>, %18, %cst_11 [0] : vector<128x256xf32> to vector<256xf32>
    %20 = vector.shape_cast %19 : vector<256xf32> to vector<1x256xf32>
    %21 = tpu.concatenate %17, %20 in 1 : vector<1x256xf32>, vector<1x256xf32> -> vector<1x512xf32>
    %22 = vector.shape_cast %21 : vector<1x512xf32> to vector<1x1x512xf32>
    %c0_12 = arith.constant 0 : index
    %c0_13 = arith.constant 0 : index
    %c0_14 = arith.constant 0 : index
    %23 = vector.load %arg6[%c0_12, %c0_13, %c0_14] : memref<1x1x512xf32, #tpu.memory_space<vmem>>, vector<1x1x512xf32>
    tpu.vector_store %arg6[%c0_12, %c0_13, %c0_14], %22 {strides = array<i32>} : memref<1x1x512xf32, #tpu.memory_space<vmem>>, vector<1x1x512xf32>,
    return
  }
  func.func @transform_0(%arg0: i32) -> (i32, i32) {
    %c0_i32 = arith.constant 0 : i32
    %c0_i32_0 = arith.constant 0 : i32
    return %arg0, %c0_i32 : i32, i32
  }
  func.func @transform_1(%arg0: i32) -> (i32, i32) {
    %c0_i32 = arith.constant 0 : i32
    %c0_i32_0 = arith.constant 0 : i32
    %c0_i32_1 = arith.constant 0 : i32
    return %c0_i32, %c0_i32_0 : i32, i32
  }
  func.func @transform_2(%arg0: i32) -> (i32, i32) {
    %c0_i32 = arith.constant 0 : i32
    %c0_i32_0 = arith.constant 0 : i32
    %c0_i32_1 = arith.constant 0 : i32
    return %c0_i32, %c0_i32_0 : i32, i32
  }
  func.func @transform_3(%arg0: i32) -> (i32, i32) {
    %c0_i32 = arith.constant 0 : i32
    %c0_i32_0 = arith.constant 0 : i32
    %c0_i32_1 = arith.constant 0 : i32
    return %c0_i32, %c0_i32_0 : i32, i32
  }
  func.func @transform_4(%arg0: i32) -> (i32, i32) {
    %c0_i32 = arith.constant 0 : i32
    %c0_i32_0 = arith.constant 0 : i32
    return %arg0, %c0_i32 : i32, i32
  }
  func.func @transform_5(%arg0: i32) -> (i32, i32, i32) {
    %c0_i32 = arith.constant 0 : i32
    %c0_i32_0 = arith.constant 0 : i32
    %c0_i32_1 = arith.constant 0 : i32
    return %arg0, %c0_i32, %c0_i32_0 : i32, i32, i32
  }
}

module attributes {stable_mosaic.version = 11 : i64} {
  func.func @_bn_add_relu_kernel(%arg0: i32, %arg1: memref<128x256xbf16, #tpu.memory_space<vmem>>, %arg2: memref<128x256xf32, #tpu.memory_space<vmem>>, %arg3: memref<1x256xf32, #tpu.memory_space<vmem>>, %arg4: memref<1x256xf32, #tpu.memory_space<vmem>>, %arg5: memref<128x256xf32, #tpu.memory_space<vmem>>) attributes {dimension_semantics = [#tpu.dimension_semantics<parallel>], iteration_bounds = array<i64: 4>, scalar_prefetch = 0 : i64, scratch_operands = 0 : i64, tpu.core_type = #tpu.core_type<tc>, window_params = [{transform_indices = @transform_0, window_bounds = array<i64: 128, 256>}, {transform_indices = @transform_1, window_bounds = array<i64: 128, 256>}, {pipeline_mode = #tpu.pipeline_mode<synchronous>, transform_indices = @transform_2, window_bounds = array<i64: 1, 256>}, {pipeline_mode = #tpu.pipeline_mode<synchronous>, transform_indices = @transform_3, window_bounds = array<i64: 1, 256>}, {transform_indices = @transform_4, window_bounds = array<i64: 128, 256>}]} {
    %c0 = arith.constant 0 : index
    %c0_0 = arith.constant 0 : index
    %0 = vector.load %arg1[%c0, %c0_0] : memref<128x256xbf16, #tpu.memory_space<vmem>>, vector<128x256xbf16>
    %1 = arith.extf %0 : vector<128x256xbf16> to vector<128x256xf32>
    %c0_1 = arith.constant 0 : index
    %c0_2 = arith.constant 0 : index
    %2 = vector.load %arg3[%c0_1, %c0_2] : memref<1x256xf32, #tpu.memory_space<vmem>>, vector<1x256xf32>
    %3 = vector.broadcast %2 : vector<1x256xf32> to vector<128x256xf32>
    %4 = arith.mulf %1, %3 : vector<128x256xf32>
    %c0_3 = arith.constant 0 : index
    %c0_4 = arith.constant 0 : index
    %5 = vector.load %arg4[%c0_3, %c0_4] : memref<1x256xf32, #tpu.memory_space<vmem>>, vector<1x256xf32>
    %6 = vector.broadcast %5 : vector<1x256xf32> to vector<128x256xf32>
    %7 = arith.addf %4, %6 : vector<128x256xf32>
    %c0_5 = arith.constant 0 : index
    %c0_6 = arith.constant 0 : index
    %8 = vector.load %arg2[%c0_5, %c0_6] : memref<128x256xf32, #tpu.memory_space<vmem>>, vector<128x256xf32>
    %9 = arith.addf %7, %8 : vector<128x256xf32>
    %cst = arith.constant 0.000000e+00 : f32
    %10 = vector.broadcast %cst : f32 to vector<128x256xf32>
    %11 = arith.maximumf %9, %10 : vector<128x256xf32>
    %c0_7 = arith.constant 0 : index
    %c0_8 = arith.constant 0 : index
    %12 = vector.load %arg5[%c0_7, %c0_8] : memref<128x256xf32, #tpu.memory_space<vmem>>, vector<128x256xf32>
    tpu.vector_store %arg5[%c0_7, %c0_8], %11 {strides = array<i32>} : memref<128x256xf32, #tpu.memory_space<vmem>>, vector<128x256xf32>,
    return
  }
  func.func @transform_0(%arg0: i32) -> (i32, i32) {
    %c0_i32 = arith.constant 0 : i32
    %c0_i32_0 = arith.constant 0 : i32
    return %arg0, %c0_i32 : i32, i32
  }
  func.func @transform_1(%arg0: i32) -> (i32, i32) {
    %c0_i32 = arith.constant 0 : i32
    %c0_i32_0 = arith.constant 0 : i32
    return %arg0, %c0_i32 : i32, i32
  }
  func.func @transform_2(%arg0: i32) -> (i32, i32) {
    %c0_i32 = arith.constant 0 : i32
    %c0_i32_0 = arith.constant 0 : i32
    %c0_i32_1 = arith.constant 0 : i32
    return %c0_i32, %c0_i32_0 : i32, i32
  }
  func.func @transform_3(%arg0: i32) -> (i32, i32) {
    %c0_i32 = arith.constant 0 : i32
    %c0_i32_0 = arith.constant 0 : i32
    %c0_i32_1 = arith.constant 0 : i32
    return %c0_i32, %c0_i32_0 : i32, i32
  }
  func.func @transform_4(%arg0: i32) -> (i32, i32) {
    %c0_i32 = arith.constant 0 : i32
    %c0_i32_0 = arith.constant 0 : i32
    return %arg0, %c0_i32 : i32, i32
  }
}

</mosaic_0001>

<llo_original>
// kernel: _lambda_.4
$region0: #{_lambda_.4}
  #allocation0 [shape = 'u32[]', space=smem, size = 0x4, offset = 0x4, fixed_abs, tag = 'smem constant byte address 0x4 - core index']
  #allocation1 [shape = 'u32[144,128]{1,0:T(1,128)}', space=vmem, size = 0x12000, scoped, tag = 'internal scratch']
  %s0 = inlined_call_operand.hbm [shape: f32[512,256], index: 0, kind: input, shape index: {}]
  %s1 = inlined_call_operand.vmem [shape: bf16[256,64], index: 1, kind: input, shape index: {}]
  %s2 = inlined_call_operand.vmem [shape: bf16[512,64], index: 2, kind: output, shape index: {0}]
  %s3 = inlined_call_operand.vmem [shape: f32[4,1,128], index: 3, kind: output, shape index: {1}]
  %4 = xla_tuple %s2, %s3
  %s5 = sld [smem:[#allocation0]]
  $region53: #{_lambda_.4} parent=0
    _
  %s7 = ssub.s32 1, %s5
  %s8 = scalar_select 0, %s7, %s5
  $region1: #{_lambda_.4} parent=0
    #allocation2 [shape = 'u8[262144]{0}', space=vmem, size = 0x40000, scoped, tag = 'input window, operand 0']
    #allocation3 [shape = 's32[2]{0}', space=sflag, size = 0x8, scoped, tag = 'scoped memory for _lambda_.4']
    %9 = vsyncpa [#allocation3], 0
    %s10 = scalar_lea.sflag [#allocation3], 1
    %11 = vsyncpa %s10, 0
    loop: start=0, step=1, limit=6
    $region2: #{_lambda_.4} parent=1 // loop_pre_header
      _
    $region3: #{_lambda_.4} parent=1 // loop_header
      %s13 = sphi 0, %s17
      %p14 = scmp.ge.s32.totalorder %s13, 6
      %s23 = sphi 0, %s25
      %s26 = sphi 0, %s23
      %s27 = sphi 0, %s26
      %s43 = sphi 0, %s27
      %s47 = sphi 0, %s47
      %s49 = sphi 0, %s47
      %s50 = sphi 0, %s49
      %s64 = sphi 0, %s50
      %s70 = sphi 0, %s72
      %s73 = sphi 0, %s70
      %s74 = sphi 0, %s73
      %s90 = sphi 0, %s74
      %s96 = sphi 0, %s98
      %s99 = sphi 0, %s96
      %s100 = sphi 0, %s99
      %s116 = sphi 0, %s100
    $region4: #{_lambda_.4} parent=1 // loop_header_branch
      %16 = sbr.rel (%p14) target = $region8
    $region5: #{_lambda_.4} parent=1 // loop_body
      %s18 = ssub.s32 %s13, 1
      %s19 = ssub.s32 %s13, 2
      %s20 = sadd.s32 %s13, 1
      %s21 = ssub.s32 %s13, %s20
      %p22 = scmp.eq.s32.totalorder %s21, 0
      %s24 = sadd.s32 %s23, 1
      %s25 = scalar_select %p22, %s23, %s24
      %p28 = pneg %p22
      %p29 = scmp.eq.s32.totalorder %s13, 3
      %p30 = por %p28, %p29
      %p31 = scmp.ne.s32.totalorder %s23, %s26
      %p32 = scmp.eq.s32.totalorder %s13, 0
      %p33 = por %p31, %p32
      %p34 = scmp.ne.s32.totalorder %s23, %s26
      %p35 = scmp.eq.s32.totalorder %s18, 3
      %p36 = por %p34, %p35
      %p37 = scmp.ne.s32.totalorder %s26, %s27
      %p38 = scmp.eq.s32.totalorder %s18, 0
      %p39 = por %p37, %p38
      %p40 = scmp.ne.s32.totalorder %s26, %s27
      %p41 = scmp.eq.s32.totalorder %s19, 3
      %p42 = por %p40, %p41
      %p44 = scmp.ne.s32.totalorder %s27, %s43
      %p45 = scmp.eq.s32.totalorder %s19, 0
      %p46 = por %p44, %p45
      %s48 = sadd.s32 %s47, 1
      %p51 = scmp.eq.s32.totalorder %s13, 3
      %p52 = scmp.ne.s32.totalorder %s47, %s49
      %p53 = scmp.eq.s32.totalorder %s13, 0
      %p54 = por %p52, %p53
      %p55 = scmp.ne.s32.totalorder %s47, %s49
      %p56 = scmp.eq.s32.totalorder %s18, 3
      %p57 = por %p55, %p56
      %p58 = scmp.ne.s32.totalorder %s49, %s50
      %p59 = scmp.eq.s32.totalorder %s18, 0
      %p60 = por %p58, %p59
      %p61 = scmp.ne.s32.totalorder %s49, %s50
      %p62 = scmp.eq.s32.totalorder %s19, 3
      %p63 = por %p61, %p62
      %p65 = scmp.ne.s32.totalorder %s50, %s64
      %p66 = scmp.eq.s32.totalorder %s19, 0
      %p67 = por %p65, %p66
      %s68 = ssub.s32 %s13, %s20
      %p69 = scmp.eq.s32.totalorder %s68, 0
      %s71 = sadd.s32 %s70, 1
      %s72 = scalar_select %p69, %s70, %s71
      %p75 = pneg %p69
      %p76 = scmp.eq.s32.totalorder %s13, 3
      %p77 = por %p75, %p76
      %p78 = scmp.ne.s32.totalorder %s70, %s73
      %p79 = scmp.eq.s32.totalorder %s13, 0
      %p80 = por %p78, %p79
      %p81 = scmp.ne.s32.totalorder %s70, %s73
      %p82 = scmp.eq.s32.totalorder %s18, 3
      %p83 = por %p81, %p82
      %p84 = scmp.ne.s32.totalorder %s73, %s74
      %p85 = scmp.eq.s32.totalorder %s18, 0
      %p86 = por %p84, %p85
      %p87 = scmp.ne.s32.totalorder %s73, %s74
      %p88 = scmp.eq.s32.totalorder %s19, 3
      %p89 = por %p87, %p88
      %p91 = scmp.ne.s32.totalorder %s74, %s90
      %p92 = scmp.eq.s32.totalorder %s19, 0
      %p93 = por %p91, %p92
      %s94 = ssub.s32 %s13, %s20
      %p95 = scmp.eq.s32.totalorder %s94, 0
      %s97 = sadd.s32 %s96, 1
      %s98 = scalar_select %p95, %s96, %s97
      %p101 = pneg %p95
      %p102 = scmp.eq.s32.totalorder %s13, 3
      %p103 = por %p101, %p102
      %p104 = scmp.ne.s32.totalorder %s96, %s99
      %p105 = scmp.eq.s32.totalorder %s13, 0
      %p106 = por %p104, %p105
      %p107 = scmp.ne.s32.totalorder %s96, %s99
      %p108 = scmp.eq.s32.totalorder %s18, 3
      %p109 = por %p107, %p108
      %p110 = scmp.ne.s32.totalorder %s99, %s100
      %p111 = scmp.eq.s32.totalorder %s18, 0
      %p112 = por %p110, %p111
      %p113 = scmp.ne.s32.totalorder %s99, %s100
      %p114 = scmp.eq.s32.totalorder %s19, 3
      %p115 = por %p113, %p114
      %p117 = scmp.ne.s32.totalorder %s100, %s116
      %p118 = scmp.eq.s32.totalorder %s19, 0
      %p119 = por %p117, %p118
      %p120 = scmp.le.s32.totalorder 1, %s13
      %p121 = scmp.lt.s32.totalorder %s13, 5
      %p122 = pnand %p120, %p121
      %p123 = pneg %p122
      // Predicated region
      $region9: #{_lambda_.4} parent=5 // pred_check
        _
      $region10: #{_lambda_.4} parent=5 // pred_check_branch
        %125 = sbr.rel (%p122) target = $region12
      $region11: #{_lambda_.4} parent=5 // pred_region
        %s126 = ssub.s32 %s13, 1
        // Predicated region
        $region13: #{_lambda_.4} parent=11 // pred_check
          %p127 = pneg %p60
        $region14: #{_lambda_.4} parent=11 // pred_check_branch
          %129 = sbr.rel (%p127) target = $region16
        $region15: #{_lambda_.4} parent=11 // pred_region
          _
        $region16: #{_lambda_.4} parent=11 // pred_fallthru
          _
      $region12: #{_lambda_.4} parent=5 // pred_fallthru
        _
      %p130 = scmp.lt.s32.totalorder %s13, 4
      // Predicated region
      $region17: #{_lambda_.4} parent=5 // pred_check
        %p131 = pneg %p130
      $region18: #{_lambda_.4} parent=5 // pred_check_branch
        %133 = sbr.rel (%p131) target = $region20
      $region19: #{_lambda_.4} parent=5 // pred_region
        // Predicated region
        $region21: #{_lambda_.4} parent=19 // pred_check
          %p134 = pneg %p33
        $region22: #{_lambda_.4} parent=19 // pred_check_branch
          %136 = sbr.rel (%p134) target = $region24
        $region23: #{_lambda_.4} parent=19 // pred_region
          %s137 = sand.u32 %s23, 1
          %s138 = scalar_lea.sflag [#allocation3], %s137
          %s139 = sand.u32 %s23, 1
          %s140 = smul.addr %s139, 256
          %s141 = scalar_lea.vmem [#allocation2], %s140
          %s142 = smul.u32 16, %s13
          %s144 = ssub.s32 4096, 4096
          %145 = vsyncadd %s138, %s144
          %s146 = smul.addr %s142, 2
          %s147 = smul.addr %s146, 128
          %s148 = scalar_lea.hbm %s0, %s147
          %s149 = sshll.u32 %s141, 4
          %s150 = int_to_ptr.vmem [resolvable:$true] %s149
          %155 = dma.hbm_to_vmem [thread:$0]  %s148, 4096, %s150, %s138, 256, 256, 16
        $region24: #{_lambda_.4} parent=19 // pred_fallthru
          _
      $region20: #{_lambda_.4} parent=5 // pred_fallthru
        _
      %p156 = scmp.le.s32.totalorder 1, %s13
      %p157 = scmp.lt.s32.totalorder %s13, 5
      %p158 = pnand %p156, %p157
      %p159 = pneg %p158
      // Predicated region
      $region25: #{_lambda_.4} parent=5 // pred_check
        _
      $region26: #{_lambda_.4} parent=5 // pred_check_branch
        %161 = sbr.rel (%p158) target = $region28
      $region27: #{_lambda_.4} parent=5 // pred_region
        %s162 = ssub.s32 %s13, 1
        %s163 = sand.u32 %s26, 1
        %s164 = scalar_lea.sflag [#allocation3], %s163
        %s165 = sand.u32 %s26, 1
        %s166 = smul.addr %s165, 256
        %s167 = scalar_lea.vmem [#allocation2], %s166
        // Predicated region
        $region29: #{_lambda_.4} parent=27 // pred_check
          %p168 = pneg %p39
        $region30: #{_lambda_.4} parent=27 // pred_check_branch
          %170 = sbr.rel (%p168) target = $region32
        $region31: #{_lambda_.4} parent=27 // pred_region
          %171 = dma.done %s164, 4096
        $region32: #{_lambda_.4} parent=27 // pred_fallthru
          _
        %s172 = sand.u32 %s26, 1
        %s173 = scalar_lea.sflag [#allocation3], %s172
        %s174 = sand.u32 %s26, 1
        %s175 = smul.addr %s174, 256
        %s176 = scalar_lea.vmem [#allocation2], %s175
        %p177 = pneg %p39
        %p178 = pneg %p36
        %p179 = pneg %p60
        %p180 = pneg %p57
        %p181 = pneg %p86
        %p182 = pneg %p83
        %s183 = smul.u32 16, %s18
        %p184 = scmp.lt.s32.totalorder %s183, 63
        %s185 = scalar_select %p184, %s183, 63
        %s186 = smul.addr %s185, 4
        %s187 = scalar_lea.vmem %s2, %s186
        %p188 = pneg %p112
        %p189 = pneg %p109
        %p190 = scmp.lt.s32.totalorder %s18, 3
        %s191 = scalar_select %p190, %s18, 3
        %s192 = scalar_lea.vmem %s3, %s191
        %s193 = smul.u32 16, %s18
        %s194 = smul.u32 16, %s18
        %p195 = scmp.lt.s32.totalorder %s194, 63
        %s196 = scalar_select %p195, %s194, 63
        %s197 = smul.addr %s196, 4
        %s198 = scalar_lea.vmem %s2, %s197
        %s199 = smul.u32 16, %s18
        %p200 = scmp.lt.s32.totalorder %s18, 3
        %s201 = scalar_select %p200, %s18, 3
        %s202 = scalar_lea.vmem %s3, %s201
        %v204 = vld [vmem:[%s167] sm:$0xff]
        %v205 = vld [vmem:[%s167 + $0x8] sm:$0xff]
        %v206 = vld [vmem:[%s167 + $0x10] sm:$0xff]
        %v207 = vld [vmem:[%s167 + $0x18] sm:$0xff]
        %v208 = vld [vmem:[%s167 + $0x20] sm:$0xff]
        %v209 = vld [vmem:[%s167 + $0x28] sm:$0xff]
        %v210 = vld [vmem:[%s167 + $0x30] sm:$0xff]
        %v211 = vld [vmem:[%s167 + $0x38] sm:$0xff]
        %v212 = vld [vmem:[%s167 + $0x40] sm:$0xff]
        %v213 = vld [vmem:[%s167 + $0x48] sm:$0xff]
        %v214 = vld [vmem:[%s167 + $0x50] sm:$0xff]
        %v215 = vld [vmem:[%s167 + $0x58] sm:$0xff]
        %v216 = vld [vmem:[%s167 + $0x60] sm:$0xff]
        %v217 = vld [vmem:[%s167 + $0x68] sm:$0xff]
        %v218 = vld [vmem:[%s167 + $0x70] sm:$0xff]
        %v219 = vld [vmem:[%s167 + $0x78] sm:$0xff]
        %v220 = vld [vmem:[%s167 + $0x80] sm:$0xff]
        %v221 = vld [vmem:[%s167 + $0x88] sm:$0xff]
        %v222 = vld [vmem:[%s167 + $0x90] sm:$0xff]
        %v223 = vld [vmem:[%s167 + $0x98] sm:$0xff]
        %v224 = vld [vmem:[%s167 + $0xa0] sm:$0xff]
        %v225 = vld [vmem:[%s167 + $0xa8] sm:$0xff]
        %v226 = vld [vmem:[%s167 + $0xb0] sm:$0xff]
        %v227 = vld [vmem:[%s167 + $0xb8] sm:$0xff]
        %v228 = vld [vmem:[%s167 + $0xc0] sm:$0xff]
        %v229 = vld [vmem:[%s167 + $0xc8] sm:$0xff]
        %v230 = vld [vmem:[%s167 + $0xd0] sm:$0xff]
        %v231 = vld [vmem:[%s167 + $0xd8] sm:$0xff]
        %v232 = vld [vmem:[%s167 + $0xe0] sm:$0xff]
        %v233 = vld [vmem:[%s167 + $0xe8] sm:$0xff]
        %v234 = vld [vmem:[%s167 + $0xf0] sm:$0xff]
        %v235 = vld [vmem:[%s167 + $0xf8] sm:$0xff]
        %v236 = vpack.c.bf16 %v206, %v204
        %v237 = vpack.c.bf16 %v207, %v205
        %v238 = vpack.c.bf16 %v210, %v208
        %v239 = vpack.c.bf16 %v211, %v209
        %v240 = vpack.c.bf16 %v214, %v212
        %v241 = vpack.c.bf16 %v215, %v213
        %v242 = vpack.c.bf16 %v218, %v216
        %v243 = vpack.c.bf16 %v219, %v217
        %v244 = vpack.c.bf16 %v222, %v220
        %v245 = vpack.c.bf16 %v223, %v221
        %v246 = vpack.c.bf16 %v226, %v224
        %v247 = vpack.c.bf16 %v227, %v225
        %v248 = vpack.c.bf16 %v230, %v228
        %v249 = vpack.c.bf16 %v231, %v229
        %v250 = vpack.c.bf16 %v234, %v232
        %v251 = vpack.c.bf16 %v235, %v233
        %v252 = vld [vmem:[%s1] sm:$0xf]
        %v253 = vld [vmem:[%s1 + $0x4] sm:$0xf]
        %v254 = vld [vmem:[%s1 + $0x8] sm:$0xf]
        %v255 = vld [vmem:[%s1 + $0xc] sm:$0xf]
        %v256 = vld [vmem:[%s1 + $0x10] sm:$0xf]
        %v257 = vld [vmem:[%s1 + $0x14] sm:$0xf]
        %v258 = vld [vmem:[%s1 + $0x18] sm:$0xf]
        %v259 = vld [vmem:[%s1 + $0x1c] sm:$0xf]
        %v260 = vld [vmem:[%s1 + $0x20] sm:$0xf]
        %v261 = vld [vmem:[%s1 + $0x24] sm:$0xf]
        %v262 = vld [vmem:[%s1 + $0x28] sm:$0xf]
        %v263 = vld [vmem:[%s1 + $0x2c] sm:$0xf]
        %v264 = vld [vmem:[%s1 + $0x30] sm:$0xf]
        %v265 = vld [vmem:[%s1 + $0x34] sm:$0xf]
        %v266 = vld [vmem:[%s1 + $0x38] sm:$0xf]
        %v267 = vld [vmem:[%s1 + $0x3c] sm:$0xf]
        %v268 = vld [vmem:[%s1 + $0x40] sm:$0xf]
        %v269 = vld [vmem:[%s1 + $0x44] sm:$0xf]
        %v270 = vld [vmem:[%s1 + $0x48] sm:$0xf]
        %v271 = vld [vmem:[%s1 + $0x4c] sm:$0xf]
        %v272 = vld [vmem:[%s1 + $0x50] sm:$0xf]
        %v273 = vld [vmem:[%s1 + $0x54] sm:$0xf]
        %v274 = vld [vmem:[%s1 + $0x58] sm:$0xf]
        %v275 = vld [vmem:[%s1 + $0x5c] sm:$0xf]
        %v276 = vld [vmem:[%s1 + $0x60] sm:$0xf]
        %v277 = vld [vmem:[%s1 + $0x64] sm:$0xf]
        %v278 = vld [vmem:[%s1 + $0x68] sm:$0xf]
        %v279 = vld [vmem:[%s1 + $0x6c] sm:$0xf]
        %v280 = vld [vmem:[%s1 + $0x70] sm:$0xf]
        %v281 = vld [vmem:[%s1 + $0x74] sm:$0xf]
        %v282 = vld [vmem:[%s1 + $0x78] sm:$0xf]
        %v283 = vld [vmem:[%s1 + $0x7c] sm:$0xf]
        %v316 = vunpack.c.l.b16 %v252
        %v317 = vunpack.c.l.b16 %v253
        %v318 = vunpack.c.l.b16 %v254
        %v319 = vunpack.c.l.b16 %v255
        %v320 = vunpack.c.l.b16 %v256
        %v321 = vunpack.c.l.b16 %v257
        %v322 = vunpack.c.l.b16 %v258
        %v323 = vunpack.c.l.b16 %v259
        %v324 = vunpack.c.l.b16 %v260
        %v325 = vunpack.c.l.b16 %v261
        %v326 = vunpack.c.l.b16 %v262
        %v327 = vunpack.c.l.b16 %v263
        %v328 = vunpack.c.l.b16 %v264
        %v329 = vunpack.c.l.b16 %v265
        %v330 = vunpack.c.l.b16 %v266
        %v331 = vunpack.c.l.b16 %v267
        %v332 = vunpack.c.l.b16 %v268
        %v333 = vunpack.c.l.b16 %v269
        %v334 = vunpack.c.l.b16 %v270
        %v335 = vunpack.c.l.b16 %v271
        %v336 = vunpack.c.l.b16 %v272
        %v337 = vunpack.c.l.b16 %v273
        %v338 = vunpack.c.l.b16 %v274
        %v339 = vunpack.c.l.b16 %v275
        %v340 = vunpack.c.l.b16 %v276
        %v341 = vunpack.c.l.b16 %v277
        %v342 = vunpack.c.l.b16 %v278
        %v343 = vunpack.c.l.b16 %v279
        %v344 = vunpack.c.l.b16 %v280
        %v345 = vunpack.c.l.b16 %v281
        %v346 = vunpack.c.l.b16 %v282
        %v347 = vunpack.c.l.b16 %v283
        %v348 = vpack.c.b16 %v317, %v316
        %v349 = vpack.c.b16 %v319, %v318
        %v350 = vpack.c.b16 %v321, %v320
        %v351 = vpack.c.b16 %v323, %v322
        %v352 = vpack.c.b16 %v325, %v324
        %v353 = vpack.c.b16 %v327, %v326
        %v354 = vpack.c.b16 %v329, %v328
        %v355 = vpack.c.b16 %v331, %v330
        %v356 = vpack.c.b16 %v333, %v332
        %v357 = vpack.c.b16 %v335, %v334
        %v358 = vpack.c.b16 %v337, %v336
        %v359 = vpack.c.b16 %v339, %v338
        %v360 = vpack.c.b16 %v341, %v340
        %v361 = vpack.c.b16 %v343, %v342
        %v362 = vpack.c.b16 %v345, %v344
        %v363 = vpack.c.b16 %v347, %v346
        %380 = vmatprep.subr.bf16.mxu0 0
        %381 = vmatpush1.bf16.msra.mxu0 %v348
        %382 = vmatprep.subr.bf16.mxu0 0
        %383 = vmatpush1.bf16.msra.mxu0 %v349
        %384 = vmatprep.subr.bf16.mxu0 0
        %385 = vmatpush1.bf16.msra.mxu0 %v350
        %386 = vmatprep.subr.bf16.mxu0 0
        %387 = vmatpush1.bf16.msra.mxu0 %v351
        %388 = vmatprep.subr.bf16.mxu0 0
        %389 = vmatpush1.bf16.msra.mxu0 %v352
        %390 = vmatprep.subr.bf16.mxu0 0
        %391 = vmatpush1.bf16.msra.mxu0 %v353
        %392 = vmatprep.subr.bf16.mxu0 0
        %393 = vmatpush1.bf16.msra.mxu0 %v354
        %394 = vmatprep.subr.bf16.mxu0 0
        %395 = vmatpush1.bf16.msra.mxu0 %v355
        %396 = vmatprep.subr.bf16.mxu0 0
        %397 = vmatpush1.bf16.msra.mxu0 %v356
        %398 = vmatprep.subr.bf16.mxu0 0
        %399 = vmatpush1.bf16.msra.mxu0 %v357
        %400 = vmatprep.subr.bf16.mxu0 0
        %401 = vmatpush1.bf16.msra.mxu0 %v358
        %402 = vmatprep.subr.bf16.mxu0 0
        %403 = vmatpush1.bf16.msra.mxu0 %v359
        %404 = vmatprep.subr.bf16.mxu0 0
        %405 = vmatpush1.bf16.msra.mxu0 %v360
        %406 = vmatprep.subr.bf16.mxu0 0
        %407 = vmatpush1.bf16.msra.mxu0 %v361
        %408 = vmatprep.subr.bf16.mxu0 0
        %409 = vmatpush1.bf16.msra.mxu0 %v362
        %410 = vmatprep.subr.bf16.mxu0 0
        %411 = vmatpush1.bf16.msra.mxu0 %v363
        %412 = vmatprep.mubr.bf16.mxu0 %v237
        %413 = vmatmul.mubr.bf16.gmra.mrb[0].mxu0 %v236
        %v414 = vpop.f32.mrb[0].mxu0
        %v415 = vadd.f32 0.0, %v414
        %v416 = vpop.f32.mrb[0].mxu0
        %v417 = vpop.f32.mrb[0].mxu0
        %v418 = vadd.f32 0.0, %v417
        %v419 = vpop.f32.mrb[0].mxu0
        %420 = vmatprep.mubr.bf16.mxu0 %v239
        %421 = vmatmul.mubr.bf16.gmra.mrb[0].mxu0 %v238
        %v422 = vpop.f32.mrb[0].mxu0
        %v423 = vadd.f32 0.0, %v422
        %v424 = vpop.f32.mrb[0].mxu0
        %v425 = vpop.f32.mrb[0].mxu0
        %v426 = vadd.f32 0.0, %v425
        %v427 = vpop.f32.mrb[0].mxu0
        %428 = vmatprep.mubr.bf16.mxu0 %v241
        %429 = vmatmul.mubr.bf16.gmra.mrb[0].mxu0 %v240
        %v430 = vpop.f32.mrb[0].mxu0
        %v431 = vadd.f32 0.0, %v430
        %v432 = vpop.f32.mrb[0].mxu0
        %v433 = vpop.f32.mrb[0].mxu0
        %v434 = vadd.f32 0.0, %v433
        %v435 = vpop.f32.mrb[0].mxu0
        %436 = vmatprep.mubr.bf16.mxu0 %v243
        %437 = vmatmul.mubr.bf16.gmra.mrb[0].mxu0 %v242
        %v438 = vpop.f32.mrb[0].mxu0
        %v439 = vadd.f32 0.0, %v438
        %v440 = vpop.f32.mrb[0].mxu0
        %v441 = vpop.f32.mrb[0].mxu0
        %v442 = vadd.f32 0.0, %v441
        %v443 = vpop.f32.mrb[0].mxu0
        %444 = vmatprep.mubr.bf16.mxu0 %v245
        %445 = vmatmul.mubr.bf16.gmra.mrb[0].mxu0 %v244
        %v446 = vpop.f32.mrb[0].mxu0
        %v447 = vadd.f32 0.0, %v446
        %v448 = vpop.f32.mrb[0].mxu0
        %v449 = vpop.f32.mrb[0].mxu0
        %v450 = vadd.f32 0.0, %v449
        %v451 = vpop.f32.mrb[0].mxu0
        %452 = vmatprep.mubr.bf16.mxu0 %v247
        %453 = vmatmul.mubr.bf16.gmra.mrb[0].mxu0 %v246
        %v454 = vpop.f32.mrb[0].mxu0
        %v455 = vadd.f32 0.0, %v454
        %v456 = vpop.f32.mrb[0].mxu0
        %v457 = vpop.f32.mrb[0].mxu0
        %v458 = vadd.f32 0.0, %v457
        %v459 = vpop.f32.mrb[0].mxu0
        %460 = vmatprep.mubr.bf16.mxu0 %v249
        %461 = vmatmul.mubr.bf16.gmra.mrb[0].mxu0 %v248
        %v462 = vpop.f32.mrb[0].mxu0
        %v463 = vadd.f32 0.0, %v462
        %v464 = vpop.f32.mrb[0].mxu0
        %v465 = vpop.f32.mrb[0].mxu0
        %v466 = vadd.f32 0.0, %v465
        %v467 = vpop.f32.mrb[0].mxu0
        %468 = vmatprep.mubr.bf16.mxu0 %v251
        %469 = vmatmul.mubr.bf16.gmra.mrb[0].mxu0 %v250
        %v470 = vpop.f32.mrb[0].mxu0
        %v471 = vadd.f32 0.0, %v470
        %v472 = vpop.f32.mrb[0].mxu0
        %v473 = vpop.f32.mrb[0].mxu0
        %v474 = vadd.f32 0.0, %v473
        %v475 = vpop.f32.mrb[0].mxu0
        %476 = vdwg.mxu0
        %v477 = vpack.c.bf16 %v418, %v415
        %v478 = vpack.c.bf16 %v426, %v423
        %v479 = vpack.c.bf16 %v434, %v431
        %v480 = vpack.c.bf16 %v442, %v439
        %v481 = vpack.c.bf16 %v450, %v447
        %v482 = vpack.c.bf16 %v458, %v455
        %v483 = vpack.c.bf16 %v466, %v463
        %v484 = vpack.c.bf16 %v474, %v471
        %v493 = vunpack.c.l.b16 %v477
        %v494 = vunpack.c.h.b16 %v477
        %v495 = vunpack.c.l.b16 %v478
        %v496 = vunpack.c.h.b16 %v478
        %v497 = vunpack.c.l.b16 %v479
        %v498 = vunpack.c.h.b16 %v479
        %v499 = vunpack.c.l.b16 %v480
        %v500 = vunpack.c.h.b16 %v480
        %v501 = vunpack.c.l.b16 %v481
        %v502 = vunpack.c.h.b16 %v481
        %v503 = vunpack.c.l.b16 %v482
        %v504 = vunpack.c.h.b16 %v482
        %v505 = vunpack.c.l.b16 %v483
        %v506 = vunpack.c.h.b16 %v483
        %v507 = vunpack.c.l.b16 %v484
        %v508 = vunpack.c.h.b16 %v484
        %v509 = vpack.c.b16 %v493, %v493
        %v510 = vpack.c.b16 %v494, %v494
        %v511 = vpack.c.b16 %v495, %v495
        %v512 = vpack.c.b16 %v496, %v496
        %v513 = vpack.c.b16 %v497, %v497
        %v514 = vpack.c.b16 %v498, %v498
        %v515 = vpack.c.b16 %v499, %v499
        %v516 = vpack.c.b16 %v500, %v500
        %v517 = vpack.c.b16 %v501, %v501
        %v518 = vpack.c.b16 %v502, %v502
        %v519 = vpack.c.b16 %v503, %v503
        %v520 = vpack.c.b16 %v504, %v504
        %v521 = vpack.c.b16 %v505, %v505
        %v522 = vpack.c.b16 %v506, %v506
        %v523 = vpack.c.b16 %v507, %v507
        %v524 = vpack.c.b16 %v508, %v508
        %vm541 = vcmask 519168
        %542 = vst.msk [vmem:[%s198] sm:$0xf] %vm541, %v509
        %543 = vst.msk [vmem:[%s198 + $0x4] sm:$0xf] %vm541, %v510
        %544 = vst.msk [vmem:[%s198 + $0x8] sm:$0xf] %vm541, %v511
        %545 = vst.msk [vmem:[%s198 + $0xc] sm:$0xf] %vm541, %v512
        %546 = vst.msk [vmem:[%s198 + $0x10] sm:$0xf] %vm541, %v513
        %547 = vst.msk [vmem:[%s198 + $0x14] sm:$0xf] %vm541, %v514
        %548 = vst.msk [vmem:[%s198 + $0x18] sm:$0xf] %vm541, %v515
        %549 = vst.msk [vmem:[%s198 + $0x1c] sm:$0xf] %vm541, %v516
        %550 = vst.msk [vmem:[%s198 + $0x20] sm:$0xf] %vm541, %v517
        %551 = vst.msk [vmem:[%s198 + $0x24] sm:$0xf] %vm541, %v518
        %552 = vst.msk [vmem:[%s198 + $0x28] sm:$0xf] %vm541, %v519
        %553 = vst.msk [vmem:[%s198 + $0x2c] sm:$0xf] %vm541, %v520
        %554 = vst.msk [vmem:[%s198 + $0x30] sm:$0xf] %vm541, %v521
        %555 = vst.msk [vmem:[%s198 + $0x34] sm:$0xf] %vm541, %v522
        %556 = vst.msk [vmem:[%s198 + $0x38] sm:$0xf] %vm541, %v523
        %557 = vst.msk [vmem:[%s198 + $0x3c] sm:$0xf] %vm541, %v524
        %v558 = vunpack.c.l.bf16 %v477
        %v559 = vunpack.c.h.bf16 %v477
        %v560 = vunpack.c.l.bf16 %v478
        %v561 = vunpack.c.h.bf16 %v478
        %v562 = vunpack.c.l.bf16 %v479
        %v563 = vunpack.c.h.bf16 %v479
        %v564 = vunpack.c.l.bf16 %v480
        %v565 = vunpack.c.h.bf16 %v480
        %v566 = vunpack.c.l.bf16 %v481
        %v567 = vunpack.c.h.bf16 %v481
        %v568 = vunpack.c.l.bf16 %v482
        %v569 = vunpack.c.h.bf16 %v482
        %v570 = vunpack.c.l.bf16 %v483
        %v571 = vunpack.c.h.bf16 %v483
        %v572 = vunpack.c.l.bf16 %v484
        %v573 = vunpack.c.h.bf16 %v484
        %vm574 = vcmask 523264
        %v575 = vsel %vm574, %v558, 0.0
        %v576 = vsel %vm574, %v559, 0.0
        %v577 = vadd.f32 %v575, %v576
        %v578 = vsel %vm574, %v560, 0.0
        %v579 = vadd.f32 %v577, %v578
        %v580 = vsel %vm574, %v561, 0.0
        %v581 = vadd.f32 %v579, %v580
        %v582 = vsel %vm574, %v562, 0.0
        %v583 = vadd.f32 %v581, %v582
        %v584 = vsel %vm574, %v563, 0.0
        %v585 = vadd.f32 %v583, %v584
        %v586 = vsel %vm574, %v564, 0.0
        %v587 = vadd.f32 %v585, %v586
        %v588 = vsel %vm574, %v565, 0.0
        %v589 = vadd.f32 %v587, %v588
        %v590 = vsel %vm574, %v566, 0.0
        %v591 = vadd.f32 %v589, %v590
        %v592 = vsel %vm574, %v567, 0.0
        %v593 = vadd.f32 %v591, %v592
        %v594 = vsel %vm574, %v568, 0.0
        %v595 = vadd.f32 %v593, %v594
        %v596 = vsel %vm574, %v569, 0.0
        %v597 = vadd.f32 %v595, %v596
        %v598 = vsel %vm574, %v570, 0.0
        %v599 = vadd.f32 %v597, %v598
        %v600 = vsel %vm574, %v571, 0.0
        %v601 = vadd.f32 %v599, %v600
        %v602 = vsel %vm574, %v572, 0.0
        %v603 = vadd.f32 %v601, %v602
        %v604 = vsel %vm574, %v573, 0.0
        %v605 = vadd.f32 %v603, %v604
        %v606 = vrot.slane %v605, 4
        %v607 = vadd.f32 %v605, %v606
        %v608 = vrot.slane %v607, 2
        %v609 = vadd.f32 %v607, %v608
        %v610 = vrot.slane %v609, 1
        %v611 = vadd.f32 %v609, %v610
        %v612 = vmul.f32 %v558, %v558
        %v613 = vmul.f32 %v559, %v559
        %v614 = vmul.f32 %v560, %v560
        %v615 = vmul.f32 %v561, %v561
        %v616 = vmul.f32 %v562, %v562
        %v617 = vmul.f32 %v563, %v563
        %v618 = vmul.f32 %v564, %v564
        %v619 = vmul.f32 %v565, %v565
        %v620 = vmul.f32 %v566, %v566
        %v621 = vmul.f32 %v567, %v567
        %v622 = vmul.f32 %v568, %v568
        %v623 = vmul.f32 %v569, %v569
        %v624 = vmul.f32 %v570, %v570
        %v625 = vmul.f32 %v571, %v571
        %v626 = vmul.f32 %v572, %v572
        %v627 = vmul.f32 %v573, %v573
        %v628 = vsel %vm574, %v612, 0.0
        %v629 = vsel %vm574, %v613, 0.0
        %v630 = vadd.f32 %v628, %v629
        %v631 = vsel %vm574, %v614, 0.0
        %v632 = vadd.f32 %v630, %v631
        %v633 = vsel %vm574, %v615, 0.0
        %v634 = vadd.f32 %v632, %v633
        %v635 = vsel %vm574, %v616, 0.0
        %v636 = vadd.f32 %v634, %v635
        %v637 = vsel %vm574, %v617, 0.0
        %v638 = vadd.f32 %v636, %v637
        %v639 = vsel %vm574, %v618, 0.0
        %v640 = vadd.f32 %v638, %v639
        %v641 = vsel %vm574, %v619, 0.0
        %v642 = vadd.f32 %v640, %v641
        %v643 = vsel %vm574, %v620, 0.0
        %v644 = vadd.f32 %v642, %v643
        %v645 = vsel %vm574, %v621, 0.0
        %v646 = vadd.f32 %v644, %v645
        %v647 = vsel %vm574, %v622, 0.0
        %v648 = vadd.f32 %v646, %v647
        %v649 = vsel %vm574, %v623, 0.0
        %v650 = vadd.f32 %v648, %v649
        %v651 = vsel %vm574, %v624, 0.0
        %v652 = vadd.f32 %v650, %v651
        %v653 = vsel %vm574, %v625, 0.0
        %v654 = vadd.f32 %v652, %v653
        %v655 = vsel %vm574, %v626, 0.0
        %v656 = vadd.f32 %v654, %v655
        %v657 = vsel %vm574, %v627, 0.0
        %v658 = vadd.f32 %v656, %v657
        %v659 = vrot.slane %v658, 4
        %v660 = vadd.f32 %v658, %v659
        %v661 = vrot.slane %v660, 2
        %v662 = vadd.f32 %v660, %v661
        %v663 = vrot.slane %v662, 1
        %v664 = vadd.f32 %v662, %v663
        %666 = vrot.lane.b32.xlu0 %v664, 64
        %v667 = vpop.permute.xlu0 %666
        %v669 = vsel %vm574, %v611, %v667
        %670 = vst [vmem:[%s202] sm:$0x1] %v669
        %s671 = smul.u32 16, %s18
        %p672 = scmp.lt.s32.totalorder %s671, 63
        %s673 = scalar_select %p672, %s671, 63
        %s674 = smul.addr %s673, 4
        %s675 = scalar_lea.vmem %s2, %s674
        %p676 = scmp.lt.s32.totalorder %s18, 3
        %s677 = scalar_select %p676, %s18, 3
        %s678 = scalar_lea.vmem %s3, %s677
        // Predicated region
        $region33: #{_lambda_.4} parent=27 // pred_check
          %p679 = pneg %p83
        $region34: #{_lambda_.4} parent=27 // pred_check_branch
          %681 = sbr.rel (%p679) target = $region36
        $region35: #{_lambda_.4} parent=27 // pred_region
          %s682 = smul.u32 16, %s18
        $region36: #{_lambda_.4} parent=27 // pred_fallthru
          _
        // Predicated region
        $region37: #{_lambda_.4} parent=27 // pred_check
          %p683 = pneg %p109
        $region38: #{_lambda_.4} parent=27 // pred_check_branch
          %685 = sbr.rel (%p683) target = $region40
        $region39: #{_lambda_.4} parent=27 // pred_region
          _
        $region40: #{_lambda_.4} parent=27 // pred_fallthru
          _
      $region28: #{_lambda_.4} parent=5 // pred_fallthru
        _
      %p686 = scmp.le.s32.totalorder 2, %s13
      // Predicated region
      $region41: #{_lambda_.4} parent=5 // pred_check
        %p687 = pneg %p686
      $region42: #{_lambda_.4} parent=5 // pred_check_branch
        %689 = sbr.rel (%p687) target = $region44
      $region43: #{_lambda_.4} parent=5 // pred_region
        %s690 = ssub.s32 %s13, 2
        // Predicated region
        $region45: #{_lambda_.4} parent=43 // pred_check
          %p691 = pneg %p89
        $region46: #{_lambda_.4} parent=43 // pred_check_branch
          %693 = sbr.rel (%p691) target = $region48
        $region47: #{_lambda_.4} parent=43 // pred_region
          %s694 = smul.u32 16, %s19
          %p695 = scmp.lt.s32.totalorder %s694, 63
          %s696 = scalar_select %p695, %s694, 63
          %s697 = smul.addr %s696, 4
          %s698 = scalar_lea.vmem %s2, %s697
        $region48: #{_lambda_.4} parent=43 // pred_fallthru
          _
        // Predicated region
        $region49: #{_lambda_.4} parent=43 // pred_check
          %p699 = pneg %p115
        $region50: #{_lambda_.4} parent=43 // pred_check_branch
          %701 = sbr.rel (%p699) target = $region52
        $region51: #{_lambda_.4} parent=43 // pred_region
          %p702 = scmp.lt.s32.totalorder %s19, 3
          %s703 = scalar_select %p702, %s19, 3
          %s704 = scalar_lea.vmem %s3, %s703
        $region52: #{_lambda_.4} parent=43 // pred_fallthru
          _
      $region44: #{_lambda_.4} parent=5 // pred_fallthru
        _
    $region6: #{_lambda_.4} parent=1 // loop_footer
      %s17 = sadd.s32 1, %s13
    $region7: #{_lambda_.4} parent=1 // loop_footer_branch
      %12 = sbr.rel target = $region3
    $region8: #{_lambda_.4} parent=1 // loop_exit
      _
    %705 = vsyncpa [#allocation3], 1
    %s706 = scalar_lea.sflag [#allocation3], 1
    %707 = vsyncpa %s706, 1

// kernel: _lambda_.6
$region0: #{_lambda_.6}
  #allocation0 [shape = 'u32[]', space=smem, size = 0x4, offset = 0x4, fixed_abs, tag = 'smem constant byte address 0x4 - core index']
  #allocation1 [shape = 'u32[144,128]{1,0:T(1,128)}', space=vmem, size = 0x12000, scoped, tag = 'internal scratch']
  %s0 = inlined_call_operand.vmem [shape: bf16[512,64], index: 0, kind: input, shape index: {}]
  %s1 = inlined_call_operand.vmem [shape: f32[1,64], index: 1, kind: input, shape index: {}]
  %s2 = inlined_call_operand.vmem [shape: f32[1,64], index: 2, kind: input, shape index: {}]
  %s3 = inlined_call_operand.vmem [shape: bf16[64,256], index: 3, kind: input, shape index: {}]
  %s4 = inlined_call_operand.vmem [shape: bf16[512,256], index: 4, kind: output, shape index: {0}]
  %s5 = inlined_call_operand.vmem [shape: f32[4,1,512], index: 5, kind: output, shape index: {1}]
  %6 = xla_tuple %s4, %s5
  %s7 = sld [smem:[#allocation0]]
  $region57: #{_lambda_.6} parent=0
    _
  %s9 = ssub.s32 1, %s7
  %s10 = scalar_select 0, %s9, %s7
  loop: start=0, step=1, limit=6
  $region2: #{_lambda_.6} parent=0 // loop_pre_header
    _
  $region3: #{_lambda_.6} parent=0 // loop_header
    %s12 = sphi 0, %s16
    %p13 = scmp.ge.s32.totalorder %s12, 6
    %s22 = sphi 0, %s24
    %s25 = sphi 0, %s22
    %s26 = sphi 0, %s25
    %s42 = sphi 0, %s26
    %s46 = sphi 0, %s46
    %s48 = sphi 0, %s46
    %s49 = sphi 0, %s48
    %s63 = sphi 0, %s49
    %s67 = sphi 0, %s67
    %s69 = sphi 0, %s67
    %s70 = sphi 0, %s69
    %s84 = sphi 0, %s70
    %s88 = sphi 0, %s88
    %s90 = sphi 0, %s88
    %s91 = sphi 0, %s90
    %s105 = sphi 0, %s91
    %s111 = sphi 0, %s113
    %s114 = sphi 0, %s111
    %s115 = sphi 0, %s114
    %s131 = sphi 0, %s115
    %s137 = sphi 0, %s139
    %s140 = sphi 0, %s137
    %s141 = sphi 0, %s140
    %s157 = sphi 0, %s141
  $region4: #{_lambda_.6} parent=0 // loop_header_branch
    %15 = sbr.rel (%p13) target = $region8
  $region5: #{_lambda_.6} parent=0 // loop_body
    %s17 = ssub.s32 %s12, 1
    %s18 = ssub.s32 %s12, 2
    %s19 = sadd.s32 %s12, 1
    %s20 = ssub.s32 %s12, %s19
    %p21 = scmp.eq.s32.totalorder %s20, 0
    %s23 = sadd.s32 %s22, 1
    %s24 = scalar_select %p21, %s22, %s23
    %p27 = pneg %p21
    %p28 = scmp.eq.s32.totalorder %s12, 3
    %p29 = por %p27, %p28
    %p30 = scmp.ne.s32.totalorder %s22, %s25
    %p31 = scmp.eq.s32.totalorder %s12, 0
    %p32 = por %p30, %p31
    %p33 = scmp.ne.s32.totalorder %s22, %s25
    %p34 = scmp.eq.s32.totalorder %s17, 3
    %p35 = por %p33, %p34
    %p36 = scmp.ne.s32.totalorder %s25, %s26
    %p37 = scmp.eq.s32.totalorder %s17, 0
    %p38 = por %p36, %p37
    %p39 = scmp.ne.s32.totalorder %s25, %s26
    %p40 = scmp.eq.s32.totalorder %s18, 3
    %p41 = por %p39, %p40
    %p43 = scmp.ne.s32.totalorder %s26, %s42
    %p44 = scmp.eq.s32.totalorder %s18, 0
    %p45 = por %p43, %p44
    %s47 = sadd.s32 %s46, 1
    %p50 = scmp.eq.s32.totalorder %s12, 3
    %p51 = scmp.ne.s32.totalorder %s46, %s48
    %p52 = scmp.eq.s32.totalorder %s12, 0
    %p53 = por %p51, %p52
    %p54 = scmp.ne.s32.totalorder %s46, %s48
    %p55 = scmp.eq.s32.totalorder %s17, 3
    %p56 = por %p54, %p55
    %p57 = scmp.ne.s32.totalorder %s48, %s49
    %p58 = scmp.eq.s32.totalorder %s17, 0
    %p59 = por %p57, %p58
    %p60 = scmp.ne.s32.totalorder %s48, %s49
    %p61 = scmp.eq.s32.totalorder %s18, 3
    %p62 = por %p60, %p61
    %p64 = scmp.ne.s32.totalorder %s49, %s63
    %p65 = scmp.eq.s32.totalorder %s18, 0
    %p66 = por %p64, %p65
    %s68 = sadd.s32 %s67, 1
    %p71 = scmp.eq.s32.totalorder %s12, 3
    %p72 = scmp.ne.s32.totalorder %s67, %s69
    %p73 = scmp.eq.s32.totalorder %s12, 0
    %p74 = por %p72, %p73
    %p75 = scmp.ne.s32.totalorder %s67, %s69
    %p76 = scmp.eq.s32.totalorder %s17, 3
    %p77 = por %p75, %p76
    %p78 = scmp.ne.s32.totalorder %s69, %s70
    %p79 = scmp.eq.s32.totalorder %s17, 0
    %p80 = por %p78, %p79
    %p81 = scmp.ne.s32.totalorder %s69, %s70
    %p82 = scmp.eq.s32.totalorder %s18, 3
    %p83 = por %p81, %p82
    %p85 = scmp.ne.s32.totalorder %s70, %s84
    %p86 = scmp.eq.s32.totalorder %s18, 0
    %p87 = por %p85, %p86
    %s89 = sadd.s32 %s88, 1
    %p92 = scmp.eq.s32.totalorder %s12, 3
    %p93 = scmp.ne.s32.totalorder %s88, %s90
    %p94 = scmp.eq.s32.totalorder %s12, 0
    %p95 = por %p93, %p94
    %p96 = scmp.ne.s32.totalorder %s88, %s90
    %p97 = scmp.eq.s32.totalorder %s17, 3
    %p98 = por %p96, %p97
    %p99 = scmp.ne.s32.totalorder %s90, %s91
    %p100 = scmp.eq.s32.totalorder %s17, 0
    %p101 = por %p99, %p100
    %p102 = scmp.ne.s32.totalorder %s90, %s91
    %p103 = scmp.eq.s32.totalorder %s18, 3
    %p104 = por %p102, %p103
    %p106 = scmp.ne.s32.totalorder %s91, %s105
    %p107 = scmp.eq.s32.totalorder %s18, 0
    %p108 = por %p106, %p107
    %s109 = ssub.s32 %s12, %s19
    %p110 = scmp.eq.s32.totalorder %s109, 0
    %s112 = sadd.s32 %s111, 1
    %s113 = scalar_select %p110, %s111, %s112
    %p116 = pneg %p110
    %p117 = scmp.eq.s32.totalorder %s12, 3
    %p118 = por %p116, %p117
    %p119 = scmp.ne.s32.totalorder %s111, %s114
    %p120 = scmp.eq.s32.totalorder %s12, 0
    %p121 = por %p119, %p120
    %p122 = scmp.ne.s32.totalorder %s111, %s114
    %p123 = scmp.eq.s32.totalorder %s17, 3
    %p124 = por %p122, %p123
    %p125 = scmp.ne.s32.totalorder %s114, %s115
    %p126 = scmp.eq.s32.totalorder %s17, 0
    %p127 = por %p125, %p126
    %p128 = scmp.ne.s32.totalorder %s114, %s115
    %p129 = scmp.eq.s32.totalorder %s18, 3
    %p130 = por %p128, %p129
    %p132 = scmp.ne.s32.totalorder %s115, %s131
    %p133 = scmp.eq.s32.totalorder %s18, 0
    %p134 = por %p132, %p133
    %s135 = ssub.s32 %s12, %s19
    %p136 = scmp.eq.s32.totalorder %s135, 0
    %s138 = sadd.s32 %s137, 1
    %s139 = scalar_select %p136, %s137, %s138
    %p142 = pneg %p136
    %p143 = scmp.eq.s32.totalorder %s12, 3
    %p144 = por %p142, %p143
    %p145 = scmp.ne.s32.totalorder %s137, %s140
    %p146 = scmp.eq.s32.totalorder %s12, 0
    %p147 = por %p145, %p146
    %p148 = scmp.ne.s32.totalorder %s137, %s140
    %p149 = scmp.eq.s32.totalorder %s17, 3
    %p150 = por %p148, %p149
    %p151 = scmp.ne.s32.totalorder %s140, %s141
    %p152 = scmp.eq.s32.totalorder %s17, 0
    %p153 = por %p151, %p152
    %p154 = scmp.ne.s32.totalorder %s140, %s141
    %p155 = scmp.eq.s32.totalorder %s18, 3
    %p156 = por %p154, %p155
    %p158 = scmp.ne.s32.totalorder %s141, %s157
    %p159 = scmp.eq.s32.totalorder %s18, 0
    %p160 = por %p158, %p159
    %p161 = scmp.le.s32.totalorder 1, %s12
    %p162 = scmp.lt.s32.totalorder %s12, 5
    %p163 = pnand %p161, %p162
    %p164 = pneg %p163
    // Predicated region
    $region9: #{_lambda_.6} parent=5 // pred_check
      _
    $region10: #{_lambda_.6} parent=5 // pred_check_branch
      %166 = sbr.rel (%p163) target = $region12
    $region11: #{_lambda_.6} parent=5 // pred_region
      %s167 = ssub.s32 %s12, 1
      // Predicated region
      $region13: #{_lambda_.6} parent=11 // pred_check
        %p168 = pneg %p59
      $region14: #{_lambda_.6} parent=11 // pred_check_branch
        %170 = sbr.rel (%p168) target = $region16
      $region15: #{_lambda_.6} parent=11 // pred_region
        _
      $region16: #{_lambda_.6} parent=11 // pred_fallthru
        _
      // Predicated region
      $region17: #{_lambda_.6} parent=11 // pred_check
        %p171 = pneg %p80
      $region18: #{_lambda_.6} parent=11 // pred_check_branch
        %173 = sbr.rel (%p171) target = $region20
      $region19: #{_lambda_.6} parent=11 // pred_region
        _
      $region20: #{_lambda_.6} parent=11 // pred_fallthru
        _
      // Predicated region
      $region21: #{_lambda_.6} parent=11 // pred_check
        %p174 = pneg %p101
      $region22: #{_lambda_.6} parent=11 // pred_check_branch
        %176 = sbr.rel (%p174) target = $region24
      $region23: #{_lambda_.6} parent=11 // pred_region
        _
      $region24: #{_lambda_.6} parent=11 // pred_fallthru
        _
    $region12: #{_lambda_.6} parent=5 // pred_fallthru
      _
    %p177 = scmp.lt.s32.totalorder %s12, 4
    // Predicated region
    $region25: #{_lambda_.6} parent=5 // pred_check
      %p178 = pneg %p177
    $region26: #{_lambda_.6} parent=5 // pred_check_branch
      %180 = sbr.rel (%p178) target = $region28
    $region27: #{_lambda_.6} parent=5 // pred_region
      // Predicated region
      $region29: #{_lambda_.6} parent=27 // pred_check
        %p181 = pneg %p32
      $region30: #{_lambda_.6} parent=27 // pred_check_branch
        %183 = sbr.rel (%p181) target = $region32
      $region31: #{_lambda_.6} parent=27 // pred_region
        %s184 = smul.u32 16, %s12
        %p185 = scmp.lt.s32.totalorder %s184, 63
        %s186 = scalar_select %p185, %s184, 63
        %s187 = smul.addr %s186, 4
        %s188 = scalar_lea.vmem %s0, %s187
        %s189 = smul.u32 16, %s12
      $region32: #{_lambda_.6} parent=27 // pred_fallthru
        _
    $region28: #{_lambda_.6} parent=5 // pred_fallthru
      _
    %p190 = scmp.le.s32.totalorder 1, %s12
    %p191 = scmp.lt.s32.totalorder %s12, 5
    %p192 = pnand %p190, %p191
    %p193 = pneg %p192
    // Predicated region
    $region33: #{_lambda_.6} parent=5 // pred_check
      _
    $region34: #{_lambda_.6} parent=5 // pred_check_branch
      %195 = sbr.rel (%p192) target = $region36
    $region35: #{_lambda_.6} parent=5 // pred_region
      %s196 = ssub.s32 %s12, 1
      %s197 = smul.u32 16, %s17
      %p198 = scmp.lt.s32.totalorder %s197, 63
      %s199 = scalar_select %p198, %s197, 63
      %s200 = smul.addr %s199, 4
      %s201 = scalar_lea.vmem %s0, %s200
      %p202 = pneg %p38
      %p203 = pneg %p35
      %p204 = pneg %p59
      %p205 = pneg %p56
      %p206 = pneg %p80
      %p207 = pneg %p77
      %p208 = pneg %p101
      %p209 = pneg %p98
      %p210 = pneg %p127
      %p211 = pneg %p124
      %s212 = smul.u32 16, %s17
      %p213 = scmp.lt.s32.totalorder %s212, 63
      %s214 = scalar_select %p213, %s212, 63
      %s215 = smul.addr %s214, 2
      %s216 = smul.addr %s215, 4
      %s217 = scalar_lea.vmem %s4, %s216
      %p218 = pneg %p153
      %p219 = pneg %p150
      %p220 = scmp.lt.s32.totalorder %s17, 3
      %s221 = scalar_select %p220, %s17, 3
      %s222 = smul.addr %s221, 4
      %s223 = scalar_lea.vmem %s5, %s222
      %s224 = smul.u32 16, %s17
      %p225 = scmp.lt.s32.totalorder %s224, 63
      %s226 = scalar_select %p225, %s224, 63
      %s227 = smul.addr %s226, 4
      %s228 = scalar_lea.vmem %s0, %s227
      %s229 = smul.u32 16, %s17
      %s230 = smul.u32 16, %s17
      %p231 = scmp.lt.s32.totalorder %s230, 63
      %s232 = scalar_select %p231, %s230, 63
      %s233 = smul.addr %s232, 2
      %s234 = smul.addr %s233, 4
      %s235 = scalar_lea.vmem %s4, %s234
      %s236 = smul.u32 16, %s17
      %p237 = scmp.lt.s32.totalorder %s17, 3
      %s238 = scalar_select %p237, %s17, 3
      %s239 = smul.addr %s238, 4
      %s240 = scalar_lea.vmem %s5, %s239
      %v242 = vld [vmem:[%s228] sm:$0xf]
      %v243 = vld [vmem:[%s228 + $0x4] sm:$0xf]
      %v244 = vld [vmem:[%s228 + $0x8] sm:$0xf]
      %v245 = vld [vmem:[%s228 + $0xc] sm:$0xf]
      %v246 = vld [vmem:[%s228 + $0x10] sm:$0xf]
      %v247 = vld [vmem:[%s228 + $0x14] sm:$0xf]
      %v248 = vld [vmem:[%s228 + $0x18] sm:$0xf]
      %v249 = vld [vmem:[%s228 + $0x1c] sm:$0xf]
      %v250 = vld [vmem:[%s228 + $0x20] sm:$0xf]
      %v251 = vld [vmem:[%s228 + $0x24] sm:$0xf]
      %v252 = vld [vmem:[%s228 + $0x28] sm:$0xf]
      %v253 = vld [vmem:[%s228 + $0x2c] sm:$0xf]
      %v254 = vld [vmem:[%s228 + $0x30] sm:$0xf]
      %v255 = vld [vmem:[%s228 + $0x34] sm:$0xf]
      %v256 = vld [vmem:[%s228 + $0x38] sm:$0xf]
      %v257 = vld [vmem:[%s228 + $0x3c] sm:$0xf]
      %v258 = vunpack.c.l.bf16 %v242
      %v259 = vunpack.c.l.bf16 %v243
      %v260 = vunpack.c.l.bf16 %v244
      %v261 = vunpack.c.l.bf16 %v245
      %v262 = vunpack.c.l.bf16 %v246
      %v263 = vunpack.c.l.bf16 %v247
      %v264 = vunpack.c.l.bf16 %v248
      %v265 = vunpack.c.l.bf16 %v249
      %v266 = vunpack.c.l.bf16 %v250
      %v267 = vunpack.c.l.bf16 %v251
      %v268 = vunpack.c.l.bf16 %v252
      %v269 = vunpack.c.l.bf16 %v253
      %v270 = vunpack.c.l.bf16 %v254
      %v271 = vunpack.c.l.bf16 %v255
      %v272 = vunpack.c.l.bf16 %v256
      %v273 = vunpack.c.l.bf16 %v257
      %v274 = vld [vmem:[%s1] sm:$0x1]
      %v276 = vlaneseq
      %v277 = vshrl.u32 %v276, 7
      %v278 = vsub.s32 0, %v277
      %v279 = vrot.slane %v274, %v278
      %v281 = vmul.f32 %v258, %v279
      %v282 = vmul.f32 %v259, %v279
      %v283 = vmul.f32 %v260, %v279
      %v284 = vmul.f32 %v261, %v279
      %v285 = vmul.f32 %v262, %v279
      %v286 = vmul.f32 %v263, %v279
      %v287 = vmul.f32 %v264, %v279
      %v288 = vmul.f32 %v265, %v279
      %v289 = vmul.f32 %v266, %v279
      %v290 = vmul.f32 %v267, %v279
      %v291 = vmul.f32 %v268, %v279
      %v292 = vmul.f32 %v269, %v279
      %v293 = vmul.f32 %v270, %v279
      %v294 = vmul.f32 %v271, %v279
      %v295 = vmul.f32 %v272, %v279
      %v296 = vmul.f32 %v273, %v279
      %v297 = vld [vmem:[%s2] sm:$0x1]
      %v299 = vlaneseq
      %v300 = vshrl.u32 %v299, 7
      %v301 = vsub.s32 0, %v300
      %v302 = vrot.slane %v297, %v301
      %v304 = vadd.f32 %v281, %v302
      %v305 = vadd.f32 %v282, %v302
      %v306 = vadd.f32 %v283, %v302
      %v307 = vadd.f32 %v284, %v302
      %v308 = vadd.f32 %v285, %v302
      %v309 = vadd.f32 %v286, %v302
      %v310 = vadd.f32 %v287, %v302
      %v311 = vadd.f32 %v288, %v302
      %v312 = vadd.f32 %v289, %v302
      %v313 = vadd.f32 %v290, %v302
      %v314 = vadd.f32 %v291, %v302
      %v315 = vadd.f32 %v292, %v302
      %v316 = vadd.f32 %v293, %v302
      %v317 = vadd.f32 %v294, %v302
      %v318 = vadd.f32 %v295, %v302
      %v319 = vadd.f32 %v296, %v302
      %v320 = vmax.f32 %v304, 0.0
      %v321 = vmax.f32 %v305, 0.0
      %v322 = vmax.f32 %v306, 0.0
      %v323 = vmax.f32 %v307, 0.0
      %v324 = vmax.f32 %v308, 0.0
      %v325 = vmax.f32 %v309, 0.0
      %v326 = vmax.f32 %v310, 0.0
      %v327 = vmax.f32 %v311, 0.0
      %v328 = vmax.f32 %v312, 0.0
      %v329 = vmax.f32 %v313, 0.0
      %v330 = vmax.f32 %v314, 0.0
      %v331 = vmax.f32 %v315, 0.0
      %v332 = vmax.f32 %v316, 0.0
      %v333 = vmax.f32 %v317, 0.0
      %v334 = vmax.f32 %v318, 0.0
      %v335 = vmax.f32 %v319, 0.0
      %v336 = vpack.c.bf16 %v321, %v320
      %v337 = vpack.c.bf16 %v323, %v322
      %v338 = vpack.c.bf16 %v325, %v324
      %v339 = vpack.c.bf16 %v327, %v326
      %v340 = vpack.c.bf16 %v329, %v328
      %v341 = vpack.c.bf16 %v331, %v330
      %v342 = vpack.c.bf16 %v333, %v332
      %v343 = vpack.c.bf16 %v335, %v334
      %v344 = vld [vmem:[%s3] sm:$0xff]
      %v345 = vld [vmem:[%s3 + $0x8] sm:$0xff]
      %v346 = vld [vmem:[%s3 + $0x10] sm:$0xff]
      %v347 = vld [vmem:[%s3 + $0x18] sm:$0xff]
      %v348 = vld [vmem:[%s3 + $0x20] sm:$0xff]
      %v349 = vld [vmem:[%s3 + $0x28] sm:$0xff]
      %v350 = vld [vmem:[%s3 + $0x30] sm:$0xff]
      %v351 = vld [vmem:[%s3 + $0x38] sm:$0xff]
      %v360 = vunpack.c.l.b16 %v344
      %v361 = vunpack.c.h.b16 %v344
      %v362 = vunpack.c.l.b16 %v345
      %v363 = vunpack.c.h.b16 %v345
      %v364 = vunpack.c.l.b16 %v346
      %v365 = vunpack.c.h.b16 %v346
      %v366 = vunpack.c.l.b16 %v347
      %v367 = vunpack.c.h.b16 %v347
      %v368 = vunpack.c.l.b16 %v348
      %v369 = vunpack.c.h.b16 %v348
      %v370 = vunpack.c.l.b16 %v349
      %v371 = vunpack.c.h.b16 %v349
      %v372 = vunpack.c.l.b16 %v350
      %v373 = vunpack.c.h.b16 %v350
      %v374 = vunpack.c.l.b16 %v351
      %v375 = vunpack.c.h.b16 %v351
      %v376 = vpack.c.b16 %v362, %v360
      %v377 = vpack.c.b16 %v363, %v361
      %v378 = vpack.c.b16 %v366, %v364
      %v379 = vpack.c.b16 %v367, %v365
      %v380 = vpack.c.b16 %v370, %v368
      %v381 = vpack.c.b16 %v371, %v369
      %v382 = vpack.c.b16 %v374, %v372
      %v383 = vpack.c.b16 %v375, %v373
      %vm392 = vcmask 523264
      %v394 = vsel %vm392, %v336, 0
      %v397 = vsel %vm392, %v337, 0
      %v400 = vsel %vm392, %v338, 0
      %v403 = vsel %vm392, %v339, 0
      %v406 = vsel %vm392, %v340, 0
      %v409 = vsel %vm392, %v341, 0
      %v412 = vsel %vm392, %v342, 0
      %v415 = vsel %vm392, %v343, 0
      %417 = vmatprep.subr.bf16.mxu0 %v377
      %418 = vmatpush1.bf16.msra.mxu0 %v376
      %419 = vmatprep.subr.bf16.mxu0 %v379
      %420 = vmatpush1.bf16.msra.mxu0 %v378
      %421 = vmatprep.subr.bf16.mxu0 %v381
      %422 = vmatpush1.bf16.msra.mxu0 %v380
      %423 = vmatprep.subr.bf16.mxu0 %v383
      %424 = vmatpush1.bf16.msra.mxu0 %v382
      %425 = vmatprep.subr.bf16.mxu0 0
      %426 = vmatpush1.bf16.msra.mxu0 0
      %427 = vmatprep.subr.bf16.mxu0 0
      %428 = vmatpush1.bf16.msra.mxu0 0
      %429 = vmatprep.subr.bf16.mxu0 0
      %430 = vmatpush1.bf16.msra.mxu0 0
      %431 = vmatprep.subr.bf16.mxu0 0
      %432 = vmatpush1.bf16.msra.mxu0 0
      %433 = vmatprep.subr.bf16.mxu0 0
      %434 = vmatpush1.bf16.msra.mxu0 0
      %435 = vmatprep.subr.bf16.mxu0 0
      %436 = vmatpush1.bf16.msra.mxu0 0
      %437 = vmatprep.subr.bf16.mxu0 0
      %438 = vmatpush1.bf16.msra.mxu0 0
      %439 = vmatprep.subr.bf16.mxu0 0
      %440 = vmatpush1.bf16.msra.mxu0 0
      %441 = vmatprep.subr.bf16.mxu0 0
      %442 = vmatpush1.bf16.msra.mxu0 0
      %443 = vmatprep.subr.bf16.mxu0 0
      %444 = vmatpush1.bf16.msra.mxu0 0
      %445 = vmatprep.subr.bf16.mxu0 0
      %446 = vmatpush1.bf16.msra.mxu0 0
      %447 = vmatprep.subr.bf16.mxu0 0
      %448 = vmatpush1.bf16.msra.mxu0 0
      %449 = vmatprep.mubr.bf16.mxu0 0
      %450 = vmatmul.mubr.bf16.gmra.mrb[0].mxu0 %v394
      %v451 = vpop.f32.mrb[0].mxu0
      %v452 = vadd.f32 0.0, %v451
      %v453 = vpop.f32.mrb[0].mxu0
      %v454 = vadd.f32 0.0, %v453
      %v455 = vpop.f32.mrb[0].mxu0
      %v456 = vadd.f32 0.0, %v455
      %v457 = vpop.f32.mrb[0].mxu0
      %v458 = vadd.f32 0.0, %v457
      %459 = vmatprep.mubr.bf16.mxu0 0
      %460 = vmatmul.mubr.bf16.gmra.mrb[0].mxu0 %v397
      %v461 = vpop.f32.mrb[0].mxu0
      %v462 = vadd.f32 0.0, %v461
      %v463 = vpop.f32.mrb[0].mxu0
      %v464 = vadd.f32 0.0, %v463
      %v465 = vpop.f32.mrb[0].mxu0
      %v466 = vadd.f32 0.0, %v465
      %v467 = vpop.f32.mrb[0].mxu0
      %v468 = vadd.f32 0.0, %v467
      %469 = vmatprep.mubr.bf16.mxu0 0
      %470 = vmatmul.mubr.bf16.gmra.mrb[0].mxu0 %v400
      %v471 = vpop.f32.mrb[0].mxu0
      %v472 = vadd.f32 0.0, %v471
      %v473 = vpop.f32.mrb[0].mxu0
      %v474 = vadd.f32 0.0, %v473
      %v475 = vpop.f32.mrb[0].mxu0
      %v476 = vadd.f32 0.0, %v475
      %v477 = vpop.f32.mrb[0].mxu0
      %v478 = vadd.f32 0.0, %v477
      %479 = vmatprep.mubr.bf16.mxu0 0
      %480 = vmatmul.mubr.bf16.gmra.mrb[0].mxu0 %v403
      %v481 = vpop.f32.mrb[0].mxu0
      %v482 = vadd.f32 0.0, %v481
      %v483 = vpop.f32.mrb[0].mxu0
      %v484 = vadd.f32 0.0, %v483
      %v485 = vpop.f32.mrb[0].mxu0
      %v486 = vadd.f32 0.0, %v485
      %v487 = vpop.f32.mrb[0].mxu0
      %v488 = vadd.f32 0.0, %v487
      %489 = vmatprep.mubr.bf16.mxu0 0
      %490 = vmatmul.mubr.bf16.gmra.mrb[0].mxu0 %v406
      %v491 = vpop.f32.mrb[0].mxu0
      %v492 = vadd.f32 0.0, %v491
      %v493 = vpop.f32.mrb[0].mxu0
      %v494 = vadd.f32 0.0, %v493
      %v495 = vpop.f32.mrb[0].mxu0
      %v496 = vadd.f32 0.0, %v495
      %v497 = vpop.f32.mrb[0].mxu0
      %v498 = vadd.f32 0.0, %v497
      %499 = vmatprep.mubr.bf16.mxu0 0
      %500 = vmatmul.mubr.bf16.gmra.mrb[0].mxu0 %v409
      %v501 = vpop.f32.mrb[0].mxu0
      %v502 = vadd.f32 0.0, %v501
      %v503 = vpop.f32.mrb[0].mxu0
      %v504 = vadd.f32 0.0, %v503
      %v505 = vpop.f32.mrb[0].mxu0
      %v506 = vadd.f32 0.0, %v505
      %v507 = vpop.f32.mrb[0].mxu0
      %v508 = vadd.f32 0.0, %v507
      %509 = vmatprep.mubr.bf16.mxu0 0
      %510 = vmatmul.mubr.bf16.gmra.mrb[0].mxu0 %v412
      %v511 = vpop.f32.mrb[0].mxu0
      %v512 = vadd.f32 0.0, %v511
      %v513 = vpop.f32.mrb[0].mxu0
      %v514 = vadd.f32 0.0, %v513
      %v515 = vpop.f32.mrb[0].mxu0
      %v516 = vadd.f32 0.0, %v515
      %v517 = vpop.f32.mrb[0].mxu0
      %v518 = vadd.f32 0.0, %v517
      %519 = vmatprep.mubr.bf16.mxu0 0
      %520 = vmatmul.mubr.bf16.gmra.mrb[0].mxu0 %v415
      %v521 = vpop.f32.mrb[0].mxu0
      %v522 = vadd.f32 0.0, %v521
      %v523 = vpop.f32.mrb[0].mxu0
      %v524 = vadd.f32 0.0, %v523
      %v525 = vpop.f32.mrb[0].mxu0
      %v526 = vadd.f32 0.0, %v525
      %v527 = vpop.f32.mrb[0].mxu0
      %v528 = vadd.f32 0.0, %v527
      %529 = vdwg.mxu0
      %v530 = vpack.c.bf16 %v456, %v452
      %v531 = vpack.c.bf16 %v458, %v454
      %v532 = vpack.c.bf16 %v466, %v462
      %v533 = vpack.c.bf16 %v468, %v464
      %v534 = vpack.c.bf16 %v476, %v472
      %v535 = vpack.c.bf16 %v478, %v474
      %v536 = vpack.c.bf16 %v486, %v482
      %v537 = vpack.c.bf16 %v488, %v484
      %v538 = vpack.c.bf16 %v496, %v492
      %v539 = vpack.c.bf16 %v498, %v494
      %v540 = vpack.c.bf16 %v506, %v502
      %v541 = vpack.c.bf16 %v508, %v504
      %v542 = vpack.c.bf16 %v516, %v512
      %v543 = vpack.c.bf16 %v518, %v514
      %v544 = vpack.c.bf16 %v526, %v522
      %v545 = vpack.c.bf16 %v528, %v524
      %v562 = vunpack.c.l.b16 %v530
      %v563 = vunpack.c.l.b16 %v531
      %v564 = vunpack.c.h.b16 %v530
      %v565 = vunpack.c.h.b16 %v531
      %v566 = vunpack.c.l.b16 %v532
      %v567 = vunpack.c.l.b16 %v533
      %v568 = vunpack.c.h.b16 %v532
      %v569 = vunpack.c.h.b16 %v533
      %v570 = vunpack.c.l.b16 %v534
      %v571 = vunpack.c.l.b16 %v535
      %v572 = vunpack.c.h.b16 %v534
      %v573 = vunpack.c.h.b16 %v535
      %v574 = vunpack.c.l.b16 %v536
      %v575 = vunpack.c.l.b16 %v537
      %v576 = vunpack.c.h.b16 %v536
      %v577 = vunpack.c.h.b16 %v537
      %v578 = vunpack.c.l.b16 %v538
      %v579 = vunpack.c.l.b16 %v539
      %v580 = vunpack.c.h.b16 %v538
      %v581 = vunpack.c.h.b16 %v539
      %v582 = vunpack.c.l.b16 %v540
      %v583 = vunpack.c.l.b16 %v541
      %v584 = vunpack.c.h.b16 %v540
      %v585 = vunpack.c.h.b16 %v541
      %v586 = vunpack.c.l.b16 %v542
      %v587 = vunpack.c.l.b16 %v543
      %v588 = vunpack.c.h.b16 %v542
      %v589 = vunpack.c.h.b16 %v543
      %v590 = vunpack.c.l.b16 %v544
      %v591 = vunpack.c.l.b16 %v545
      %v592 = vunpack.c.h.b16 %v544
      %v593 = vunpack.c.h.b16 %v545
      %v594 = vpack.c.b16 %v563, %v562
      %v595 = vpack.c.b16 %v565, %v564
      %v596 = vpack.c.b16 %v567, %v566
      %v597 = vpack.c.b16 %v569, %v568
      %v598 = vpack.c.b16 %v571, %v570
      %v599 = vpack.c.b16 %v573, %v572
      %v600 = vpack.c.b16 %v575, %v574
      %v601 = vpack.c.b16 %v577, %v576
      %v602 = vpack.c.b16 %v579, %v578
      %v603 = vpack.c.b16 %v581, %v580
      %v604 = vpack.c.b16 %v583, %v582
      %v605 = vpack.c.b16 %v585, %v584
      %v606 = vpack.c.b16 %v587, %v586
      %v607 = vpack.c.b16 %v589, %v588
      %v608 = vpack.c.b16 %v591, %v590
      %v609 = vpack.c.b16 %v593, %v592
      %626 = vst [vmem:[%s235] sm:$0xff] %v594
      %627 = vst [vmem:[%s235 + $0x8] sm:$0xff] %v595
      %628 = vst [vmem:[%s235 + $0x10] sm:$0xff] %v596
      %629 = vst [vmem:[%s235 + $0x18] sm:$0xff] %v597
      %630 = vst [vmem:[%s235 + $0x20] sm:$0xff] %v598
      %631 = vst [vmem:[%s235 + $0x28] sm:$0xff] %v599
      %632 = vst [vmem:[%s235 + $0x30] sm:$0xff] %v600
      %633 = vst [vmem:[%s235 + $0x38] sm:$0xff] %v601
      %634 = vst [vmem:[%s235 + $0x40] sm:$0xff] %v602
      %635 = vst [vmem:[%s235 + $0x48] sm:$0xff] %v603
      %636 = vst [vmem:[%s235 + $0x50] sm:$0xff] %v604
      %637 = vst [vmem:[%s235 + $0x58] sm:$0xff] %v605
      %638 = vst [vmem:[%s235 + $0x60] sm:$0xff] %v606
      %639 = vst [vmem:[%s235 + $0x68] sm:$0xff] %v607
      %640 = vst [vmem:[%s235 + $0x70] sm:$0xff] %v608
      %641 = vst [vmem:[%s235 + $0x78] sm:$0xff] %v609
      %v642 = vunpack.c.l.bf16 %v530
      %v643 = vunpack.c.l.bf16 %v531
      %v644 = vunpack.c.h.bf16 %v530
      %v645 = vunpack.c.h.bf16 %v531
      %v646 = vunpack.c.l.bf16 %v532
      %v647 = vunpack.c.l.bf16 %v533
      %v648 = vunpack.c.h.bf16 %v532
      %v649 = vunpack.c.h.bf16 %v533
      %v650 = vunpack.c.l.bf16 %v534
      %v651 = vunpack.c.l.bf16 %v535
      %v652 = vunpack.c.h.bf16 %v534
      %v653 = vunpack.c.h.bf16 %v535
      %v654 = vunpack.c.l.bf16 %v536
      %v655 = vunpack.c.l.bf16 %v537
      %v656 = vunpack.c.h.bf16 %v536
      %v657 = vunpack.c.h.bf16 %v537
      %v658 = vunpack.c.l.bf16 %v538
      %v659 = vunpack.c.l.bf16 %v539
      %v660 = vunpack.c.h.bf16 %v538
      %v661 = vunpack.c.h.bf16 %v539
      %v662 = vunpack.c.l.bf16 %v540
      %v663 = vunpack.c.l.bf16 %v541
      %v664 = vunpack.c.h.bf16 %v540
      %v665 = vunpack.c.h.bf16 %v541
      %v666 = vunpack.c.l.bf16 %v542
      %v667 = vunpack.c.l.bf16 %v543
      %v668 = vunpack.c.h.bf16 %v542
      %v669 = vunpack.c.h.bf16 %v543
      %v670 = vunpack.c.l.bf16 %v544
      %v671 = vunpack.c.l.bf16 %v545
      %v672 = vunpack.c.h.bf16 %v544
      %v673 = vunpack.c.h.bf16 %v545
      %v674 = vadd.f32 %v642, %v644
      %v675 = vadd.f32 %v674, %v646
      %v676 = vadd.f32 %v675, %v648
      %v677 = vadd.f32 %v676, %v650
      %v678 = vadd.f32 %v677, %v652
      %v679 = vadd.f32 %v678, %v654
      %v680 = vadd.f32 %v679, %v656
      %v681 = vadd.f32 %v680, %v658
      %v682 = vadd.f32 %v681, %v660
      %v683 = vadd.f32 %v682, %v662
      %v684 = vadd.f32 %v683, %v664
      %v685 = vadd.f32 %v684, %v666
      %v686 = vadd.f32 %v685, %v668
      %v687 = vadd.f32 %v686, %v670
      %v688 = vadd.f32 %v687, %v672
      %v689 = vrot.slane %v688, 4
      %v690 = vadd.f32 %v688, %v689
      %v691 = vrot.slane %v690, 2
      %v692 = vadd.f32 %v690, %v691
      %v693 = vrot.slane %v692, 1
      %v694 = vadd.f32 %v692, %v693
      %v695 = vadd.f32 %v643, %v645
      %v696 = vadd.f32 %v695, %v647
      %v697 = vadd.f32 %v696, %v649
      %v698 = vadd.f32 %v697, %v651
      %v699 = vadd.f32 %v698, %v653
      %v700 = vadd.f32 %v699, %v655
      %v701 = vadd.f32 %v700, %v657
      %v702 = vadd.f32 %v701, %v659
      %v703 = vadd.f32 %v702, %v661
      %v704 = vadd.f32 %v703, %v663
      %v705 = vadd.f32 %v704, %v665
      %v706 = vadd.f32 %v705, %v667
      %v707 = vadd.f32 %v706, %v669
      %v708 = vadd.f32 %v707, %v671
      %v709 = vadd.f32 %v708, %v673
      %v710 = vrot.slane %v709, 4
      %v711 = vadd.f32 %v709, %v710
      %v712 = vrot.slane %v711, 2
      %v713 = vadd.f32 %v711, %v712
      %v714 = vrot.slane %v713, 1
      %v715 = vadd.f32 %v713, %v714
      %v716 = vmul.f32 %v642, %v642
      %v717 = vmul.f32 %v643, %v643
      %v718 = vmul.f32 %v644, %v644
      %v719 = vmul.f32 %v645, %v645
      %v720 = vmul.f32 %v646, %v646
      %v721 = vmul.f32 %v647, %v647
      %v722 = vmul.f32 %v648, %v648
      %v723 = vmul.f32 %v649, %v649
      %v724 = vmul.f32 %v650, %v650
      %v725 = vmul.f32 %v651, %v651
      %v726 = vmul.f32 %v652, %v652
      %v727 = vmul.f32 %v653, %v653
      %v728 = vmul.f32 %v654, %v654
      %v729 = vmul.f32 %v655, %v655
      %v730 = vmul.f32 %v656, %v656
      %v731 = vmul.f32 %v657, %v657
      %v732 = vmul.f32 %v658, %v658
      %v733 = vmul.f32 %v659, %v659
      %v734 = vmul.f32 %v660, %v660
      %v735 = vmul.f32 %v661, %v661
      %v736 = vmul.f32 %v662, %v662
      %v737 = vmul.f32 %v663, %v663
      %v738 = vmul.f32 %v664, %v664
      %v739 = vmul.f32 %v665, %v665
      %v740 = vmul.f32 %v666, %v666
      %v741 = vmul.f32 %v667, %v667
      %v742 = vmul.f32 %v668, %v668
      %v743 = vmul.f32 %v669, %v669
      %v744 = vmul.f32 %v670, %v670
      %v745 = vmul.f32 %v671, %v671
      %v746 = vmul.f32 %v672, %v672
      %v747 = vmul.f32 %v673, %v673
      %v748 = vadd.f32 %v716, %v718
      %v749 = vadd.f32 %v748, %v720
      %v750 = vadd.f32 %v749, %v722
      %v751 = vadd.f32 %v750, %v724
      %v752 = vadd.f32 %v751, %v726
      %v753 = vadd.f32 %v752, %v728
      %v754 = vadd.f32 %v753, %v730
      %v755 = vadd.f32 %v754, %v732
      %v756 = vadd.f32 %v755, %v734
      %v757 = vadd.f32 %v756, %v736
      %v758 = vadd.f32 %v757, %v738
      %v759 = vadd.f32 %v758, %v740
      %v760 = vadd.f32 %v759, %v742
      %v761 = vadd.f32 %v760, %v744
      %v762 = vadd.f32 %v761, %v746
      %v763 = vrot.slane %v762, 4
      %v764 = vadd.f32 %v762, %v763
      %v765 = vrot.slane %v764, 2
      %v766 = vadd.f32 %v764, %v765
      %v767 = vrot.slane %v766, 1
      %v768 = vadd.f32 %v766, %v767
      %v769 = vadd.f32 %v717, %v719
      %v770 = vadd.f32 %v769, %v721
      %v771 = vadd.f32 %v770, %v723
      %v772 = vadd.f32 %v771, %v725
      %v773 = vadd.f32 %v772, %v727
      %v774 = vadd.f32 %v773, %v729
      %v775 = vadd.f32 %v774, %v731
      %v776 = vadd.f32 %v775, %v733
      %v777 = vadd.f32 %v776, %v735
      %v778 = vadd.f32 %v777, %v737
      %v779 = vadd.f32 %v778, %v739
      %v780 = vadd.f32 %v779, %v741
      %v781 = vadd.f32 %v780, %v743
      %v782 = vadd.f32 %v781, %v745
      %v783 = vadd.f32 %v782, %v747
      %v784 = vrot.slane %v783, 4
      %v785 = vadd.f32 %v783, %v784
      %v786 = vrot.slane %v785, 2
      %v787 = vadd.f32 %v785, %v786
      %v788 = vrot.slane %v787, 1
      %v789 = vadd.f32 %v787, %v788
      %v794 = vcombine.low %v694, %v715
      %v795 = vcombine.low %v768, %v789
      %v797 = vunpack.c.l.s4 1966171168
      %v798 = vunpack.c.0.s8 %v797
      %v799 = vlaneseq
      %v800 = vshrl.u32 %v799, 7
      %v801 = vsub.s32 %v798, %v800
      %v802 = vrot.slane %v794, %v801
      %v804 = vunpack.c.l.s4 1966171168
      %v805 = vunpack.c.0.s8 %v804
      %v806 = vlaneseq
      %v807 = vshrl.u32 %v806, 7
      %v808 = vsub.s32 %v805, %v807
      %v809 = vrot.slane %v795, %v808
      %v810 = vcombine.low %v802, %v809
      %v812 = vunpack.c.l.s4 1966171168
      %v813 = vunpack.c.0.s8 %v812
      %v814 = vlaneseq
      %v815 = vshrl.u32 %v814, 7
      %v816 = vsub.s32 %v813, %v815
      %v817 = vrot.slane %v810, %v816
      %v819 = vlaneseq
      %vm820 = vcmp.ge.s32.totalorder %v819, 0
      %vm821 = vcmp.lt.s32.totalorder %v819, 512
      %vm822 = vmand %vm820, %vm821
      %823 = vst.msk [vmem:[%s240] sm:$0xf] %vm822, %v817
      %s824 = smul.u32 16, %s17
      %p825 = scmp.lt.s32.totalorder %s824, 63
      %s826 = scalar_select %p825, %s824, 63
      %s827 = smul.addr %s826, 2
      %s828 = smul.addr %s827, 4
      %s829 = scalar_lea.vmem %s4, %s828
      %p830 = scmp.lt.s32.totalorder %s17, 3
      %s831 = scalar_select %p830, %s17, 3
      %s832 = smul.addr %s831, 4
      %s833 = scalar_lea.vmem %s5, %s832
      // Predicated region
      $region37: #{_lambda_.6} parent=35 // pred_check
        %p834 = pneg %p124
      $region38: #{_lambda_.6} parent=35 // pred_check_branch
        %836 = sbr.rel (%p834) target = $region40
      $region39: #{_lambda_.6} parent=35 // pred_region
        %s837 = smul.u32 16, %s17
      $region40: #{_lambda_.6} parent=35 // pred_fallthru
        _
      // Predicated region
      $region41: #{_lambda_.6} parent=35 // pred_check
        %p838 = pneg %p150
      $region42: #{_lambda_.6} parent=35 // pred_check_branch
        %840 = sbr.rel (%p838) target = $region44
      $region43: #{_lambda_.6} parent=35 // pred_region
        _
      $region44: #{_lambda_.6} parent=35 // pred_fallthru
        _
    $region36: #{_lambda_.6} parent=5 // pred_fallthru
      _
    %p841 = scmp.le.s32.totalorder 2, %s12
    // Predicated region
    $region45: #{_lambda_.6} parent=5 // pred_check
      %p842 = pneg %p841
    $region46: #{_lambda_.6} parent=5 // pred_check_branch
      %844 = sbr.rel (%p842) target = $region48
    $region47: #{_lambda_.6} parent=5 // pred_region
      %s845 = ssub.s32 %s12, 2
      // Predicated region
      $region49: #{_lambda_.6} parent=47 // pred_check
        %p846 = pneg %p130
      $region50: #{_lambda_.6} parent=47 // pred_check_branch
        %848 = sbr.rel (%p846) target = $region52
      $region51: #{_lambda_.6} parent=47 // pred_region
        %s849 = smul.u32 16, %s18
        %p850 = scmp.lt.s32.totalorder %s849, 63
        %s851 = scalar_select %p850, %s849, 63
        %s852 = smul.addr %s851, 2
        %s853 = smul.addr %s852, 4
        %s854 = scalar_lea.vmem %s4, %s853
      $region52: #{_lambda_.6} parent=47 // pred_fallthru
        _
      // Predicated region
      $region53: #{_lambda_.6} parent=47 // pred_check
        %p855 = pneg %p156
      $region54: #{_lambda_.6} parent=47 // pred_check_branch
        %857 = sbr.rel (%p855) target = $region56
      $region55: #{_lambda_.6} parent=47 // pred_region
        %p858 = scmp.lt.s32.totalorder %s18, 3
        %s859 = scalar_select %p858, %s18, 3
        %s860 = smul.addr %s859, 4
        %s861 = scalar_lea.vmem %s5, %s860
      $region56: #{_lambda_.6} parent=47 // pred_fallthru
        _
    $region48: #{_lambda_.6} parent=5 // pred_fallthru
      _
  $region6: #{_lambda_.6} parent=0 // loop_footer
    %s16 = sadd.s32 1, %s12
  $region7: #{_lambda_.6} parent=0 // loop_footer_branch
    %11 = sbr.rel target = $region3
  $region8: #{_lambda_.6} parent=0 // loop_exit
    _

// kernel: _lambda_.7
$region0: #{_lambda_.7}
  #allocation0 [shape = 'u32[]', space=smem, size = 0x4, offset = 0x4, fixed_abs, tag = 'smem constant byte address 0x4 - core index']
  #allocation1 [shape = 'u32[144,128]{1,0:T(1,128)}', space=vmem, size = 0x12000, scoped, tag = 'internal scratch']
  %s0 = inlined_call_operand.vmem [shape: bf16[512,256], index: 0, kind: input, shape index: {}]
  %s1 = inlined_call_operand.vmem [shape: f32[512,256], index: 1, kind: input, shape index: {}]
  %s2 = inlined_call_operand.vmem [shape: f32[1,256], index: 2, kind: input, shape index: {}]
  %s3 = inlined_call_operand.vmem [shape: f32[1,256], index: 3, kind: input, shape index: {}]
  %s4 = inlined_call_operand.hbm [shape: f32[512,256], index: 4, kind: output, shape index: {}]
  %s5 = sld [smem:[#allocation0]]
  $region49: #{_lambda_.7} parent=0
    _
  %s7 = ssub.s32 1, %s5
  %s8 = scalar_select 0, %s7, %s5
  $region1: #{_lambda_.7} parent=0
    #allocation2 [shape = 'u8[262144]{0}', space=vmem, size = 0x40000, scoped, tag = 'output window, operand 0']
    #allocation3 [shape = 's32[2]{0}', space=sflag, size = 0x8, scoped, tag = 'scoped memory for _lambda_.7']
    %9 = vsyncpa [#allocation3], 0
    %s10 = scalar_lea.sflag [#allocation3], 1
    %11 = vsyncpa %s10, 0
    loop: start=0, step=1, limit=6
    $region2: #{_lambda_.7} parent=1 // loop_pre_header
      _
    $region3: #{_lambda_.7} parent=1 // loop_header
      %s13 = sphi 0, %s17
      %p14 = scmp.ge.s32.totalorder %s13, 6
      %s23 = sphi 0, %s25
      %s26 = sphi 0, %s23
      %s27 = sphi 0, %s26
      %s43 = sphi 0, %s27
      %s49 = sphi 0, %s51
      %s52 = sphi 0, %s49
      %s53 = sphi 0, %s52
      %s69 = sphi 0, %s53
      %s73 = sphi 0, %s73
      %s75 = sphi 0, %s73
      %s76 = sphi 0, %s75
      %s90 = sphi 0, %s76
      %s94 = sphi 0, %s94
      %s96 = sphi 0, %s94
      %s97 = sphi 0, %s96
      %s111 = sphi 0, %s97
      %s117 = sphi 0, %s119
      %s120 = sphi 0, %s117
      %s121 = sphi 0, %s120
      %s137 = sphi 0, %s121
    $region4: #{_lambda_.7} parent=1 // loop_header_branch
      %16 = sbr.rel (%p14) target = $region8
    $region5: #{_lambda_.7} parent=1 // loop_body
      %s18 = ssub.s32 %s13, 1
      %s19 = ssub.s32 %s13, 2
      %s20 = sadd.s32 %s13, 1
      %s21 = ssub.s32 %s13, %s20
      %p22 = scmp.eq.s32.totalorder %s21, 0
      %s24 = sadd.s32 %s23, 1
      %s25 = scalar_select %p22, %s23, %s24
      %p28 = pneg %p22
      %p29 = scmp.eq.s32.totalorder %s13, 3
      %p30 = por %p28, %p29
      %p31 = scmp.ne.s32.totalorder %s23, %s26
      %p32 = scmp.eq.s32.totalorder %s13, 0
      %p33 = por %p31, %p32
      %p34 = scmp.ne.s32.totalorder %s23, %s26
      %p35 = scmp.eq.s32.totalorder %s18, 3
      %p36 = por %p34, %p35
      %p37 = scmp.ne.s32.totalorder %s26, %s27
      %p38 = scmp.eq.s32.totalorder %s18, 0
      %p39 = por %p37, %p38
      %p40 = scmp.ne.s32.totalorder %s26, %s27
      %p41 = scmp.eq.s32.totalorder %s19, 3
      %p42 = por %p40, %p41
      %p44 = scmp.ne.s32.totalorder %s27, %s43
      %p45 = scmp.eq.s32.totalorder %s19, 0
      %p46 = por %p44, %p45
      %s47 = ssub.s32 %s13, %s20
      %p48 = scmp.eq.s32.totalorder %s47, 0
      %s50 = sadd.s32 %s49, 1
      %s51 = scalar_select %p48, %s49, %s50
      %p54 = pneg %p48
      %p55 = scmp.eq.s32.totalorder %s13, 3
      %p56 = por %p54, %p55
      %p57 = scmp.ne.s32.totalorder %s49, %s52
      %p58 = scmp.eq.s32.totalorder %s13, 0
      %p59 = por %p57, %p58
      %p60 = scmp.ne.s32.totalorder %s49, %s52
      %p61 = scmp.eq.s32.totalorder %s18, 3
      %p62 = por %p60, %p61
      %p63 = scmp.ne.s32.totalorder %s52, %s53
      %p64 = scmp.eq.s32.totalorder %s18, 0
      %p65 = por %p63, %p64
      %p66 = scmp.ne.s32.totalorder %s52, %s53
      %p67 = scmp.eq.s32.totalorder %s19, 3
      %p68 = por %p66, %p67
      %p70 = scmp.ne.s32.totalorder %s53, %s69
      %p71 = scmp.eq.s32.totalorder %s19, 0
      %p72 = por %p70, %p71
      %s74 = sadd.s32 %s73, 1
      %p77 = scmp.eq.s32.totalorder %s13, 3
      %p78 = scmp.ne.s32.totalorder %s73, %s75
      %p79 = scmp.eq.s32.totalorder %s13, 0
      %p80 = por %p78, %p79
      %p81 = scmp.ne.s32.totalorder %s73, %s75
      %p82 = scmp.eq.s32.totalorder %s18, 3
      %p83 = por %p81, %p82
      %p84 = scmp.ne.s32.totalorder %s75, %s76
      %p85 = scmp.eq.s32.totalorder %s18, 0
      %p86 = por %p84, %p85
      %p87 = scmp.ne.s32.totalorder %s75, %s76
      %p88 = scmp.eq.s32.totalorder %s19, 3
      %p89 = por %p87, %p88
      %p91 = scmp.ne.s32.totalorder %s76, %s90
      %p92 = scmp.eq.s32.totalorder %s19, 0
      %p93 = por %p91, %p92
      %s95 = sadd.s32 %s94, 1
      %p98 = scmp.eq.s32.totalorder %s13, 3
      %p99 = scmp.ne.s32.totalorder %s94, %s96
      %p100 = scmp.eq.s32.totalorder %s13, 0
      %p101 = por %p99, %p100
      %p102 = scmp.ne.s32.totalorder %s94, %s96
      %p103 = scmp.eq.s32.totalorder %s18, 3
      %p104 = por %p102, %p103
      %p105 = scmp.ne.s32.totalorder %s96, %s97
      %p106 = scmp.eq.s32.totalorder %s18, 0
      %p107 = por %p105, %p106
      %p108 = scmp.ne.s32.totalorder %s96, %s97
      %p109 = scmp.eq.s32.totalorder %s19, 3
      %p110 = por %p108, %p109
      %p112 = scmp.ne.s32.totalorder %s97, %s111
      %p113 = scmp.eq.s32.totalorder %s19, 0
      %p114 = por %p112, %p113
      %s115 = ssub.s32 %s13, %s20
      %p116 = scmp.eq.s32.totalorder %s115, 0
      %s118 = sadd.s32 %s117, 1
      %s119 = scalar_select %p116, %s117, %s118
      %p122 = pneg %p116
      %p123 = scmp.eq.s32.totalorder %s13, 3
      %p124 = por %p122, %p123
      %p125 = scmp.ne.s32.totalorder %s117, %s120
      %p126 = scmp.eq.s32.totalorder %s13, 0
      %p127 = por %p125, %p126
      %p128 = scmp.ne.s32.totalorder %s117, %s120
      %p129 = scmp.eq.s32.totalorder %s18, 3
      %p130 = por %p128, %p129
      %p131 = scmp.ne.s32.totalorder %s120, %s121
      %p132 = scmp.eq.s32.totalorder %s18, 0
      %p133 = por %p131, %p132
      %p134 = scmp.ne.s32.totalorder %s120, %s121
      %p135 = scmp.eq.s32.totalorder %s19, 3
      %p136 = por %p134, %p135
      %p138 = scmp.ne.s32.totalorder %s121, %s137
      %p139 = scmp.eq.s32.totalorder %s19, 0
      %p140 = por %p138, %p139
      %p141 = scmp.le.s32.totalorder 1, %s13
      %p142 = scmp.lt.s32.totalorder %s13, 5
      %p143 = pnand %p141, %p142
      %p144 = pneg %p143
      // Predicated region
      $region9: #{_lambda_.7} parent=5 // pred_check
        _
      $region10: #{_lambda_.7} parent=5 // pred_check_branch
        %146 = sbr.rel (%p143) target = $region12
      $region11: #{_lambda_.7} parent=5 // pred_region
        %s147 = ssub.s32 %s13, 1
        // Predicated region
        $region13: #{_lambda_.7} parent=11 // pred_check
          %p148 = pneg %p86
        $region14: #{_lambda_.7} parent=11 // pred_check_branch
          %150 = sbr.rel (%p148) target = $region16
        $region15: #{_lambda_.7} parent=11 // pred_region
          _
        $region16: #{_lambda_.7} parent=11 // pred_fallthru
          _
        // Predicated region
        $region17: #{_lambda_.7} parent=11 // pred_check
          %p151 = pneg %p107
        $region18: #{_lambda_.7} parent=11 // pred_check_branch
          %153 = sbr.rel (%p151) target = $region20
        $region19: #{_lambda_.7} parent=11 // pred_region
          _
        $region20: #{_lambda_.7} parent=11 // pred_fallthru
          _
      $region12: #{_lambda_.7} parent=5 // pred_fallthru
        _
      %p154 = scmp.lt.s32.totalorder %s13, 4
      // Predicated region
      $region21: #{_lambda_.7} parent=5 // pred_check
        %p155 = pneg %p154
      $region22: #{_lambda_.7} parent=5 // pred_check_branch
        %157 = sbr.rel (%p155) target = $region24
      $region23: #{_lambda_.7} parent=5 // pred_region
        // Predicated region
        $region25: #{_lambda_.7} parent=23 // pred_check
          %p158 = pneg %p33
        $region26: #{_lambda_.7} parent=23 // pred_check_branch
          %160 = sbr.rel (%p158) target = $region28
        $region27: #{_lambda_.7} parent=23 // pred_region
          %s161 = smul.u32 16, %s13
          %p162 = scmp.lt.s32.totalorder %s161, 63
          %s163 = scalar_select %p162, %s161, 63
          %s164 = smul.addr %s163, 2
          %s165 = smul.addr %s164, 4
          %s166 = scalar_lea.vmem %s0, %s165
          %s167 = smul.u32 16, %s13
        $region28: #{_lambda_.7} parent=23 // pred_fallthru
          _
        // Predicated region
        $region29: #{_lambda_.7} parent=23 // pred_check
          %p168 = pneg %p59
        $region30: #{_lambda_.7} parent=23 // pred_check_branch
          %170 = sbr.rel (%p168) target = $region32
        $region31: #{_lambda_.7} parent=23 // pred_region
          %s171 = smul.u32 16, %s13
          %p172 = scmp.lt.s32.totalorder %s171, 63
          %s173 = scalar_select %p172, %s171, 63
          %s174 = smul.addr %s173, 2
          %s175 = smul.addr %s174, 8
          %s176 = scalar_lea.vmem %s1, %s175
          %s177 = smul.u32 16, %s13
        $region32: #{_lambda_.7} parent=23 // pred_fallthru
          _
      $region24: #{_lambda_.7} parent=5 // pred_fallthru
        _
      %p178 = scmp.le.s32.totalorder 1, %s13
      %p179 = scmp.lt.s32.totalorder %s13, 5
      %p180 = pnand %p178, %p179
      %p181 = pneg %p180
      // Predicated region
      $region33: #{_lambda_.7} parent=5 // pred_check
        _
      $region34: #{_lambda_.7} parent=5 // pred_check_branch
        %183 = sbr.rel (%p180) target = $region36
      $region35: #{_lambda_.7} parent=5 // pred_region
        %s184 = ssub.s32 %s13, 1
        %s185 = smul.u32 16, %s18
        %p186 = scmp.lt.s32.totalorder %s185, 63
        %s187 = scalar_select %p186, %s185, 63
        %s188 = smul.addr %s187, 2
        %s189 = smul.addr %s188, 4
        %s190 = scalar_lea.vmem %s0, %s189
        %p191 = pneg %p39
        %p192 = pneg %p36
        %s193 = smul.u32 16, %s18
        %p194 = scmp.lt.s32.totalorder %s193, 63
        %s195 = scalar_select %p194, %s193, 63
        %s196 = smul.addr %s195, 2
        %s197 = smul.addr %s196, 8
        %s198 = scalar_lea.vmem %s1, %s197
        %p199 = pneg %p65
        %p200 = pneg %p62
        %p201 = pneg %p86
        %p202 = pneg %p83
        %p203 = pneg %p107
        %p204 = pneg %p104
        %p205 = pneg %p133
        %p206 = pneg %p130
        %s207 = sand.u32 %s120, 1
        %s208 = scalar_lea.sflag [#allocation3], %s207
        %s209 = sand.u32 %s120, 1
        %s210 = smul.addr %s209, 256
        %s211 = scalar_lea.vmem [#allocation2], %s210
        %s212 = smul.u32 16, %s18
        %p213 = scmp.lt.s32.totalorder %s212, 63
        %s214 = scalar_select %p213, %s212, 63
        %s215 = smul.addr %s214, 2
        %s216 = smul.addr %s215, 4
        %s217 = scalar_lea.vmem %s0, %s216
        %s218 = smul.u32 16, %s18
        %s219 = smul.u32 16, %s18
        %p220 = scmp.lt.s32.totalorder %s219, 63
        %s221 = scalar_select %p220, %s219, 63
        %s222 = smul.addr %s221, 2
        %s223 = smul.addr %s222, 8
        %s224 = scalar_lea.vmem %s1, %s223
        %s225 = smul.u32 16, %s18
        %s226 = smul.u32 16, %s18
        %v227 = vld [vmem:[%s217] sm:$0xff]
        %v228 = vld [vmem:[%s217 + $0x8] sm:$0xff]
        %v229 = vld [vmem:[%s217 + $0x10] sm:$0xff]
        %v230 = vld [vmem:[%s217 + $0x18] sm:$0xff]
        %v231 = vld [vmem:[%s217 + $0x20] sm:$0xff]
        %v232 = vld [vmem:[%s217 + $0x28] sm:$0xff]
        %v233 = vld [vmem:[%s217 + $0x30] sm:$0xff]
        %v234 = vld [vmem:[%s217 + $0x38] sm:$0xff]
        %v235 = vld [vmem:[%s217 + $0x40] sm:$0xff]
        %v236 = vld [vmem:[%s217 + $0x48] sm:$0xff]
        %v237 = vld [vmem:[%s217 + $0x50] sm:$0xff]
        %v238 = vld [vmem:[%s217 + $0x58] sm:$0xff]
        %v239 = vld [vmem:[%s217 + $0x60] sm:$0xff]
        %v240 = vld [vmem:[%s217 + $0x68] sm:$0xff]
        %v241 = vld [vmem:[%s217 + $0x70] sm:$0xff]
        %v242 = vld [vmem:[%s217 + $0x78] sm:$0xff]
        %v243 = vunpack.c.l.bf16 %v227
        %v244 = vunpack.c.h.bf16 %v227
        %v245 = vunpack.c.l.bf16 %v228
        %v246 = vunpack.c.h.bf16 %v228
        %v247 = vunpack.c.l.bf16 %v229
        %v248 = vunpack.c.h.bf16 %v229
        %v249 = vunpack.c.l.bf16 %v230
        %v250 = vunpack.c.h.bf16 %v230
        %v251 = vunpack.c.l.bf16 %v231
        %v252 = vunpack.c.h.bf16 %v231
        %v253 = vunpack.c.l.bf16 %v232
        %v254 = vunpack.c.h.bf16 %v232
        %v255 = vunpack.c.l.bf16 %v233
        %v256 = vunpack.c.h.bf16 %v233
        %v257 = vunpack.c.l.bf16 %v234
        %v258 = vunpack.c.h.bf16 %v234
        %v259 = vunpack.c.l.bf16 %v235
        %v260 = vunpack.c.h.bf16 %v235
        %v261 = vunpack.c.l.bf16 %v236
        %v262 = vunpack.c.h.bf16 %v236
        %v263 = vunpack.c.l.bf16 %v237
        %v264 = vunpack.c.h.bf16 %v237
        %v265 = vunpack.c.l.bf16 %v238
        %v266 = vunpack.c.h.bf16 %v238
        %v267 = vunpack.c.l.bf16 %v239
        %v268 = vunpack.c.h.bf16 %v239
        %v269 = vunpack.c.l.bf16 %v240
        %v270 = vunpack.c.h.bf16 %v240
        %v271 = vunpack.c.l.bf16 %v241
        %v272 = vunpack.c.h.bf16 %v241
        %v273 = vunpack.c.l.bf16 %v242
        %v274 = vunpack.c.h.bf16 %v242
        %v275 = vld [vmem:[%s2] sm:$0x3]
        %v277 = vlaneseq
        %v278 = vshrl.u32 %v277, 7
        %v279 = vsub.s32 0, %v278
        %v280 = vrot.slane %v275, %v279
        %v281 = vlaneseq
        %v282 = vshrl.u32 %v281, 7
        %v283 = vsub.s32 1, %v282
        %v284 = vrot.slane %v275, %v283
        %v287 = vmul.f32 %v243, %v280
        %v288 = vmul.f32 %v244, %v284
        %v289 = vmul.f32 %v245, %v280
        %v290 = vmul.f32 %v246, %v284
        %v291 = vmul.f32 %v247, %v280
        %v292 = vmul.f32 %v248, %v284
        %v293 = vmul.f32 %v249, %v280
        %v294 = vmul.f32 %v250, %v284
        %v295 = vmul.f32 %v251, %v280
        %v296 = vmul.f32 %v252, %v284
        %v297 = vmul.f32 %v253, %v280
        %v298 = vmul.f32 %v254, %v284
        %v299 = vmul.f32 %v255, %v280
        %v300 = vmul.f32 %v256, %v284
        %v301 = vmul.f32 %v257, %v280
        %v302 = vmul.f32 %v258, %v284
        %v303 = vmul.f32 %v259, %v280
        %v304 = vmul.f32 %v260, %v284
        %v305 = vmul.f32 %v261, %v280
        %v306 = vmul.f32 %v262, %v284
        %v307 = vmul.f32 %v263, %v280
        %v308 = vmul.f32 %v264, %v284
        %v309 = vmul.f32 %v265, %v280
        %v310 = vmul.f32 %v266, %v284
        %v311 = vmul.f32 %v267, %v280
        %v312 = vmul.f32 %v268, %v284
        %v313 = vmul.f32 %v269, %v280
        %v314 = vmul.f32 %v270, %v284
        %v315 = vmul.f32 %v271, %v280
        %v316 = vmul.f32 %v272, %v284
        %v317 = vmul.f32 %v273, %v280
        %v318 = vmul.f32 %v274, %v284
        %v319 = vld [vmem:[%s3] sm:$0x3]
        %v321 = vlaneseq
        %v322 = vshrl.u32 %v321, 7
        %v323 = vsub.s32 0, %v322
        %v324 = vrot.slane %v319, %v323
        %v325 = vlaneseq
        %v326 = vshrl.u32 %v325, 7
        %v327 = vsub.s32 1, %v326
        %v328 = vrot.slane %v319, %v327
        %v331 = vadd.f32 %v287, %v324
        %v332 = vadd.f32 %v288, %v328
        %v333 = vadd.f32 %v289, %v324
        %v334 = vadd.f32 %v290, %v328
        %v335 = vadd.f32 %v291, %v324
        %v336 = vadd.f32 %v292, %v328
        %v337 = vadd.f32 %v293, %v324
        %v338 = vadd.f32 %v294, %v328
        %v339 = vadd.f32 %v295, %v324
        %v340 = vadd.f32 %v296, %v328
        %v341 = vadd.f32 %v297, %v324
        %v342 = vadd.f32 %v298, %v328
        %v343 = vadd.f32 %v299, %v324
        %v344 = vadd.f32 %v300, %v328
        %v345 = vadd.f32 %v301, %v324
        %v346 = vadd.f32 %v302, %v328
        %v347 = vadd.f32 %v303, %v324
        %v348 = vadd.f32 %v304, %v328
        %v349 = vadd.f32 %v305, %v324
        %v350 = vadd.f32 %v306, %v328
        %v351 = vadd.f32 %v307, %v324
        %v352 = vadd.f32 %v308, %v328
        %v353 = vadd.f32 %v309, %v324
        %v354 = vadd.f32 %v310, %v328
        %v355 = vadd.f32 %v311, %v324
        %v356 = vadd.f32 %v312, %v328
        %v357 = vadd.f32 %v313, %v324
        %v358 = vadd.f32 %v314, %v328
        %v359 = vadd.f32 %v315, %v324
        %v360 = vadd.f32 %v316, %v328
        %v361 = vadd.f32 %v317, %v324
        %v362 = vadd.f32 %v318, %v328
        %v363 = vld [vmem:[%s224] sm:$0xff]
        %v364 = vld [vmem:[%s224 + $0x8] sm:$0xff]
        %v365 = vld [vmem:[%s224 + $0x10] sm:$0xff]
        %v366 = vld [vmem:[%s224 + $0x18] sm:$0xff]
        %v367 = vld [vmem:[%s224 + $0x20] sm:$0xff]
        %v368 = vld [vmem:[%s224 + $0x28] sm:$0xff]
        %v369 = vld [vmem:[%s224 + $0x30] sm:$0xff]
        %v370 = vld [vmem:[%s224 + $0x38] sm:$0xff]
        %v371 = vld [vmem:[%s224 + $0x40] sm:$0xff]
        %v372 = vld [vmem:[%s224 + $0x48] sm:$0xff]
        %v373 = vld [vmem:[%s224 + $0x50] sm:$0xff]
        %v374 = vld [vmem:[%s224 + $0x58] sm:$0xff]
        %v375 = vld [vmem:[%s224 + $0x60] sm:$0xff]
        %v376 = vld [vmem:[%s224 + $0x68] sm:$0xff]
        %v377 = vld [vmem:[%s224 + $0x70] sm:$0xff]
        %v378 = vld [vmem:[%s224 + $0x78] sm:$0xff]
        %v379 = vld [vmem:[%s224 + $0x80] sm:$0xff]
        %v380 = vld [vmem:[%s224 + $0x88] sm:$0xff]
        %v381 = vld [vmem:[%s224 + $0x90] sm:$0xff]
        %v382 = vld [vmem:[%s224 + $0x98] sm:$0xff]
        %v383 = vld [vmem:[%s224 + $0xa0] sm:$0xff]
        %v384 = vld [vmem:[%s224 + $0xa8] sm:$0xff]
        %v385 = vld [vmem:[%s224 + $0xb0] sm:$0xff]
        %v386 = vld [vmem:[%s224 + $0xb8] sm:$0xff]
        %v387 = vld [vmem:[%s224 + $0xc0] sm:$0xff]
        %v388 = vld [vmem:[%s224 + $0xc8] sm:$0xff]
        %v389 = vld [vmem:[%s224 + $0xd0] sm:$0xff]
        %v390 = vld [vmem:[%s224 + $0xd8] sm:$0xff]
        %v391 = vld [vmem:[%s224 + $0xe0] sm:$0xff]
        %v392 = vld [vmem:[%s224 + $0xe8] sm:$0xff]
        %v393 = vld [vmem:[%s224 + $0xf0] sm:$0xff]
        %v394 = vld [vmem:[%s224 + $0xf8] sm:$0xff]
        %v395 = vadd.f32 %v331, %v363
        %v396 = vadd.f32 %v332, %v364
        %v397 = vadd.f32 %v333, %v365
        %v398 = vadd.f32 %v334, %v366
        %v399 = vadd.f32 %v335, %v367
        %v400 = vadd.f32 %v336, %v368
        %v401 = vadd.f32 %v337, %v369
        %v402 = vadd.f32 %v338, %v370
        %v403 = vadd.f32 %v339, %v371
        %v404 = vadd.f32 %v340, %v372
        %v405 = vadd.f32 %v341, %v373
        %v406 = vadd.f32 %v342, %v374
        %v407 = vadd.f32 %v343, %v375
        %v408 = vadd.f32 %v344, %v376
        %v409 = vadd.f32 %v345, %v377
        %v410 = vadd.f32 %v346, %v378
        %v411 = vadd.f32 %v347, %v379
        %v412 = vadd.f32 %v348, %v380
        %v413 = vadd.f32 %v349, %v381
        %v414 = vadd.f32 %v350, %v382
        %v415 = vadd.f32 %v351, %v383
        %v416 = vadd.f32 %v352, %v384
        %v417 = vadd.f32 %v353, %v385
        %v418 = vadd.f32 %v354, %v386
        %v419 = vadd.f32 %v355, %v387
        %v420 = vadd.f32 %v356, %v388
        %v421 = vadd.f32 %v357, %v389
        %v422 = vadd.f32 %v358, %v390
        %v423 = vadd.f32 %v359, %v391
        %v424 = vadd.f32 %v360, %v392
        %v425 = vadd.f32 %v361, %v393
        %v426 = vadd.f32 %v362, %v394
        %v427 = vmax.f32 %v395, 0.0
        %v428 = vmax.f32 %v396, 0.0
        %v429 = vmax.f32 %v397, 0.0
        %v430 = vmax.f32 %v398, 0.0
        %v431 = vmax.f32 %v399, 0.0
        %v432 = vmax.f32 %v400, 0.0
        %v433 = vmax.f32 %v401, 0.0
        %v434 = vmax.f32 %v402, 0.0
        %v435 = vmax.f32 %v403, 0.0
        %v436 = vmax.f32 %v404, 0.0
        %v437 = vmax.f32 %v405, 0.0
        %v438 = vmax.f32 %v406, 0.0
        %v439 = vmax.f32 %v407, 0.0
        %v440 = vmax.f32 %v408, 0.0
        %v441 = vmax.f32 %v409, 0.0
        %v442 = vmax.f32 %v410, 0.0
        %v443 = vmax.f32 %v411, 0.0
        %v444 = vmax.f32 %v412, 0.0
        %v445 = vmax.f32 %v413, 0.0
        %v446 = vmax.f32 %v414, 0.0
        %v447 = vmax.f32 %v415, 0.0
        %v448 = vmax.f32 %v416, 0.0
        %v449 = vmax.f32 %v417, 0.0
        %v450 = vmax.f32 %v418, 0.0
        %v451 = vmax.f32 %v419, 0.0
        %v452 = vmax.f32 %v420, 0.0
        %v453 = vmax.f32 %v421, 0.0
        %v454 = vmax.f32 %v422, 0.0
        %v455 = vmax.f32 %v423, 0.0
        %v456 = vmax.f32 %v424, 0.0
        %v457 = vmax.f32 %v425, 0.0
        %v458 = vmax.f32 %v426, 0.0
        %459 = vst [vmem:[%s211] sm:$0xff] %v427
        %460 = vst [vmem:[%s211 + $0x8] sm:$0xff] %v428
        %461 = vst [vmem:[%s211 + $0x10] sm:$0xff] %v429
        %462 = vst [vmem:[%s211 + $0x18] sm:$0xff] %v430
        %463 = vst [vmem:[%s211 + $0x20] sm:$0xff] %v431
        %464 = vst [vmem:[%s211 + $0x28] sm:$0xff] %v432
        %465 = vst [vmem:[%s211 + $0x30] sm:$0xff] %v433
        %466 = vst [vmem:[%s211 + $0x38] sm:$0xff] %v434
        %467 = vst [vmem:[%s211 + $0x40] sm:$0xff] %v435
        %468 = vst [vmem:[%s211 + $0x48] sm:$0xff] %v436
        %469 = vst [vmem:[%s211 + $0x50] sm:$0xff] %v437
        %470 = vst [vmem:[%s211 + $0x58] sm:$0xff] %v438
        %471 = vst [vmem:[%s211 + $0x60] sm:$0xff] %v439
        %472 = vst [vmem:[%s211 + $0x68] sm:$0xff] %v440
        %473 = vst [vmem:[%s211 + $0x70] sm:$0xff] %v441
        %474 = vst [vmem:[%s211 + $0x78] sm:$0xff] %v442
        %475 = vst [vmem:[%s211 + $0x80] sm:$0xff] %v443
        %476 = vst [vmem:[%s211 + $0x88] sm:$0xff] %v444
        %477 = vst [vmem:[%s211 + $0x90] sm:$0xff] %v445
        %478 = vst [vmem:[%s211 + $0x98] sm:$0xff] %v446
        %479 = vst [vmem:[%s211 + $0xa0] sm:$0xff] %v447
        %480 = vst [vmem:[%s211 + $0xa8] sm:$0xff] %v448
        %481 = vst [vmem:[%s211 + $0xb0] sm:$0xff] %v449
        %482 = vst [vmem:[%s211 + $0xb8] sm:$0xff] %v450
        %483 = vst [vmem:[%s211 + $0xc0] sm:$0xff] %v451
        %484 = vst [vmem:[%s211 + $0xc8] sm:$0xff] %v452
        %485 = vst [vmem:[%s211 + $0xd0] sm:$0xff] %v453
        %486 = vst [vmem:[%s211 + $0xd8] sm:$0xff] %v454
        %487 = vst [vmem:[%s211 + $0xe0] sm:$0xff] %v455
        %488 = vst [vmem:[%s211 + $0xe8] sm:$0xff] %v456
        %489 = vst [vmem:[%s211 + $0xf0] sm:$0xff] %v457
        %490 = vst [vmem:[%s211 + $0xf8] sm:$0xff] %v458
        %s491 = sand.u32 %s120, 1
        %s492 = scalar_lea.sflag [#allocation3], %s491
        %s493 = sand.u32 %s120, 1
        %s494 = smul.addr %s493, 256
        %s495 = scalar_lea.vmem [#allocation2], %s494
        // Predicated region
        $region37: #{_lambda_.7} parent=35 // pred_check
          %p496 = pneg %p130
        $region38: #{_lambda_.7} parent=35 // pred_check_branch
          %498 = sbr.rel (%p496) target = $region40
        $region39: #{_lambda_.7} parent=35 // pred_region
          %s499 = smul.u32 16, %s18
          %s501 = ssub.s32 4096, 4096
          %502 = vsyncadd %s492, %s501
          %s503 = smul.addr %s499, 2
          %s504 = smul.addr %s503, 128
          %s505 = scalar_lea.hbm %s4, %s504
          %s506 = sshll.u32 %s495, 4
          %s507 = int_to_ptr.vmem [resolvable:$true] %s506
          %512 = dma.vmem_to_hbm [thread:$0]  %s507, 4096, %s505, %s492, 256, 256, 16
        $region40: #{_lambda_.7} parent=35 // pred_fallthru
          _
      $region36: #{_lambda_.7} parent=5 // pred_fallthru
        _
      %p513 = scmp.le.s32.totalorder 2, %s13
      // Predicated region
      $region41: #{_lambda_.7} parent=5 // pred_check
        %p514 = pneg %p513
      $region42: #{_lambda_.7} parent=5 // pred_check_branch
        %516 = sbr.rel (%p514) target = $region44
      $region43: #{_lambda_.7} parent=5 // pred_region
        %s517 = ssub.s32 %s13, 2
        // Predicated region
        $region45: #{_lambda_.7} parent=43 // pred_check
          %p518 = pneg %p136
        $region46: #{_lambda_.7} parent=43 // pred_check_branch
          %520 = sbr.rel (%p518) target = $region48
        $region47: #{_lambda_.7} parent=43 // pred_region
          %s521 = sand.u32 %s121, 1
          %s522 = scalar_lea.sflag [#allocation3], %s521
          %s523 = sand.u32 %s121, 1
          %s524 = smul.addr %s523, 256
          %s525 = scalar_lea.vmem [#allocation2], %s524
          %526 = dma.done %s522, 4096
        $region48: #{_lambda_.7} parent=43 // pred_fallthru
          _
      $region44: #{_lambda_.7} parent=5 // pred_fallthru
        _
    $region6: #{_lambda_.7} parent=1 // loop_footer
      %s17 = sadd.s32 1, %s13
    $region7: #{_lambda_.7} parent=1 // loop_footer_branch
      %12 = sbr.rel target = $region3
    $region8: #{_lambda_.7} parent=1 // loop_exit
      _
    %527 = vsyncpa [#allocation3], 1
    %s528 = scalar_lea.sflag [#allocation3], 1
    %529 = vsyncpa %s528, 1

// kernel: _lambda_.5
$region0: #{_lambda_.5}
  #allocation0 [shape = 'u32[]', space=smem, size = 0x4, offset = 0x4, fixed_abs, tag = 'smem constant byte address 0x4 - core index']
  #allocation1 [shape = 'u32[144,128]{1,0:T(1,128)}', space=vmem, size = 0x12000, scoped, tag = 'internal scratch']
  %s0 = inlined_call_operand.vmem [shape: bf16[512,64], index: 0, kind: input, shape index: {}]
  %s1 = inlined_call_operand.vmem [shape: f32[1,64], index: 1, kind: input, shape index: {}]
  %s2 = inlined_call_operand.vmem [shape: f32[1,64], index: 2, kind: input, shape index: {}]
  %s3 = inlined_call_operand.vmem [shape: bf16[576,64], index: 3, kind: input, shape index: {}]
  %s4 = inlined_call_operand.vmem [shape: bf16[512,64], index: 4, kind: output, shape index: {0}]
  %s5 = inlined_call_operand.vmem [shape: f32[2,1,128], index: 5, kind: output, shape index: {1}]
  %6 = xla_tuple %s4, %s5
  %s7 = sld [smem:[#allocation0]]
  $region57: #{_lambda_.5} parent=0
    _
  %s9 = ssub.s32 1, %s7
  %s10 = scalar_select 0, %s9, %s7
  loop: start=0, step=1, limit=4
  $region2: #{_lambda_.5} parent=0 // loop_pre_header
    _
  $region3: #{_lambda_.5} parent=0 // loop_header
    %s12 = sphi 0, %s16
    %p13 = scmp.ge.s32.totalorder %s12, 4
    %s22 = sphi 0, %s24
    %s25 = sphi 0, %s22
    %s26 = sphi 0, %s25
    %s42 = sphi 0, %s26
    %s46 = sphi 0, %s46
    %s48 = sphi 0, %s46
    %s49 = sphi 0, %s48
    %s63 = sphi 0, %s49
    %s67 = sphi 0, %s67
    %s69 = sphi 0, %s67
    %s70 = sphi 0, %s69
    %s84 = sphi 0, %s70
    %s88 = sphi 0, %s88
    %s90 = sphi 0, %s88
    %s91 = sphi 0, %s90
    %s105 = sphi 0, %s91
    %s111 = sphi 0, %s113
    %s114 = sphi 0, %s111
    %s115 = sphi 0, %s114
    %s131 = sphi 0, %s115
    %s137 = sphi 0, %s139
    %s140 = sphi 0, %s137
    %s141 = sphi 0, %s140
    %s157 = sphi 0, %s141
  $region4: #{_lambda_.5} parent=0 // loop_header_branch
    %15 = sbr.rel (%p13) target = $region8
  $region5: #{_lambda_.5} parent=0 // loop_body
    %s17 = ssub.s32 %s12, 1
    %s18 = ssub.s32 %s12, 2
    %s19 = sadd.s32 %s12, 1
    %s20 = ssub.s32 %s12, %s19
    %p21 = scmp.eq.s32.totalorder %s20, 0
    %s23 = sadd.s32 %s22, 1
    %s24 = scalar_select %p21, %s22, %s23
    %p27 = pneg %p21
    %p28 = scmp.eq.s32.totalorder %s12, 1
    %p29 = por %p27, %p28
    %p30 = scmp.ne.s32.totalorder %s22, %s25
    %p31 = scmp.eq.s32.totalorder %s12, 0
    %p32 = por %p30, %p31
    %p33 = scmp.ne.s32.totalorder %s22, %s25
    %p34 = scmp.eq.s32.totalorder %s17, 1
    %p35 = por %p33, %p34
    %p36 = scmp.ne.s32.totalorder %s25, %s26
    %p37 = scmp.eq.s32.totalorder %s17, 0
    %p38 = por %p36, %p37
    %p39 = scmp.ne.s32.totalorder %s25, %s26
    %p40 = scmp.eq.s32.totalorder %s18, 1
    %p41 = por %p39, %p40
    %p43 = scmp.ne.s32.totalorder %s26, %s42
    %p44 = scmp.eq.s32.totalorder %s18, 0
    %p45 = por %p43, %p44
    %s47 = sadd.s32 %s46, 1
    %p50 = scmp.eq.s32.totalorder %s12, 1
    %p51 = scmp.ne.s32.totalorder %s46, %s48
    %p52 = scmp.eq.s32.totalorder %s12, 0
    %p53 = por %p51, %p52
    %p54 = scmp.ne.s32.totalorder %s46, %s48
    %p55 = scmp.eq.s32.totalorder %s17, 1
    %p56 = por %p54, %p55
    %p57 = scmp.ne.s32.totalorder %s48, %s49
    %p58 = scmp.eq.s32.totalorder %s17, 0
    %p59 = por %p57, %p58
    %p60 = scmp.ne.s32.totalorder %s48, %s49
    %p61 = scmp.eq.s32.totalorder %s18, 1
    %p62 = por %p60, %p61
    %p64 = scmp.ne.s32.totalorder %s49, %s63
    %p65 = scmp.eq.s32.totalorder %s18, 0
    %p66 = por %p64, %p65
    %s68 = sadd.s32 %s67, 1
    %p71 = scmp.eq.s32.totalorder %s12, 1
    %p72 = scmp.ne.s32.totalorder %s67, %s69
    %p73 = scmp.eq.s32.totalorder %s12, 0
    %p74 = por %p72, %p73
    %p75 = scmp.ne.s32.totalorder %s67, %s69
    %p76 = scmp.eq.s32.totalorder %s17, 1
    %p77 = por %p75, %p76
    %p78 = scmp.ne.s32.totalorder %s69, %s70
    %p79 = scmp.eq.s32.totalorder %s17, 0
    %p80 = por %p78, %p79
    %p81 = scmp.ne.s32.totalorder %s69, %s70
    %p82 = scmp.eq.s32.totalorder %s18, 1
    %p83 = por %p81, %p82
    %p85 = scmp.ne.s32.totalorder %s70, %s84
    %p86 = scmp.eq.s32.totalorder %s18, 0
    %p87 = por %p85, %p86
    %s89 = sadd.s32 %s88, 1
    %p92 = scmp.eq.s32.totalorder %s12, 1
    %p93 = scmp.ne.s32.totalorder %s88, %s90
    %p94 = scmp.eq.s32.totalorder %s12, 0
    %p95 = por %p93, %p94
    %p96 = scmp.ne.s32.totalorder %s88, %s90
    %p97 = scmp.eq.s32.totalorder %s17, 1
    %p98 = por %p96, %p97
    %p99 = scmp.ne.s32.totalorder %s90, %s91
    %p100 = scmp.eq.s32.totalorder %s17, 0
    %p101 = por %p99, %p100
    %p102 = scmp.ne.s32.totalorder %s90, %s91
    %p103 = scmp.eq.s32.totalorder %s18, 1
    %p104 = por %p102, %p103
    %p106 = scmp.ne.s32.totalorder %s91, %s105
    %p107 = scmp.eq.s32.totalorder %s18, 0
    %p108 = por %p106, %p107
    %s109 = ssub.s32 %s12, %s19
    %p110 = scmp.eq.s32.totalorder %s109, 0
    %s112 = sadd.s32 %s111, 1
    %s113 = scalar_select %p110, %s111, %s112
    %p116 = pneg %p110
    %p117 = scmp.eq.s32.totalorder %s12, 1
    %p118 = por %p116, %p117
    %p119 = scmp.ne.s32.totalorder %s111, %s114
    %p120 = scmp.eq.s32.totalorder %s12, 0
    %p121 = por %p119, %p120
    %p122 = scmp.ne.s32.totalorder %s111, %s114
    %p123 = scmp.eq.s32.totalorder %s17, 1
    %p124 = por %p122, %p123
    %p125 = scmp.ne.s32.totalorder %s114, %s115
    %p126 = scmp.eq.s32.totalorder %s17, 0
    %p127 = por %p125, %p126
    %p128 = scmp.ne.s32.totalorder %s114, %s115
    %p129 = scmp.eq.s32.totalorder %s18, 1
    %p130 = por %p128, %p129
    %p132 = scmp.ne.s32.totalorder %s115, %s131
    %p133 = scmp.eq.s32.totalorder %s18, 0
    %p134 = por %p132, %p133
    %s135 = ssub.s32 %s12, %s19
    %p136 = scmp.eq.s32.totalorder %s135, 0
    %s138 = sadd.s32 %s137, 1
    %s139 = scalar_select %p136, %s137, %s138
    %p142 = pneg %p136
    %p143 = scmp.eq.s32.totalorder %s12, 1
    %p144 = por %p142, %p143
    %p145 = scmp.ne.s32.totalorder %s137, %s140
    %p146 = scmp.eq.s32.totalorder %s12, 0
    %p147 = por %p145, %p146
    %p148 = scmp.ne.s32.totalorder %s137, %s140
    %p149 = scmp.eq.s32.totalorder %s17, 1
    %p150 = por %p148, %p149
    %p151 = scmp.ne.s32.totalorder %s140, %s141
    %p152 = scmp.eq.s32.totalorder %s17, 0
    %p153 = por %p151, %p152
    %p154 = scmp.ne.s32.totalorder %s140, %s141
    %p155 = scmp.eq.s32.totalorder %s18, 1
    %p156 = por %p154, %p155
    %p158 = scmp.ne.s32.totalorder %s141, %s157
    %p159 = scmp.eq.s32.totalorder %s18, 0
    %p160 = por %p158, %p159
    %p161 = scmp.le.s32.totalorder 1, %s12
    %p162 = scmp.lt.s32.totalorder %s12, 3
    %p163 = pnand %p161, %p162
    %p164 = pneg %p163
    // Predicated region
    $region9: #{_lambda_.5} parent=5 // pred_check
      _
    $region10: #{_lambda_.5} parent=5 // pred_check_branch
      %166 = sbr.rel (%p163) target = $region12
    $region11: #{_lambda_.5} parent=5 // pred_region
      %s167 = ssub.s32 %s12, 1
      // Predicated region
      $region13: #{_lambda_.5} parent=11 // pred_check
        %p168 = pneg %p59
      $region14: #{_lambda_.5} parent=11 // pred_check_branch
        %170 = sbr.rel (%p168) target = $region16
      $region15: #{_lambda_.5} parent=11 // pred_region
        _
      $region16: #{_lambda_.5} parent=11 // pred_fallthru
        _
      // Predicated region
      $region17: #{_lambda_.5} parent=11 // pred_check
        %p171 = pneg %p80
      $region18: #{_lambda_.5} parent=11 // pred_check_branch
        %173 = sbr.rel (%p171) target = $region20
      $region19: #{_lambda_.5} parent=11 // pred_region
        _
      $region20: #{_lambda_.5} parent=11 // pred_fallthru
        _
      // Predicated region
      $region21: #{_lambda_.5} parent=11 // pred_check
        %p174 = pneg %p101
      $region22: #{_lambda_.5} parent=11 // pred_check_branch
        %176 = sbr.rel (%p174) target = $region24
      $region23: #{_lambda_.5} parent=11 // pred_region
        _
      $region24: #{_lambda_.5} parent=11 // pred_fallthru
        _
    $region12: #{_lambda_.5} parent=5 // pred_fallthru
      _
    %p177 = scmp.lt.s32.totalorder %s12, 2
    // Predicated region
    $region25: #{_lambda_.5} parent=5 // pred_check
      %p178 = pneg %p177
    $region26: #{_lambda_.5} parent=5 // pred_check_branch
      %180 = sbr.rel (%p178) target = $region28
    $region27: #{_lambda_.5} parent=5 // pred_region
      // Predicated region
      $region29: #{_lambda_.5} parent=27 // pred_check
        %p181 = pneg %p32
      $region30: #{_lambda_.5} parent=27 // pred_check_branch
        %183 = sbr.rel (%p181) target = $region32
      $region31: #{_lambda_.5} parent=27 // pred_region
        %s184 = smul.u32 32, %s12
        %p185 = scmp.lt.s32.totalorder %s184, 63
        %s186 = scalar_select %p185, %s184, 63
        %s187 = smul.addr %s186, 4
        %s188 = scalar_lea.vmem %s0, %s187
        %s189 = smul.u32 32, %s12
      $region32: #{_lambda_.5} parent=27 // pred_fallthru
        _
    $region28: #{_lambda_.5} parent=5 // pred_fallthru
      _
    %p190 = scmp.le.s32.totalorder 1, %s12
    %p191 = scmp.lt.s32.totalorder %s12, 3
    %p192 = pnand %p190, %p191
    %p193 = pneg %p192
    // Predicated region
    $region33: #{_lambda_.5} parent=5 // pred_check
      _
    $region34: #{_lambda_.5} parent=5 // pred_check_branch
      %195 = sbr.rel (%p192) target = $region36
    $region35: #{_lambda_.5} parent=5 // pred_region
      %s196 = ssub.s32 %s12, 1
      %s197 = smul.u32 32, %s17
      %p198 = scmp.lt.s32.totalorder %s197, 63
      %s199 = scalar_select %p198, %s197, 63
      %s200 = smul.addr %s199, 4
      %s201 = scalar_lea.vmem %s0, %s200
      %p202 = pneg %p38
      %p203 = pneg %p35
      %p204 = pneg %p59
      %p205 = pneg %p56
      %p206 = pneg %p80
      %p207 = pneg %p77
      %p208 = pneg %p101
      %p209 = pneg %p98
      %p210 = pneg %p127
      %p211 = pneg %p124
      %s212 = smul.u32 32, %s17
      %p213 = scmp.lt.s32.totalorder %s212, 63
      %s214 = scalar_select %p213, %s212, 63
      %s215 = smul.addr %s214, 4
      %s216 = scalar_lea.vmem %s4, %s215
      %p217 = pneg %p153
      %p218 = pneg %p150
      %p219 = scmp.lt.s32.totalorder %s17, 1
      %s220 = scalar_select %p219, %s17, 1
      %s221 = scalar_lea.vmem %s5, %s220
      %s222 = smul.u32 32, %s17
      %p223 = scmp.lt.s32.totalorder %s222, 63
      %s224 = scalar_select %p223, %s222, 63
      %s225 = smul.addr %s224, 4
      %s226 = scalar_lea.vmem %s0, %s225
      %s227 = smul.u32 32, %s17
      %s228 = smul.u32 32, %s17
      %p229 = scmp.lt.s32.totalorder %s228, 63
      %s230 = scalar_select %p229, %s228, 63
      %s231 = smul.addr %s230, 4
      %s232 = scalar_lea.vmem %s4, %s231
      %s233 = smul.u32 32, %s17
      %p234 = scmp.lt.s32.totalorder %s17, 1
      %s235 = scalar_select %p234, %s17, 1
      %s236 = scalar_lea.vmem %s5, %s235
      %v238 = vld [vmem:[%s226] sm:$0xf]
      %v239 = vld [vmem:[%s226 + $0x4] sm:$0xf]
      %v240 = vld [vmem:[%s226 + $0x8] sm:$0xf]
      %v241 = vld [vmem:[%s226 + $0xc] sm:$0xf]
      %v242 = vld [vmem:[%s226 + $0x10] sm:$0xf]
      %v243 = vld [vmem:[%s226 + $0x14] sm:$0xf]
      %v244 = vld [vmem:[%s226 + $0x18] sm:$0xf]
      %v245 = vld [vmem:[%s226 + $0x1c] sm:$0xf]
      %v246 = vld [vmem:[%s226 + $0x20] sm:$0xf]
      %v247 = vld [vmem:[%s226 + $0x24] sm:$0xf]
      %v248 = vld [vmem:[%s226 + $0x28] sm:$0xf]
      %v249 = vld [vmem:[%s226 + $0x2c] sm:$0xf]
      %v250 = vld [vmem:[%s226 + $0x30] sm:$0xf]
      %v251 = vld [vmem:[%s226 + $0x34] sm:$0xf]
      %v252 = vld [vmem:[%s226 + $0x38] sm:$0xf]
      %v253 = vld [vmem:[%s226 + $0x3c] sm:$0xf]
      %v254 = vld [vmem:[%s226 + $0x40] sm:$0xf]
      %v255 = vld [vmem:[%s226 + $0x44] sm:$0xf]
      %v256 = vld [vmem:[%s226 + $0x48] sm:$0xf]
      %v257 = vld [vmem:[%s226 + $0x4c] sm:$0xf]
      %v258 = vld [vmem:[%s226 + $0x50] sm:$0xf]
      %v259 = vld [vmem:[%s226 + $0x54] sm:$0xf]
      %v260 = vld [vmem:[%s226 + $0x58] sm:$0xf]
      %v261 = vld [vmem:[%s226 + $0x5c] sm:$0xf]
      %v262 = vld [vmem:[%s226 + $0x60] sm:$0xf]
      %v263 = vld [vmem:[%s226 + $0x64] sm:$0xf]
      %v264 = vld [vmem:[%s226 + $0x68] sm:$0xf]
      %v265 = vld [vmem:[%s226 + $0x6c] sm:$0xf]
      %v266 = vld [vmem:[%s226 + $0x70] sm:$0xf]
      %v267 = vld [vmem:[%s226 + $0x74] sm:$0xf]
      %v268 = vld [vmem:[%s226 + $0x78] sm:$0xf]
      %v269 = vld [vmem:[%s226 + $0x7c] sm:$0xf]
      %v270 = vunpack.c.l.bf16 %v238
      %v271 = vunpack.c.l.bf16 %v239
      %v272 = vunpack.c.l.bf16 %v240
      %v273 = vunpack.c.l.bf16 %v241
      %v274 = vunpack.c.l.bf16 %v242
      %v275 = vunpack.c.l.bf16 %v243
      %v276 = vunpack.c.l.bf16 %v244
      %v277 = vunpack.c.l.bf16 %v245
      %v278 = vunpack.c.l.bf16 %v246
      %v279 = vunpack.c.l.bf16 %v247
      %v280 = vunpack.c.l.bf16 %v248
      %v281 = vunpack.c.l.bf16 %v249
      %v282 = vunpack.c.l.bf16 %v250
      %v283 = vunpack.c.l.bf16 %v251
      %v284 = vunpack.c.l.bf16 %v252
      %v285 = vunpack.c.l.bf16 %v253
      %v286 = vunpack.c.l.bf16 %v254
      %v287 = vunpack.c.l.bf16 %v255
      %v288 = vunpack.c.l.bf16 %v256
      %v289 = vunpack.c.l.bf16 %v257
      %v290 = vunpack.c.l.bf16 %v258
      %v291 = vunpack.c.l.bf16 %v259
      %v292 = vunpack.c.l.bf16 %v260
      %v293 = vunpack.c.l.bf16 %v261
      %v294 = vunpack.c.l.bf16 %v262
      %v295 = vunpack.c.l.bf16 %v263
      %v296 = vunpack.c.l.bf16 %v264
      %v297 = vunpack.c.l.bf16 %v265
      %v298 = vunpack.c.l.bf16 %v266
      %v299 = vunpack.c.l.bf16 %v267
      %v300 = vunpack.c.l.bf16 %v268
      %v301 = vunpack.c.l.bf16 %v269
      %v302 = vld [vmem:[%s1] sm:$0x1]
      %v304 = vlaneseq
      %v305 = vshrl.u32 %v304, 7
      %v306 = vsub.s32 0, %v305
      %v307 = vrot.slane %v302, %v306
      %v309 = vmul.f32 %v270, %v307
      %v310 = vmul.f32 %v271, %v307
      %v311 = vmul.f32 %v272, %v307
      %v312 = vmul.f32 %v273, %v307
      %v313 = vmul.f32 %v274, %v307
      %v314 = vmul.f32 %v275, %v307
      %v315 = vmul.f32 %v276, %v307
      %v316 = vmul.f32 %v277, %v307
      %v317 = vmul.f32 %v278, %v307
      %v318 = vmul.f32 %v279, %v307
      %v319 = vmul.f32 %v280, %v307
      %v320 = vmul.f32 %v281, %v307
      %v321 = vmul.f32 %v282, %v307
      %v322 = vmul.f32 %v283, %v307
      %v323 = vmul.f32 %v284, %v307
      %v324 = vmul.f32 %v285, %v307
      %v325 = vmul.f32 %v286, %v307
      %v326 = vmul.f32 %v287, %v307
      %v327 = vmul.f32 %v288, %v307
      %v328 = vmul.f32 %v289, %v307
      %v329 = vmul.f32 %v290, %v307
      %v330 = vmul.f32 %v291, %v307
      %v331 = vmul.f32 %v292, %v307
      %v332 = vmul.f32 %v293, %v307
      %v333 = vmul.f32 %v294, %v307
      %v334 = vmul.f32 %v295, %v307
      %v335 = vmul.f32 %v296, %v307
      %v336 = vmul.f32 %v297, %v307
      %v337 = vmul.f32 %v298, %v307
      %v338 = vmul.f32 %v299, %v307
      %v339 = vmul.f32 %v300, %v307
      %v340 = vmul.f32 %v301, %v307
      %v341 = vld [vmem:[%s2] sm:$0x1]
      %v343 = vlaneseq
      %v344 = vshrl.u32 %v343, 7
      %v345 = vsub.s32 0, %v344
      %v346 = vrot.slane %v341, %v345
      %v348 = vadd.f32 %v309, %v346
      %v349 = vadd.f32 %v310, %v346
      %v350 = vadd.f32 %v311, %v346
      %v351 = vadd.f32 %v312, %v346
      %v352 = vadd.f32 %v313, %v346
      %v353 = vadd.f32 %v314, %v346
      %v354 = vadd.f32 %v315, %v346
      %v355 = vadd.f32 %v316, %v346
      %v356 = vadd.f32 %v317, %v346
      %v357 = vadd.f32 %v318, %v346
      %v358 = vadd.f32 %v319, %v346
      %v359 = vadd.f32 %v320, %v346
      %v360 = vadd.f32 %v321, %v346
      %v361 = vadd.f32 %v322, %v346
      %v362 = vadd.f32 %v323, %v346
      %v363 = vadd.f32 %v324, %v346
      %v364 = vadd.f32 %v325, %v346
      %v365 = vadd.f32 %v326, %v346
      %v366 = vadd.f32 %v327, %v346
      %v367 = vadd.f32 %v328, %v346
      %v368 = vadd.f32 %v329, %v346
      %v369 = vadd.f32 %v330, %v346
      %v370 = vadd.f32 %v331, %v346
      %v371 = vadd.f32 %v332, %v346
      %v372 = vadd.f32 %v333, %v346
      %v373 = vadd.f32 %v334, %v346
      %v374 = vadd.f32 %v335, %v346
      %v375 = vadd.f32 %v336, %v346
      %v376 = vadd.f32 %v337, %v346
      %v377 = vadd.f32 %v338, %v346
      %v378 = vadd.f32 %v339, %v346
      %v379 = vadd.f32 %v340, %v346
      %v380 = vmax.f32 %v348, 0.0
      %v381 = vmax.f32 %v349, 0.0
      %v382 = vmax.f32 %v350, 0.0
      %v383 = vmax.f32 %v351, 0.0
      %v384 = vmax.f32 %v352, 0.0
      %v385 = vmax.f32 %v353, 0.0
      %v386 = vmax.f32 %v354, 0.0
      %v387 = vmax.f32 %v355, 0.0
      %v388 = vmax.f32 %v356, 0.0
      %v389 = vmax.f32 %v357, 0.0
      %v390 = vmax.f32 %v358, 0.0
      %v391 = vmax.f32 %v359, 0.0
      %v392 = vmax.f32 %v360, 0.0
      %v393 = vmax.f32 %v361, 0.0
      %v394 = vmax.f32 %v362, 0.0
      %v395 = vmax.f32 %v363, 0.0
      %v396 = vmax.f32 %v364, 0.0
      %v397 = vmax.f32 %v365, 0.0
      %v398 = vmax.f32 %v366, 0.0
      %v399 = vmax.f32 %v367, 0.0
      %v400 = vmax.f32 %v368, 0.0
      %v401 = vmax.f32 %v369, 0.0
      %v402 = vmax.f32 %v370, 0.0
      %v403 = vmax.f32 %v371, 0.0
      %v404 = vmax.f32 %v372, 0.0
      %v405 = vmax.f32 %v373, 0.0
      %v406 = vmax.f32 %v374, 0.0
      %v407 = vmax.f32 %v375, 0.0
      %v408 = vmax.f32 %v376, 0.0
      %v409 = vmax.f32 %v377, 0.0
      %v410 = vmax.f32 %v378, 0.0
      %v411 = vmax.f32 %v379, 0.0
      %v412 = vlaneseq
      %v413 = vshrl.u32 %v412, 7
      %v414 = vadd.s32 %v413, 8
      %v415 = vadd.s32 %v413, 16
      %v416 = vadd.s32 %v413, 24
      %v417 = vadd.s32 %v413, 32
      %v418 = vadd.s32 %v413, 40
      %v419 = vadd.s32 %v413, 48
      %v420 = vadd.s32 %v413, 56
      %v421 = vadd.s32 %v413, 64
      %v422 = vadd.s32 %v413, 72
      %v423 = vadd.s32 %v413, 80
      %v424 = vadd.s32 %v413, 88
      %v425 = vadd.s32 %v413, 96
      %v426 = vadd.s32 %v413, 104
      %v427 = vadd.s32 %v413, 112
      %v428 = vadd.s32 %v413, 120
      %v429 = vadd.s32 %v413, 128
      %v430 = vadd.s32 %v413, 136
      %v431 = vadd.s32 %v413, 144
      %v432 = vadd.s32 %v413, 152
      %v433 = vadd.s32 %v413, 160
      %v434 = vadd.s32 %v413, 168
      %v435 = vadd.s32 %v413, 176
      %v436 = vadd.s32 %v413, 184
      %v437 = vadd.s32 %v413, 192
      %v438 = vadd.s32 %v413, 200
      %v439 = vadd.s32 %v413, 208
      %v440 = vadd.s32 %v413, 216
      %v441 = vadd.s32 %v413, 224
      %v442 = vadd.s32 %v413, 232
      %v443 = vadd.s32 %v413, 240
      %v444 = vadd.s32 %v413, 248
      %vm445 = vcmp.lt.s32.totalorder %v413, 0
      %v446 = vsub.s32 0, %v413
      %v447 = vsel %vm445, %v446, %v413
      %v448 = vshrl.u32 %v447, 4
      %v449 = vand.u32 %v447, 15
      %v450 = vsub.s32 0, %v449
      %v451 = vsel %vm445, %v450, %v449
      %vm452 = vcmp.lt.s32.totalorder %v414, 0
      %v453 = vsub.s32 0, %v414
      %v454 = vsel %vm452, %v453, %v414
      %v455 = vshrl.u32 %v454, 4
      %v456 = vand.u32 %v454, 15
      %v457 = vsub.s32 0, %v456
      %v458 = vsel %vm452, %v457, %v456
      %vm459 = vcmp.lt.s32.totalorder %v415, 0
      %v460 = vsub.s32 0, %v415
      %v461 = vsel %vm459, %v460, %v415
      %v462 = vshrl.u32 %v461, 4
      %v463 = vand.u32 %v461, 15
      %v464 = vsub.s32 0, %v463
      %v465 = vsel %vm459, %v464, %v463
      %vm466 = vcmp.lt.s32.totalorder %v416, 0
      %v467 = vsub.s32 0, %v416
      %v468 = vsel %vm466, %v467, %v416
      %v469 = vshrl.u32 %v468, 4
      %v470 = vand.u32 %v468, 15
      %v471 = vsub.s32 0, %v470
      %v472 = vsel %vm466, %v471, %v470
      %vm473 = vcmp.lt.s32.totalorder %v417, 0
      %v474 = vsub.s32 0, %v417
      %v475 = vsel %vm473, %v474, %v417
      %v476 = vshrl.u32 %v475, 4
      %v477 = vand.u32 %v475, 15
      %v478 = vsub.s32 0, %v477
      %v479 = vsel %vm473, %v478, %v477
      %vm480 = vcmp.lt.s32.totalorder %v418, 0
      %v481 = vsub.s32 0, %v418
      %v482 = vsel %vm480, %v481, %v418
      %v483 = vshrl.u32 %v482, 4
      %v484 = vand.u32 %v482, 15
      %v485 = vsub.s32 0, %v484
      %v486 = vsel %vm480, %v485, %v484
      %vm487 = vcmp.lt.s32.totalorder %v419, 0
      %v488 = vsub.s32 0, %v419
      %v489 = vsel %vm487, %v488, %v419
      %v490 = vshrl.u32 %v489, 4
      %v491 = vand.u32 %v489, 15
      %v492 = vsub.s32 0, %v491
      %v493 = vsel %vm487, %v492, %v491
      %vm494 = vcmp.lt.s32.totalorder %v420, 0
      %v495 = vsub.s32 0, %v420
      %v496 = vsel %vm494, %v495, %v420
      %v497 = vshrl.u32 %v496, 4
      %v498 = vand.u32 %v496, 15
      %v499 = vsub.s32 0, %v498
      %v500 = vsel %vm494, %v499, %v498
      %vm501 = vcmp.lt.s32.totalorder %v421, 0
      %v502 = vsub.s32 0, %v421
      %v503 = vsel %vm501, %v502, %v421
      %v504 = vshrl.u32 %v503, 4
      %v505 = vand.u32 %v503, 15
      %v506 = vsub.s32 0, %v505
      %v507 = vsel %vm501, %v506, %v505
      %vm508 = vcmp.lt.s32.totalorder %v422, 0
      %v509 = vsub.s32 0, %v422
      %v510 = vsel %vm508, %v509, %v422
      %v511 = vshrl.u32 %v510, 4
      %v512 = vand.u32 %v510, 15
      %v513 = vsub.s32 0, %v512
      %v514 = vsel %vm508, %v513, %v512
      %vm515 = vcmp.lt.s32.totalorder %v423, 0
      %v516 = vsub.s32 0, %v423
      %v517 = vsel %vm515, %v516, %v423
      %v518 = vshrl.u32 %v517, 4
      %v519 = vand.u32 %v517, 15
      %v520 = vsub.s32 0, %v519
      %v521 = vsel %vm515, %v520, %v519
      %vm522 = vcmp.lt.s32.totalorder %v424, 0
      %v523 = vsub.s32 0, %v424
      %v524 = vsel %vm522, %v523, %v424
      %v525 = vshrl.u32 %v524, 4
      %v526 = vand.u32 %v524, 15
      %v527 = vsub.s32 0, %v526
      %v528 = vsel %vm522, %v527, %v526
      %vm529 = vcmp.lt.s32.totalorder %v425, 0
      %v530 = vsub.s32 0, %v425
      %v531 = vsel %vm529, %v530, %v425
      %v532 = vshrl.u32 %v531, 4
      %v533 = vand.u32 %v531, 15
      %v534 = vsub.s32 0, %v533
      %v535 = vsel %vm529, %v534, %v533
      %vm536 = vcmp.lt.s32.totalorder %v426, 0
      %v537 = vsub.s32 0, %v426
      %v538 = vsel %vm536, %v537, %v426
      %v539 = vshrl.u32 %v538, 4
      %v540 = vand.u32 %v538, 15
      %v541 = vsub.s32 0, %v540
      %v542 = vsel %vm536, %v541, %v540
      %vm543 = vcmp.lt.s32.totalorder %v427, 0
      %v544 = vsub.s32 0, %v427
      %v545 = vsel %vm543, %v544, %v427
      %v546 = vshrl.u32 %v545, 4
      %v547 = vand.u32 %v545, 15
      %v548 = vsub.s32 0, %v547
      %v549 = vsel %vm543, %v548, %v547
      %vm550 = vcmp.lt.s32.totalorder %v428, 0
      %v551 = vsub.s32 0, %v428
      %v552 = vsel %vm550, %v551, %v428
      %v553 = vshrl.u32 %v552, 4
      %v554 = vand.u32 %v552, 15
      %v555 = vsub.s32 0, %v554
      %v556 = vsel %vm550, %v555, %v554
      %vm557 = vcmp.lt.s32.totalorder %v429, 0
      %v558 = vsub.s32 0, %v429
      %v559 = vsel %vm557, %v558, %v429
      %v560 = vshrl.u32 %v559, 4
      %v561 = vand.u32 %v559, 15
      %v562 = vsub.s32 0, %v561
      %v563 = vsel %vm557, %v562, %v561
      %vm564 = vcmp.lt.s32.totalorder %v430, 0
      %v565 = vsub.s32 0, %v430
      %v566 = vsel %vm564, %v565, %v430
      %v567 = vshrl.u32 %v566, 4
      %v568 = vand.u32 %v566, 15
      %v569 = vsub.s32 0, %v568
      %v570 = vsel %vm564, %v569, %v568
      %vm571 = vcmp.lt.s32.totalorder %v431, 0
      %v572 = vsub.s32 0, %v431
      %v573 = vsel %vm571, %v572, %v431
      %v574 = vshrl.u32 %v573, 4
      %v575 = vand.u32 %v573, 15
      %v576 = vsub.s32 0, %v575
      %v577 = vsel %vm571, %v576, %v575
      %vm578 = vcmp.lt.s32.totalorder %v432, 0
      %v579 = vsub.s32 0, %v432
      %v580 = vsel %vm578, %v579, %v432
      %v581 = vshrl.u32 %v580, 4
      %v582 = vand.u32 %v580, 15
      %v583 = vsub.s32 0, %v582
      %v584 = vsel %vm578, %v583, %v582
      %vm585 = vcmp.lt.s32.totalorder %v433, 0
      %v586 = vsub.s32 0, %v433
      %v587 = vsel %vm585, %v586, %v433
      %v588 = vshrl.u32 %v587, 4
      %v589 = vand.u32 %v587, 15
      %v590 = vsub.s32 0, %v589
      %v591 = vsel %vm585, %v590, %v589
      %vm592 = vcmp.lt.s32.totalorder %v434, 0
      %v593 = vsub.s32 0, %v434
      %v594 = vsel %vm592, %v593, %v434
      %v595 = vshrl.u32 %v594, 4
      %v596 = vand.u32 %v594, 15
      %v597 = vsub.s32 0, %v596
      %v598 = vsel %vm592, %v597, %v596
      %vm599 = vcmp.lt.s32.totalorder %v435, 0
      %v600 = vsub.s32 0, %v435
      %v601 = vsel %vm599, %v600, %v435
      %v602 = vshrl.u32 %v601, 4
      %v603 = vand.u32 %v601, 15
      %v604 = vsub.s32 0, %v603
      %v605 = vsel %vm599, %v604, %v603
      %vm606 = vcmp.lt.s32.totalorder %v436, 0
      %v607 = vsub.s32 0, %v436
      %v608 = vsel %vm606, %v607, %v436
      %v609 = vshrl.u32 %v608, 4
      %v610 = vand.u32 %v608, 15
      %v611 = vsub.s32 0, %v610
      %v612 = vsel %vm606, %v611, %v610
      %vm613 = vcmp.lt.s32.totalorder %v437, 0
      %v614 = vsub.s32 0, %v437
      %v615 = vsel %vm613, %v614, %v437
      %v616 = vshrl.u32 %v615, 4
      %v617 = vand.u32 %v615, 15
      %v618 = vsub.s32 0, %v617
      %v619 = vsel %vm613, %v618, %v617
      %vm620 = vcmp.lt.s32.totalorder %v438, 0
      %v621 = vsub.s32 0, %v438
      %v622 = vsel %vm620, %v621, %v438
      %v623 = vshrl.u32 %v622, 4
      %v624 = vand.u32 %v622, 15
      %v625 = vsub.s32 0, %v624
      %v626 = vsel %vm620, %v625, %v624
      %vm627 = vcmp.lt.s32.totalorder %v439, 0
      %v628 = vsub.s32 0, %v439
      %v629 = vsel %vm627, %v628, %v439
      %v630 = vshrl.u32 %v629, 4
      %v631 = vand.u32 %v629, 15
      %v632 = vsub.s32 0, %v631
      %v633 = vsel %vm627, %v632, %v631
      %vm634 = vcmp.lt.s32.totalorder %v440, 0
      %v635 = vsub.s32 0, %v440
      %v636 = vsel %vm634, %v635, %v440
      %v637 = vshrl.u32 %v636, 4
      %v638 = vand.u32 %v636, 15
      %v639 = vsub.s32 0, %v638
      %v640 = vsel %vm634, %v639, %v638
      %vm641 = vcmp.lt.s32.totalorder %v441, 0
      %v642 = vsub.s32 0, %v441
      %v643 = vsel %vm641, %v642, %v441
      %v644 = vshrl.u32 %v643, 4
      %v645 = vand.u32 %v643, 15
      %v646 = vsub.s32 0, %v645
      %v647 = vsel %vm641, %v646, %v645
      %vm648 = vcmp.lt.s32.totalorder %v442, 0
      %v649 = vsub.s32 0, %v442
      %v650 = vsel %vm648, %v649, %v442
      %v651 = vshrl.u32 %v650, 4
      %v652 = vand.u32 %v650, 15
      %v653 = vsub.s32 0, %v652
      %v654 = vsel %vm648, %v653, %v652
      %vm655 = vcmp.lt.s32.totalorder %v443, 0
      %v656 = vsub.s32 0, %v443
      %v657 = vsel %vm655, %v656, %v443
      %v658 = vshrl.u32 %v657, 4
      %v659 = vand.u32 %v657, 15
      %v660 = vsub.s32 0, %v659
      %v661 = vsel %vm655, %v660, %v659
      %vm662 = vcmp.lt.s32.totalorder %v444, 0
      %v663 = vsub.s32 0, %v444
      %v664 = vsel %vm662, %v663, %v444
      %v665 = vshrl.u32 %v664, 4
      %v666 = vand.u32 %v664, 15
      %v667 = vsub.s32 0, %v666
      %v668 = vsel %vm662, %v667, %v666
      %vm669 = vcmp.ne.s32.totalorder %v451, 0
      %vm670 = vcmp.ne.s32.totalorder %v458, 0
      %vm671 = vcmp.ne.s32.totalorder %v465, 0
      %vm672 = vcmp.ne.s32.totalorder %v472, 0
      %vm673 = vcmp.ne.s32.totalorder %v479, 0
      %vm674 = vcmp.ne.s32.totalorder %v486, 0
      %vm675 = vcmp.ne.s32.totalorder %v493, 0
      %vm676 = vcmp.ne.s32.totalorder %v500, 0
      %vm677 = vcmp.ne.s32.totalorder %v507, 0
      %vm678 = vcmp.ne.s32.totalorder %v514, 0
      %vm679 = vcmp.ne.s32.totalorder %v521, 0
      %vm680 = vcmp.ne.s32.totalorder %v528, 0
      %vm681 = vcmp.ne.s32.totalorder %v535, 0
      %vm682 = vcmp.ne.s32.totalorder %v542, 0
      %vm683 = vcmp.ne.s32.totalorder %v549, 0
      %vm684 = vcmp.ne.s32.totalorder %v556, 0
      %vm685 = vcmp.ne.s32.totalorder %v563, 0
      %vm686 = vcmp.ne.s32.totalorder %v570, 0
      %vm687 = vcmp.ne.s32.totalorder %v577, 0
      %vm688 = vcmp.ne.s32.totalorder %v584, 0
      %vm689 = vcmp.ne.s32.totalorder %v591, 0
      %vm690 = vcmp.ne.s32.totalorder %v598, 0
      %vm691 = vcmp.ne.s32.totalorder %v605, 0
      %vm692 = vcmp.ne.s32.totalorder %v612, 0
      %vm693 = vcmp.ne.s32.totalorder %v619, 0
      %vm694 = vcmp.ne.s32.totalorder %v626, 0
      %vm695 = vcmp.ne.s32.totalorder %v633, 0
      %vm696 = vcmp.ne.s32.totalorder %v640, 0
      %vm697 = vcmp.ne.s32.totalorder %v647, 0
      %vm698 = vcmp.ne.s32.totalorder %v654, 0
      %vm699 = vcmp.ne.s32.totalorder %v661, 0
      %vm700 = vcmp.ne.s32.totalorder %v668, 0
      %vm701 = vcmp.lt.s32.totalorder %v451, 0
      %vm702 = vcmp.lt.s32.totalorder %v458, 0
      %vm703 = vcmp.lt.s32.totalorder %v465, 0
      %vm704 = vcmp.lt.s32.totalorder %v472, 0
      %vm705 = vcmp.lt.s32.totalorder %v479, 0
      %vm706 = vcmp.lt.s32.totalorder %v486, 0
      %vm707 = vcmp.lt.s32.totalorder %v493, 0
      %vm708 = vcmp.lt.s32.totalorder %v500, 0
      %vm709 = vcmp.lt.s32.totalorder %v507, 0
      %vm710 = vcmp.lt.s32.totalorder %v514, 0
      %vm711 = vcmp.lt.s32.totalorder %v521, 0
      %vm712 = vcmp.lt.s32.totalorder %v528, 0
      %vm713 = vcmp.lt.s32.totalorder %v535, 0
      %vm714 = vcmp.lt.s32.totalorder %v542, 0
      %vm715 = vcmp.lt.s32.totalorder %v549, 0
      %vm716 = vcmp.lt.s32.totalorder %v556, 0
      %vm717 = vcmp.lt.s32.totalorder %v563, 0
      %vm718 = vcmp.lt.s32.totalorder %v570, 0
      %vm719 = vcmp.lt.s32.totalorder %v577, 0
      %vm720 = vcmp.lt.s32.totalorder %v584, 0
      %vm721 = vcmp.lt.s32.totalorder %v591, 0
      %vm722 = vcmp.lt.s32.totalorder %v598, 0
      %vm723 = vcmp.lt.s32.totalorder %v605, 0
      %vm724 = vcmp.lt.s32.totalorder %v612, 0
      %vm725 = vcmp.lt.s32.totalorder %v619, 0
      %vm726 = vcmp.lt.s32.totalorder %v626, 0
      %vm727 = vcmp.lt.s32.totalorder %v633, 0
      %vm728 = vcmp.lt.s32.totalorder %v640, 0
      %vm729 = vcmp.lt.s32.totalorder %v647, 0
      %vm730 = vcmp.lt.s32.totalorder %v654, 0
      %vm731 = vcmp.lt.s32.totalorder %v661, 0
      %vm732 = vcmp.lt.s32.totalorder %v668, 0
      %vm733 = vmand %vm701, %vm669
      %vm734 = vmand %vm702, %vm670
      %vm735 = vmand %vm703, %vm671
      %vm736 = vmand %vm704, %vm672
      %vm737 = vmand %vm705, %vm673
      %vm738 = vmand %vm706, %vm674
      %vm739 = vmand %vm707, %vm675
      %vm740 = vmand %vm708, %vm676
      %vm741 = vmand %vm709, %vm677
      %vm742 = vmand %vm710, %vm678
      %vm743 = vmand %vm711, %vm679
      %vm744 = vmand %vm712, %vm680
      %vm745 = vmand %vm713, %vm681
      %vm746 = vmand %vm714, %vm682
      %vm747 = vmand %vm715, %vm683
      %vm748 = vmand %vm716, %vm684
      %vm749 = vmand %vm717, %vm685
      %vm750 = vmand %vm718, %vm686
      %vm751 = vmand %vm719, %vm687
      %vm752 = vmand %vm720, %vm688
      %vm753 = vmand %vm721, %vm689
      %vm754 = vmand %vm722, %vm690
      %vm755 = vmand %vm723, %vm691
      %vm756 = vmand %vm724, %vm692
      %vm757 = vmand %vm725, %vm693
      %vm758 = vmand %vm726, %vm694
      %vm759 = vmand %vm727, %vm695
      %vm760 = vmand %vm728, %vm696
      %vm761 = vmand %vm729, %vm697
      %vm762 = vmand %vm730, %vm698
      %vm763 = vmand %vm731, %vm699
      %vm764 = vmand %vm732, %vm700
      %v765 = vadd.s32 %v451, 16
      %v766 = vadd.s32 %v458, 16
      %v767 = vadd.s32 %v465, 16
      %v768 = vadd.s32 %v472, 16
      %v769 = vadd.s32 %v479, 16
      %v770 = vadd.s32 %v486, 16
      %v771 = vadd.s32 %v493, 16
      %v772 = vadd.s32 %v500, 16
      %v773 = vadd.s32 %v507, 16
      %v774 = vadd.s32 %v514, 16
      %v775 = vadd.s32 %v521, 16
      %v776 = vadd.s32 %v528, 16
      %v777 = vadd.s32 %v535, 16
      %v778 = vadd.s32 %v542, 16
      %v779 = vadd.s32 %v549, 16
      %v780 = vadd.s32 %v556, 16
      %v781 = vadd.s32 %v563, 16
      %v782 = vadd.s32 %v570, 16
      %v783 = vadd.s32 %v577, 16
      %v784 = vadd.s32 %v584, 16
      %v785 = vadd.s32 %v591, 16
      %v786 = vadd.s32 %v598, 16
      %v787 = vadd.s32 %v605, 16
      %v788 = vadd.s32 %v612, 16
      %v789 = vadd.s32 %v619, 16
      %v790 = vadd.s32 %v626, 16
      %v791 = vadd.s32 %v633, 16
      %v792 = vadd.s32 %v640, 16
      %v793 = vadd.s32 %v647, 16
      %v794 = vadd.s32 %v654, 16
      %v795 = vadd.s32 %v661, 16
      %v796 = vadd.s32 %v668, 16
      %v797 = vsel %vm733, %v765, %v451
      %v798 = vsel %vm734, %v766, %v458
      %v799 = vsel %vm735, %v767, %v465
      %v800 = vsel %vm736, %v768, %v472
      %v801 = vsel %vm737, %v769, %v479
      %v802 = vsel %vm738, %v770, %v486
      %v803 = vsel %vm739, %v771, %v493
      %v804 = vsel %vm740, %v772, %v500
      %v805 = vsel %vm741, %v773, %v507
      %v806 = vsel %vm742, %v774, %v514
      %v807 = vsel %vm743, %v775, %v521
      %v808 = vsel %vm744, %v776, %v528
      %v809 = vsel %vm745, %v777, %v535
      %v810 = vsel %vm746, %v778, %v542
      %v811 = vsel %vm747, %v779, %v549
      %v812 = vsel %vm748, %v780, %v556
      %v813 = vsel %vm749, %v781, %v563
      %v814 = vsel %vm750, %v782, %v570
      %v815 = vsel %vm751, %v783, %v577
      %v816 = vsel %vm752, %v784, %v584
      %v817 = vsel %vm753, %v785, %v591
      %v818 = vsel %vm754, %v786, %v598
      %v819 = vsel %vm755, %v787, %v605
      %v820 = vsel %vm756, %v788, %v612
      %v821 = vsel %vm757, %v789, %v619
      %v822 = vsel %vm758, %v790, %v626
      %v823 = vsel %vm759, %v791, %v633
      %v824 = vsel %vm760, %v792, %v640
      %v825 = vsel %vm761, %v793, %v647
      %v826 = vsel %vm762, %v794, %v654
      %v827 = vsel %vm763, %v795, %v661
      %v828 = vsel %vm764, %v796, %v668
      %vm829 = vcmp.gt.s32.totalorder %v797, 0
      %vm830 = vcmp.gt.s32.totalorder %v798, 0
      %vm831 = vcmp.gt.s32.totalorder %v799, 0
      %vm832 = vcmp.gt.s32.totalorder %v800, 0
      %vm833 = vcmp.gt.s32.totalorder %v801, 0
      %vm834 = vcmp.gt.s32.totalorder %v802, 0
      %vm835 = vcmp.gt.s32.totalorder %v803, 0
      %vm836 = vcmp.gt.s32.totalorder %v804, 0
      %vm837 = vcmp.gt.s32.totalorder %v805, 0
      %vm838 = vcmp.gt.s32.totalorder %v806, 0
      %vm839 = vcmp.gt.s32.totalorder %v807, 0
      %vm840 = vcmp.gt.s32.totalorder %v808, 0
      %vm841 = vcmp.gt.s32.totalorder %v809, 0
      %vm842 = vcmp.gt.s32.totalorder %v810, 0
      %vm843 = vcmp.gt.s32.totalorder %v811, 0
      %vm844 = vcmp.gt.s32.totalorder %v812, 0
      %vm845 = vcmp.gt.s32.totalorder %v813, 0
      %vm846 = vcmp.gt.s32.totalorder %v814, 0
      %vm847 = vcmp.gt.s32.totalorder %v815, 0
      %vm848 = vcmp.gt.s32.totalorder %v816, 0
      %vm849 = vcmp.gt.s32.totalorder %v817, 0
      %vm850 = vcmp.gt.s32.totalorder %v818, 0
      %vm851 = vcmp.gt.s32.totalorder %v819, 0
      %vm852 = vcmp.gt.s32.totalorder %v820, 0
      %vm853 = vcmp.gt.s32.totalorder %v821, 0
      %vm854 = vcmp.gt.s32.totalorder %v822, 0
      %vm855 = vcmp.gt.s32.totalorder %v823, 0
      %vm856 = vcmp.gt.s32.totalorder %v824, 0
      %vm857 = vcmp.gt.s32.totalorder %v825, 0
      %vm858 = vcmp.gt.s32.totalorder %v826, 0
      %vm859 = vcmp.gt.s32.totalorder %v827, 0
      %vm860 = vcmp.gt.s32.totalorder %v828, 0
      %vm893 = vcmask 1040384
      %v894 = vrot.slane %v380, 7
      %v895 = vrot.slane %v381, 7
      %v896 = vsel %vm893, %v894, %v895
      %v897 = vrot.slane %v382, 7
      %v898 = vsel %vm893, %v895, %v897
      %v899 = vrot.slane %v383, 7
      %v900 = vsel %vm893, %v897, %v899
      %v901 = vrot.slane %v384, 7
      %v902 = vsel %vm893, %v899, %v901
      %v903 = vrot.slane %v385, 7
      %v904 = vsel %vm893, %v901, %v903
      %v905 = vrot.slane %v386, 7
      %v906 = vsel %vm893, %v903, %v905
      %v907 = vrot.slane %v387, 7
      %v908 = vsel %vm893, %v905, %v907
      %v909 = vrot.slane %v388, 7
      %v910 = vsel %vm893, %v907, %v909
      %v911 = vrot.slane %v389, 7
      %v912 = vsel %vm893, %v909, %v911
      %v913 = vrot.slane %v390, 7
      %v914 = vsel %vm893, %v911, %v913
      %v915 = vrot.slane %v391, 7
      %v916 = vsel %vm893, %v913, %v915
      %v917 = vrot.slane %v392, 7
      %v918 = vsel %vm893, %v915, %v917
      %v919 = vrot.slane %v393, 7
      %v920 = vsel %vm893, %v917, %v919
      %v921 = vrot.slane %v394, 7
      %v922 = vsel %vm893, %v919, %v921
      %v923 = vrot.slane %v395, 7
      %v924 = vsel %vm893, %v921, %v923
      %v925 = vrot.slane %v396, 7
      %v926 = vsel %vm893, %v923, %v925
      %v927 = vrot.slane %v397, 7
      %v928 = vsel %vm893, %v925, %v927
      %v929 = vrot.slane %v398, 7
      %v930 = vsel %vm893, %v927, %v929
      %v931 = vrot.slane %v399, 7
      %v932 = vsel %vm893, %v929, %v931
      %v933 = vrot.slane %v400, 7
      %v934 = vsel %vm893, %v931, %v933
      %v935 = vrot.slane %v401, 7
      %v936 = vsel %vm893, %v933, %v935
      %v937 = vrot.slane %v402, 7
      %v938 = vsel %vm893, %v935, %v937
      %v939 = vrot.slane %v403, 7
      %v940 = vsel %vm893, %v937, %v939
      %v941 = vrot.slane %v404, 7
      %v942 = vsel %vm893, %v939, %v941
      %v943 = vrot.slane %v405, 7
      %v944 = vsel %vm893, %v941, %v943
      %v945 = vrot.slane %v406, 7
      %v946 = vsel %vm893, %v943, %v945
      %v947 = vrot.slane %v407, 7
      %v948 = vsel %vm893, %v945, %v947
      %v949 = vrot.slane %v408, 7
      %v950 = vsel %vm893, %v947, %v949
      %v951 = vrot.slane %v409, 7
      %v952 = vsel %vm893, %v949, %v951
      %v953 = vrot.slane %v410, 7
      %v954 = vsel %vm893, %v951, %v953
      %v955 = vrot.slane %v411, 7
      %v956 = vsel %vm893, %v953, %v955
      %v989 = vsel %vm893, 0.0, %v894
      %v990 = vsel %vm829, 1, 0
      %v991 = vsel %vm830, 1, 0
      %v992 = vsel %vm831, 1, 0
      %v993 = vsel %vm832, 1, 0
      %v994 = vsel %vm833, 1, 0
      %v995 = vsel %vm834, 1, 0
      %v996 = vsel %vm835, 1, 0
      %v997 = vsel %vm836, 1, 0
      %v998 = vsel %vm837, 1, 0
      %v999 = vsel %vm838, 1, 0
      %v1000 = vsel %vm839, 1, 0
      %v1001 = vsel %vm840, 1, 0
      %v1002 = vsel %vm841, 1, 0
      %v1003 = vsel %vm842, 1, 0
      %v1004 = vsel %vm843, 1, 0
      %v1005 = vsel %vm844, 1, 0
      %v1006 = vsel %vm845, 1, 0
      %v1007 = vsel %vm846, 1, 0
      %v1008 = vsel %vm847, 1, 0
      %v1009 = vsel %vm848, 1, 0
      %v1010 = vsel %vm849, 1, 0
      %v1011 = vsel %vm850, 1, 0
      %v1012 = vsel %vm851, 1, 0
      %v1013 = vsel %vm852, 1, 0
      %v1014 = vsel %vm853, 1, 0
      %v1015 = vsel %vm854, 1, 0
      %v1016 = vsel %vm855, 1, 0
      %v1017 = vsel %vm856, 1, 0
      %v1018 = vsel %vm857, 1, 0
      %v1019 = vsel %vm858, 1, 0
      %v1020 = vsel %vm859, 1, 0
      %v1021 = vsel %vm860, 1, 0
      %vm1022 = vcmp.eq.s32.totalorder %v990, 1
      %vm1023 = vcmp.eq.s32.totalorder %v991, 1
      %vm1024 = vcmp.eq.s32.totalorder %v992, 1
      %vm1025 = vcmp.eq.s32.totalorder %v993, 1
      %vm1026 = vcmp.eq.s32.totalorder %v994, 1
      %vm1027 = vcmp.eq.s32.totalorder %v995, 1
      %vm1028 = vcmp.eq.s32.totalorder %v996, 1
      %vm1029 = vcmp.eq.s32.totalorder %v997, 1
      %vm1030 = vcmp.eq.s32.totalorder %v998, 1
      %vm1031 = vcmp.eq.s32.totalorder %v999, 1
      %vm1032 = vcmp.eq.s32.totalorder %v1000, 1
      %vm1033 = vcmp.eq.s32.totalorder %v1001, 1
      %vm1034 = vcmp.eq.s32.totalorder %v1002, 1
      %vm1035 = vcmp.eq.s32.totalorder %v1003, 1
      %vm1036 = vcmp.eq.s32.totalorder %v1004, 1
      %vm1037 = vcmp.eq.s32.totalorder %v1005, 1
      %vm1038 = vcmp.eq.s32.totalorder %v1006, 1
      %vm1039 = vcmp.eq.s32.totalorder %v1007, 1
      %vm1040 = vcmp.eq.s32.totalorder %v1008, 1
      %vm1041 = vcmp.eq.s32.totalorder %v1009, 1
      %vm1042 = vcmp.eq.s32.totalorder %v1010, 1
      %vm1043 = vcmp.eq.s32.totalorder %v1011, 1
      %vm1044 = vcmp.eq.s32.totalorder %v1012, 1
      %vm1045 = vcmp.eq.s32.totalorder %v1013, 1
      %vm1046 = vcmp.eq.s32.totalorder %v1014, 1
      %vm1047 = vcmp.eq.s32.totalorder %v1015, 1
      %vm1048 = vcmp.eq.s32.totalorder %v1016, 1
      %vm1049 = vcmp.eq.s32.totalorder %v1017, 1
      %vm1050 = vcmp.eq.s32.totalorder %v1018, 1
      %vm1051 = vcmp.eq.s32.totalorder %v1019, 1
      %vm1052 = vcmp.eq.s32.totalorder %v1020, 1
      %vm1053 = vcmp.eq.s32.totalorder %v1021, 1
      %v1054 = vsel %vm1022, %v989, 0.0
      %v1055 = vsel %vm1023, %v896, 0.0
      %v1056 = vsel %vm1024, %v898, 0.0
      %v1057 = vsel %vm1025, %v900, 0.0
      %v1058 = vsel %vm1026, %v902, 0.0
      %v1059 = vsel %vm1027, %v904, 0.0
      %v1060 = vsel %vm1028, %v906, 0.0
      %v1061 = vsel %vm1029, %v908, 0.0
      %v1062 = vsel %vm1030, %v910, 0.0
      %v1063 = vsel %vm1031, %v912, 0.0
      %v1064 = vsel %vm1032, %v914, 0.0
      %v1065 = vsel %vm1033, %v916, 0.0
      %v1066 = vsel %vm1034, %v918, 0.0
      %v1067 = vsel %vm1035, %v920, 0.0
      %v1068 = vsel %vm1036, %v922, 0.0
      %v1069 = vsel %vm1037, %v924, 0.0
      %v1070 = vsel %vm1038, %v926, 0.0
      %v1071 = vsel %vm1039, %v928, 0.0
      %v1072 = vsel %vm1040, %v930, 0.0
      %v1073 = vsel %vm1041, %v932, 0.0
      %v1074 = vsel %vm1042, %v934, 0.0
      %v1075 = vsel %vm1043, %v936, 0.0
      %v1076 = vsel %vm1044, %v938, 0.0
      %v1077 = vsel %vm1045, %v940, 0.0
      %v1078 = vsel %vm1046, %v942, 0.0
      %v1079 = vsel %vm1047, %v944, 0.0
      %v1080 = vsel %vm1048, %v946, 0.0
      %v1081 = vsel %vm1049, %v948, 0.0
      %v1082 = vsel %vm1050, %v950, 0.0
      %v1083 = vsel %vm1051, %v952, 0.0
      %v1084 = vsel %vm1052, %v954, 0.0
      %v1085 = vsel %vm1053, %v956, 0.0
      %vm1086 = vcmp.lt.s32.totalorder %v797, 15
      %vm1087 = vcmp.lt.s32.totalorder %v798, 15
      %vm1088 = vcmp.lt.s32.totalorder %v799, 15
      %vm1089 = vcmp.lt.s32.totalorder %v800, 15
      %vm1090 = vcmp.lt.s32.totalorder %v801, 15
      %vm1091 = vcmp.lt.s32.totalorder %v802, 15
      %vm1092 = vcmp.lt.s32.totalorder %v803, 15
      %vm1093 = vcmp.lt.s32.totalorder %v804, 15
      %vm1094 = vcmp.lt.s32.totalorder %v805, 15
      %vm1095 = vcmp.lt.s32.totalorder %v806, 15
      %vm1096 = vcmp.lt.s32.totalorder %v807, 15
      %vm1097 = vcmp.lt.s32.totalorder %v808, 15
      %vm1098 = vcmp.lt.s32.totalorder %v809, 15
      %vm1099 = vcmp.lt.s32.totalorder %v810, 15
      %vm1100 = vcmp.lt.s32.totalorder %v811, 15
      %vm1101 = vcmp.lt.s32.totalorder %v812, 15
      %vm1102 = vcmp.lt.s32.totalorder %v813, 15
      %vm1103 = vcmp.lt.s32.totalorder %v814, 15
      %vm1104 = vcmp.lt.s32.totalorder %v815, 15
      %vm1105 = vcmp.lt.s32.totalorder %v816, 15
      %vm1106 = vcmp.lt.s32.totalorder %v817, 15
      %vm1107 = vcmp.lt.s32.totalorder %v818, 15
      %vm1108 = vcmp.lt.s32.totalorder %v819, 15
      %vm1109 = vcmp.lt.s32.totalorder %v820, 15
      %vm1110 = vcmp.lt.s32.totalorder %v821, 15
      %vm1111 = vcmp.lt.s32.totalorder %v822, 15
      %vm1112 = vcmp.lt.s32.totalorder %v823, 15
      %vm1113 = vcmp.lt.s32.totalorder %v824, 15
      %vm1114 = vcmp.lt.s32.totalorder %v825, 15
      %vm1115 = vcmp.lt.s32.totalorder %v826, 15
      %vm1116 = vcmp.lt.s32.totalorder %v827, 15
      %vm1117 = vcmp.lt.s32.totalorder %v828, 15
      %vm1118 = vcmask 1046528
      %v1119 = vrot.slane %v380, 1
      %v1120 = vrot.slane %v381, 1
      %v1121 = vsel %vm1118, %v1119, %v1120
      %v1122 = vrot.slane %v382, 1
      %v1123 = vsel %vm1118, %v1120, %v1122
      %v1124 = vrot.slane %v383, 1
      %v1125 = vsel %vm1118, %v1122, %v1124
      %v1126 = vrot.slane %v384, 1
      %v1127 = vsel %vm1118, %v1124, %v1126
      %v1128 = vrot.slane %v385, 1
      %v1129 = vsel %vm1118, %v1126, %v1128
      %v1130 = vrot.slane %v386, 1
      %v1131 = vsel %vm1118, %v1128, %v1130
      %v1132 = vrot.slane %v387, 1
      %v1133 = vsel %vm1118, %v1130, %v1132
      %v1134 = vrot.slane %v388, 1
      %v1135 = vsel %vm1118, %v1132, %v1134
      %v1136 = vrot.slane %v389, 1
      %v1137 = vsel %vm1118, %v1134, %v1136
      %v1138 = vrot.slane %v390, 1
      %v1139 = vsel %vm1118, %v1136, %v1138
      %v1140 = vrot.slane %v391, 1
      %v1141 = vsel %vm1118, %v1138, %v1140
      %v1142 = vrot.slane %v392, 1
      %v1143 = vsel %vm1118, %v1140, %v1142
      %v1144 = vrot.slane %v393, 1
      %v1145 = vsel %vm1118, %v1142, %v1144
      %v1146 = vrot.slane %v394, 1
      %v1147 = vsel %vm1118, %v1144, %v1146
      %v1148 = vrot.slane %v395, 1
      %v1149 = vsel %vm1118, %v1146, %v1148
      %v1150 = vrot.slane %v396, 1
      %v1151 = vsel %vm1118, %v1148, %v1150
      %v1152 = vrot.slane %v397, 1
      %v1153 = vsel %vm1118, %v1150, %v1152
      %v1154 = vrot.slane %v398, 1
      %v1155 = vsel %vm1118, %v1152, %v1154
      %v1156 = vrot.slane %v399, 1
      %v1157 = vsel %vm1118, %v1154, %v1156
      %v1158 = vrot.slane %v400, 1
      %v1159 = vsel %vm1118, %v1156, %v1158
      %v1160 = vrot.slane %v401, 1
      %v1161 = vsel %vm1118, %v1158, %v1160
      %v1162 = vrot.slane %v402, 1
      %v1163 = vsel %vm1118, %v1160, %v1162
      %v1164 = vrot.slane %v403, 1
      %v1165 = vsel %vm1118, %v1162, %v1164
      %v1166 = vrot.slane %v404, 1
      %v1167 = vsel %vm1118, %v1164, %v1166
      %v1168 = vrot.slane %v405, 1
      %v1169 = vsel %vm1118, %v1166, %v1168
      %v1170 = vrot.slane %v406, 1
      %v1171 = vsel %vm1118, %v1168, %v1170
      %v1172 = vrot.slane %v407, 1
      %v1173 = vsel %vm1118, %v1170, %v1172
      %v1174 = vrot.slane %v408, 1
      %v1175 = vsel %vm1118, %v1172, %v1174
      %v1176 = vrot.slane %v409, 1
      %v1177 = vsel %vm1118, %v1174, %v1176
      %v1178 = vrot.slane %v410, 1
      %v1179 = vsel %vm1118, %v1176, %v1178
      %v1180 = vrot.slane %v411, 1
      %v1181 = vsel %vm1118, %v1178, %v1180
      %v1214 = vsel %vm1118, %v1180, 0.0
      %v1215 = vsel %vm1086, 1, 0
      %v1216 = vsel %vm1087, 1, 0
      %v1217 = vsel %vm1088, 1, 0
      %v1218 = vsel %vm1089, 1, 0
      %v1219 = vsel %vm1090, 1, 0
      %v1220 = vsel %vm1091, 1, 0
      %v1221 = vsel %vm1092, 1, 0
      %v1222 = vsel %vm1093, 1, 0
      %v1223 = vsel %vm1094, 1, 0
      %v1224 = vsel %vm1095, 1, 0
      %v1225 = vsel %vm1096, 1, 0
      %v1226 = vsel %vm1097, 1, 0
      %v1227 = vsel %vm1098, 1, 0
      %v1228 = vsel %vm1099, 1, 0
      %v1229 = vsel %vm1100, 1, 0
      %v1230 = vsel %vm1101, 1, 0
      %v1231 = vsel %vm1102, 1, 0
      %v1232 = vsel %vm1103, 1, 0
      %v1233 = vsel %vm1104, 1, 0
      %v1234 = vsel %vm1105, 1, 0
      %v1235 = vsel %vm1106, 1, 0
      %v1236 = vsel %vm1107, 1, 0
      %v1237 = vsel %vm1108, 1, 0
      %v1238 = vsel %vm1109, 1, 0
      %v1239 = vsel %vm1110, 1, 0
      %v1240 = vsel %vm1111, 1, 0
      %v1241 = vsel %vm1112, 1, 0
      %v1242 = vsel %vm1113, 1, 0
      %v1243 = vsel %vm1114, 1, 0
      %v1244 = vsel %vm1115, 1, 0
      %v1245 = vsel %vm1116, 1, 0
      %v1246 = vsel %vm1117, 1, 0
      %vm1247 = vcmp.eq.s32.totalorder %v1215, 1
      %vm1248 = vcmp.eq.s32.totalorder %v1216, 1
      %vm1249 = vcmp.eq.s32.totalorder %v1217, 1
      %vm1250 = vcmp.eq.s32.totalorder %v1218, 1
      %vm1251 = vcmp.eq.s32.totalorder %v1219, 1
      %vm1252 = vcmp.eq.s32.totalorder %v1220, 1
      %vm1253 = vcmp.eq.s32.totalorder %v1221, 1
      %vm1254 = vcmp.eq.s32.totalorder %v1222, 1
      %vm1255 = vcmp.eq.s32.totalorder %v1223, 1
      %vm1256 = vcmp.eq.s32.totalorder %v1224, 1
      %vm1257 = vcmp.eq.s32.totalorder %v1225, 1
      %vm1258 = vcmp.eq.s32.totalorder %v1226, 1
      %vm1259 = vcmp.eq.s32.totalorder %v1227, 1
      %vm1260 = vcmp.eq.s32.totalorder %v1228, 1
      %vm1261 = vcmp.eq.s32.totalorder %v1229, 1
      %vm1262 = vcmp.eq.s32.totalorder %v1230, 1
      %vm1263 = vcmp.eq.s32.totalorder %v1231, 1
      %vm1264 = vcmp.eq.s32.totalorder %v1232, 1
      %vm1265 = vcmp.eq.s32.totalorder %v1233, 1
      %vm1266 = vcmp.eq.s32.totalorder %v1234, 1
      %vm1267 = vcmp.eq.s32.totalorder %v1235, 1
      %vm1268 = vcmp.eq.s32.totalorder %v1236, 1
      %vm1269 = vcmp.eq.s32.totalorder %v1237, 1
      %vm1270 = vcmp.eq.s32.totalorder %v1238, 1
      %vm1271 = vcmp.eq.s32.totalorder %v1239, 1
      %vm1272 = vcmp.eq.s32.totalorder %v1240, 1
      %vm1273 = vcmp.eq.s32.totalorder %v1241, 1
      %vm1274 = vcmp.eq.s32.totalorder %v1242, 1
      %vm1275 = vcmp.eq.s32.totalorder %v1243, 1
      %vm1276 = vcmp.eq.s32.totalorder %v1244, 1
      %vm1277 = vcmp.eq.s32.totalorder %v1245, 1
      %vm1278 = vcmp.eq.s32.totalorder %v1246, 1
      %v1279 = vsel %vm1247, %v1121, 0.0
      %v1280 = vsel %vm1248, %v1123, 0.0
      %v1281 = vsel %vm1249, %v1125, 0.0
      %v1282 = vsel %vm1250, %v1127, 0.0
      %v1283 = vsel %vm1251, %v1129, 0.0
      %v1284 = vsel %vm1252, %v1131, 0.0
      %v1285 = vsel %vm1253, %v1133, 0.0
      %v1286 = vsel %vm1254, %v1135, 0.0
      %v1287 = vsel %vm1255, %v1137, 0.0
      %v1288 = vsel %vm1256, %v1139, 0.0
      %v1289 = vsel %vm1257, %v1141, 0.0
      %v1290 = vsel %vm1258, %v1143, 0.0
      %v1291 = vsel %vm1259, %v1145, 0.0
      %v1292 = vsel %vm1260, %v1147, 0.0
      %v1293 = vsel %vm1261, %v1149, 0.0
      %v1294 = vsel %vm1262, %v1151, 0.0
      %v1295 = vsel %vm1263, %v1153, 0.0
      %v1296 = vsel %vm1264, %v1155, 0.0
      %v1297 = vsel %vm1265, %v1157, 0.0
      %v1298 = vsel %vm1266, %v1159, 0.0
      %v1299 = vsel %vm1267, %v1161, 0.0
      %v1300 = vsel %vm1268, %v1163, 0.0
      %v1301 = vsel %vm1269, %v1165, 0.0
      %v1302 = vsel %vm1270, %v1167, 0.0
      %v1303 = vsel %vm1271, %v1169, 0.0
      %v1304 = vsel %vm1272, %v1171, 0.0
      %v1305 = vsel %vm1273, %v1173, 0.0
      %v1306 = vsel %vm1274, %v1175, 0.0
      %v1307 = vsel %vm1275, %v1177, 0.0
      %v1308 = vsel %vm1276, %v1179, 0.0
      %v1309 = vsel %vm1277, %v1181, 0.0
      %v1310 = vsel %vm1278, %v1214, 0.0
      %v1311 = vpack.c.bf16 %v1055, %v1054
      %v1312 = vpack.c.bf16 %v1057, %v1056
      %v1313 = vpack.c.bf16 %v1059, %v1058
      %v1314 = vpack.c.bf16 %v1061, %v1060
      %v1315 = vpack.c.bf16 %v1063, %v1062
      %v1316 = vpack.c.bf16 %v1065, %v1064
      %v1317 = vpack.c.bf16 %v1067, %v1066
      %v1318 = vpack.c.bf16 %v1069, %v1068
      %v1319 = vpack.c.bf16 %v1071, %v1070
      %v1320 = vpack.c.bf16 %v1073, %v1072
      %v1321 = vpack.c.bf16 %v1075, %v1074
      %v1322 = vpack.c.bf16 %v1077, %v1076
      %v1323 = vpack.c.bf16 %v1079, %v1078
      %v1324 = vpack.c.bf16 %v1081, %v1080
      %v1325 = vpack.c.bf16 %v1083, %v1082
      %v1326 = vpack.c.bf16 %v1085, %v1084
      %v1327 = vpack.c.bf16 %v381, %v380
      %v1328 = vpack.c.bf16 %v383, %v382
      %v1329 = vpack.c.bf16 %v385, %v384
      %v1330 = vpack.c.bf16 %v387, %v386
      %v1331 = vpack.c.bf16 %v389, %v388
      %v1332 = vpack.c.bf16 %v391, %v390
      %v1333 = vpack.c.bf16 %v393, %v392
      %v1334 = vpack.c.bf16 %v395, %v394
      %v1335 = vpack.c.bf16 %v397, %v396
      %v1336 = vpack.c.bf16 %v399, %v398
      %v1337 = vpack.c.bf16 %v401, %v400
      %v1338 = vpack.c.bf16 %v403, %v402
      %v1339 = vpack.c.bf16 %v405, %v404
      %v1340 = vpack.c.bf16 %v407, %v406
      %v1341 = vpack.c.bf16 %v409, %v408
      %v1342 = vpack.c.bf16 %v411, %v410
      %v1343 = vpack.c.bf16 %v1280, %v1279
      %v1344 = vpack.c.bf16 %v1282, %v1281
      %v1345 = vpack.c.bf16 %v1284, %v1283
      %v1346 = vpack.c.bf16 %v1286, %v1285
      %v1347 = vpack.c.bf16 %v1288, %v1287
      %v1348 = vpack.c.bf16 %v1290, %v1289
      %v1349 = vpack.c.bf16 %v1292, %v1291
      %v1350 = vpack.c.bf16 %v1294, %v1293
      %v1351 = vpack.c.bf16 %v1296, %v1295
      %v1352 = vpack.c.bf16 %v1298, %v1297
      %v1353 = vpack.c.bf16 %v1300, %v1299
      %v1354 = vpack.c.bf16 %v1302, %v1301
      %v1355 = vpack.c.bf16 %v1304, %v1303
      %v1356 = vpack.c.bf16 %v1306, %v1305
      %v1357 = vpack.c.bf16 %v1308, %v1307
      %v1358 = vpack.c.bf16 %v1310, %v1309
      %1375 = vrot.lane.b32.xlu0 %v1327, 64
      %v1376 = vpop.permute.xlu0 %1375
      %1377 = vrot.lane.b32.xlu0 %v1328, 64
      %v1378 = vpop.permute.xlu0 %1377
      %1379 = vrot.lane.b32.xlu0 %v1329, 64
      %v1380 = vpop.permute.xlu0 %1379
      %1381 = vrot.lane.b32.xlu0 %v1330, 64
      %v1382 = vpop.permute.xlu0 %1381
      %1383 = vrot.lane.b32.xlu0 %v1331, 64
      %v1384 = vpop.permute.xlu0 %1383
      %1385 = vrot.lane.b32.xlu0 %v1332, 64
      %v1386 = vpop.permute.xlu0 %1385
      %1387 = vrot.lane.b32.xlu0 %v1333, 64
      %v1388 = vpop.permute.xlu0 %1387
      %1389 = vrot.lane.b32.xlu0 %v1334, 64
      %v1390 = vpop.permute.xlu0 %1389
      %1391 = vrot.lane.b32.xlu0 %v1335, 64
      %v1392 = vpop.permute.xlu0 %1391
      %1393 = vrot.lane.b32.xlu0 %v1336, 64
      %v1394 = vpop.permute.xlu0 %1393
      %1395 = vrot.lane.b32.xlu0 %v1337, 64
      %v1396 = vpop.permute.xlu0 %1395
      %1397 = vrot.lane.b32.xlu0 %v1338, 64
      %v1398 = vpop.permute.xlu0 %1397
      %1399 = vrot.lane.b32.xlu0 %v1339, 64
      %v1400 = vpop.permute.xlu0 %1399
      %1401 = vrot.lane.b32.xlu0 %v1340, 64
      %v1402 = vpop.permute.xlu0 %1401
      %1403 = vrot.lane.b32.xlu0 %v1341, 64
      %v1404 = vpop.permute.xlu0 %1403
      %1405 = vrot.lane.b32.xlu0 %v1342, 64
      %v1406 = vpop.permute.xlu0 %1405
      %vm1407 = vcmask 523264
      %v1410 = vsel %vm1407, %v1311, %v1376
      %v1414 = vsel %vm1407, %v1312, %v1378
      %v1418 = vsel %vm1407, %v1313, %v1380
      %v1422 = vsel %vm1407, %v1314, %v1382
      %v1426 = vsel %vm1407, %v1315, %v1384
      %v1430 = vsel %vm1407, %v1316, %v1386
      %v1434 = vsel %vm1407, %v1317, %v1388
      %v1438 = vsel %vm1407, %v1318, %v1390
      %v1442 = vsel %vm1407, %v1319, %v1392
      %v1446 = vsel %vm1407, %v1320, %v1394
      %v1450 = vsel %vm1407, %v1321, %v1396
      %v1454 = vsel %vm1407, %v1322, %v1398
      %v1458 = vsel %vm1407, %v1323, %v1400
      %v1462 = vsel %vm1407, %v1324, %v1402
      %v1466 = vsel %vm1407, %v1325, %v1404
      %v1470 = vsel %vm1407, %v1326, %v1406
      %1504 = vrot.lane.b32.xlu0 %v1410, 64
      %v1505 = vpop.permute.xlu0 %1504
      %1506 = vrot.lane.b32.xlu0 %v1343, 64
      %v1507 = vpop.permute.xlu0 %1506
      %1508 = vrot.lane.b32.xlu0 %v1414, 64
      %v1509 = vpop.permute.xlu0 %1508
      %1510 = vrot.lane.b32.xlu0 %v1344, 64
      %v1511 = vpop.permute.xlu0 %1510
      %1512 = vrot.lane.b32.xlu0 %v1418, 64
      %v1513 = vpop.permute.xlu0 %1512
      %1514 = vrot.lane.b32.xlu0 %v1345, 64
      %v1515 = vpop.permute.xlu0 %1514
      %1516 = vrot.lane.b32.xlu0 %v1422, 64
      %v1517 = vpop.permute.xlu0 %1516
      %1518 = vrot.lane.b32.xlu0 %v1346, 64
      %v1519 = vpop.permute.xlu0 %1518
      %1520 = vrot.lane.b32.xlu0 %v1426, 64
      %v1521 = vpop.permute.xlu0 %1520
      %1522 = vrot.lane.b32.xlu0 %v1347, 64
      %v1523 = vpop.permute.xlu0 %1522
      %1524 = vrot.lane.b32.xlu0 %v1430, 64
      %v1525 = vpop.permute.xlu0 %1524
      %1526 = vrot.lane.b32.xlu0 %v1348, 64
      %v1527 = vpop.permute.xlu0 %1526
      %1528 = vrot.lane.b32.xlu0 %v1434, 64
      %v1529 = vpop.permute.xlu0 %1528
      %1530 = vrot.lane.b32.xlu0 %v1349, 64
      %v1531 = vpop.permute.xlu0 %1530
      %1532 = vrot.lane.b32.xlu0 %v1438, 64
      %v1533 = vpop.permute.xlu0 %1532
      %1534 = vrot.lane.b32.xlu0 %v1350, 64
      %v1535 = vpop.permute.xlu0 %1534
      %1536 = vrot.lane.b32.xlu0 %v1442, 64
      %v1537 = vpop.permute.xlu0 %1536
      %1538 = vrot.lane.b32.xlu0 %v1351, 64
      %v1539 = vpop.permute.xlu0 %1538
      %1540 = vrot.lane.b32.xlu0 %v1446, 64
      %v1541 = vpop.permute.xlu0 %1540
      %1542 = vrot.lane.b32.xlu0 %v1352, 64
      %v1543 = vpop.permute.xlu0 %1542
      %1544 = vrot.lane.b32.xlu0 %v1450, 64
      %v1545 = vpop.permute.xlu0 %1544
      %1546 = vrot.lane.b32.xlu0 %v1353, 64
      %v1547 = vpop.permute.xlu0 %1546
      %1548 = vrot.lane.b32.xlu0 %v1454, 64
      %v1549 = vpop.permute.xlu0 %1548
      %1550 = vrot.lane.b32.xlu0 %v1354, 64
      %v1551 = vpop.permute.xlu0 %1550
      %1552 = vrot.lane.b32.xlu0 %v1458, 64
      %v1553 = vpop.permute.xlu0 %1552
      %1554 = vrot.lane.b32.xlu0 %v1355, 64
      %v1555 = vpop.permute.xlu0 %1554
      %1556 = vrot.lane.b32.xlu0 %v1462, 64
      %v1557 = vpop.permute.xlu0 %1556
      %1558 = vrot.lane.b32.xlu0 %v1356, 64
      %v1559 = vpop.permute.xlu0 %1558
      %1560 = vrot.lane.b32.xlu0 %v1466, 64
      %v1561 = vpop.permute.xlu0 %1560
      %1562 = vrot.lane.b32.xlu0 %v1357, 64
      %v1563 = vpop.permute.xlu0 %1562
      %1564 = vrot.lane.b32.xlu0 %v1470, 64
      %v1565 = vpop.permute.xlu0 %1564
      %1566 = vrot.lane.b32.xlu0 %v1358, 64
      %v1567 = vpop.permute.xlu0 %1566
      %vm1568 = vcmask 523264
      %v1569 = vsel %vm1568, %v1505, %v1507
      %v1570 = vsel %vm1568, %v1509, %v1511
      %v1571 = vsel %vm1568, %v1513, %v1515
      %v1572 = vsel %vm1568, %v1517, %v1519
      %v1573 = vsel %vm1568, %v1521, %v1523
      %v1574 = vsel %vm1568, %v1525, %v1527
      %v1575 = vsel %vm1568, %v1529, %v1531
      %v1576 = vsel %vm1568, %v1533, %v1535
      %v1577 = vsel %vm1568, %v1537, %v1539
      %v1578 = vsel %vm1568, %v1541, %v1543
      %v1579 = vsel %vm1568, %v1545, %v1547
      %v1580 = vsel %vm1568, %v1549, %v1551
      %v1581 = vsel %vm1568, %v1553, %v1555
      %v1582 = vsel %vm1568, %v1557, %v1559
      %v1583 = vsel %vm1568, %v1561, %v1563
      %v1584 = vsel %vm1568, %v1565, %v1567
      %v1603 = vsel %vm1407, 0, %v1505
      %v1607 = vsel %vm1407, %v1343, %v1509
      %v1611 = vsel %vm1407, %v1344, %v1513
      %v1615 = vsel %vm1407, %v1345, %v1517
      %v1619 = vsel %vm1407, %v1346, %v1521
      %v1623 = vsel %vm1407, %v1347, %v1525
      %v1627 = vsel %vm1407, %v1348, %v1529
      %v1631 = vsel %vm1407, %v1349, %v1533
      %v1635 = vsel %vm1407, %v1350, %v1537
      %v1639 = vsel %vm1407, %v1351, %v1541
      %v1643 = vsel %vm1407, %v1352, %v1545
      %v1647 = vsel %vm1407, %v1353, %v1549
      %v1651 = vsel %vm1407, %v1354, %v1553
      %v1655 = vsel %vm1407, %v1355, %v1557
      %v1659 = vsel %vm1407, %v1356, %v1561
      %v1663 = vsel %vm1407, %v1357, %v1565
      %v1665 = vld [vmem:[%s3] sm:$0xf]
      %v1666 = vld [vmem:[%s3 + $0x4] sm:$0xf]
      %v1667 = vld [vmem:[%s3 + $0x8] sm:$0xf]
      %v1668 = vld [vmem:[%s3 + $0xc] sm:$0xf]
      %v1669 = vld [vmem:[%s3 + $0x10] sm:$0xf]
      %v1670 = vld [vmem:[%s3 + $0x14] sm:$0xf]
      %v1671 = vld [vmem:[%s3 + $0x18] sm:$0xf]
      %v1672 = vld [vmem:[%s3 + $0x1c] sm:$0xf]
      %v1673 = vld [vmem:[%s3 + $0x20] sm:$0xf]
      %v1674 = vld [vmem:[%s3 + $0x24] sm:$0xf]
      %v1675 = vld [vmem:[%s3 + $0x28] sm:$0xf]
      %v1676 = vld [vmem:[%s3 + $0x2c] sm:$0xf]
      %v1677 = vld [vmem:[%s3 + $0x30] sm:$0xf]
      %v1678 = vld [vmem:[%s3 + $0x34] sm:$0xf]
      %v1679 = vld [vmem:[%s3 + $0x38] sm:$0xf]
      %v1680 = vld [vmem:[%s3 + $0x3c] sm:$0xf]
      %v1681 = vld [vmem:[%s3 + $0x40] sm:$0xf]
      %v1682 = vld [vmem:[%s3 + $0x44] sm:$0xf]
      %v1683 = vld [vmem:[%s3 + $0x48] sm:$0xf]
      %v1684 = vld [vmem:[%s3 + $0x4c] sm:$0xf]
      %v1685 = vld [vmem:[%s3 + $0x50] sm:$0xf]
      %v1686 = vld [vmem:[%s3 + $0x54] sm:$0xf]
      %v1687 = vld [vmem:[%s3 + $0x58] sm:$0xf]
      %v1688 = vld [vmem:[%s3 + $0x5c] sm:$0xf]
      %v1689 = vld [vmem:[%s3 + $0x60] sm:$0xf]
      %v1690 = vld [vmem:[%s3 + $0x64] sm:$0xf]
      %v1691 = vld [vmem:[%s3 + $0x68] sm:$0xf]
      %v1692 = vld [vmem:[%s3 + $0x6c] sm:$0xf]
      %v1693 = vld [vmem:[%s3 + $0x70] sm:$0xf]
      %v1694 = vld [vmem:[%s3 + $0x74] sm:$0xf]
      %v1695 = vld [vmem:[%s3 + $0x78] sm:$0xf]
      %v1696 = vld [vmem:[%s3 + $0x7c] sm:$0xf]
      %v1697 = vld [vmem:[%s3 + $0x80] sm:$0xf]
      %v1698 = vld [vmem:[%s3 + $0x84] sm:$0xf]
      %v1699 = vld [vmem:[%s3 + $0x88] sm:$0xf]
      %v1700 = vld [vmem:[%s3 + $0x8c] sm:$0xf]
      %v1701 = vld [vmem:[%s3 + $0x90] sm:$0xf]
      %v1702 = vld [vmem:[%s3 + $0x94] sm:$0xf]
      %v1703 = vld [vmem:[%s3 + $0x98] sm:$0xf]
      %v1704 = vld [vmem:[%s3 + $0x9c] sm:$0xf]
      %v1705 = vld [vmem:[%s3 + $0xa0] sm:$0xf]
      %v1706 = vld [vmem:[%s3 + $0xa4] sm:$0xf]
      %v1707 = vld [vmem:[%s3 + $0xa8] sm:$0xf]
      %v1708 = vld [vmem:[%s3 + $0xac] sm:$0xf]
      %v1709 = vld [vmem:[%s3 + $0xb0] sm:$0xf]
      %v1710 = vld [vmem:[%s3 + $0xb4] sm:$0xf]
      %v1711 = vld [vmem:[%s3 + $0xb8] sm:$0xf]
      %v1712 = vld [vmem:[%s3 + $0xbc] sm:$0xf]
      %v1713 = vld [vmem:[%s3 + $0xc0] sm:$0xf]
      %v1714 = vld [vmem:[%s3 + $0xc4] sm:$0xf]
      %v1715 = vld [vmem:[%s3 + $0xc8] sm:$0xf]
      %v1716 = vld [vmem:[%s3 + $0xcc] sm:$0xf]
      %v1717 = vld [vmem:[%s3 + $0xd0] sm:$0xf]
      %v1718 = vld [vmem:[%s3 + $0xd4] sm:$0xf]
      %v1719 = vld [vmem:[%s3 + $0xd8] sm:$0xf]
      %v1720 = vld [vmem:[%s3 + $0xdc] sm:$0xf]
      %v1721 = vld [vmem:[%s3 + $0xe0] sm:$0xf]
      %v1722 = vld [vmem:[%s3 + $0xe4] sm:$0xf]
      %v1723 = vld [vmem:[%s3 + $0xe8] sm:$0xf]
      %v1724 = vld [vmem:[%s3 + $0xec] sm:$0xf]
      %v1725 = vld [vmem:[%s3 + $0xf0] sm:$0xf]
      %v1726 = vld [vmem:[%s3 + $0xf4] sm:$0xf]
      %v1727 = vld [vmem:[%s3 + $0xf8] sm:$0xf]
      %v1728 = vld [vmem:[%s3 + $0xfc] sm:$0xf]
      %v1729 = vld [vmem:[%s3 + $0x100] sm:$0xf]
      %v1730 = vld [vmem:[%s3 + $0x104] sm:$0xf]
      %v1731 = vld [vmem:[%s3 + $0x108] sm:$0xf]
      %v1732 = vld [vmem:[%s3 + $0x10c] sm:$0xf]
      %v1733 = vld [vmem:[%s3 + $0x110] sm:$0xf]
      %v1734 = vld [vmem:[%s3 + $0x114] sm:$0xf]
      %v1735 = vld [vmem:[%s3 + $0x118] sm:$0xf]
      %v1736 = vld [vmem:[%s3 + $0x11c] sm:$0xf]
      %v1809 = vunpack.c.l.b16 %v1665
      %v1810 = vunpack.c.l.b16 %v1666
      %v1811 = vunpack.c.l.b16 %v1667
      %v1812 = vunpack.c.l.b16 %v1668
      %v1813 = vunpack.c.l.b16 %v1669
      %v1814 = vunpack.c.l.b16 %v1670
      %v1815 = vunpack.c.l.b16 %v1671
      %v1816 = vunpack.c.l.b16 %v1672
      %v1817 = vunpack.c.l.b16 %v1673
      %v1818 = vunpack.c.l.b16 %v1674
      %v1819 = vunpack.c.l.b16 %v1675
      %v1820 = vunpack.c.l.b16 %v1676
      %v1821 = vunpack.c.l.b16 %v1677
      %v1822 = vunpack.c.l.b16 %v1678
      %v1823 = vunpack.c.l.b16 %v1679
      %v1824 = vunpack.c.l.b16 %v1680
      %v1825 = vunpack.c.l.b16 %v1681
      %v1826 = vunpack.c.l.b16 %v1682
      %v1827 = vunpack.c.l.b16 %v1683
      %v1828 = vunpack.c.l.b16 %v1684
      %v1829 = vunpack.c.l.b16 %v1685
      %v1830 = vunpack.c.l.b16 %v1686
      %v1831 = vunpack.c.l.b16 %v1687
      %v1832 = vunpack.c.l.b16 %v1688
      %v1833 = vunpack.c.l.b16 %v1689
      %v1834 = vunpack.c.l.b16 %v1690
      %v1835 = vunpack.c.l.b16 %v1691
      %v1836 = vunpack.c.l.b16 %v1692
      %v1837 = vunpack.c.l.b16 %v1693
      %v1838 = vunpack.c.l.b16 %v1694
      %v1839 = vunpack.c.l.b16 %v1695
      %v1840 = vunpack.c.l.b16 %v1696
      %v1841 = vunpack.c.l.b16 %v1697
      %v1842 = vunpack.c.l.b16 %v1698
      %v1843 = vunpack.c.l.b16 %v1699
      %v1844 = vunpack.c.l.b16 %v1700
      %v1845 = vunpack.c.l.b16 %v1701
      %v1846 = vunpack.c.l.b16 %v1702
      %v1847 = vunpack.c.l.b16 %v1703
      %v1848 = vunpack.c.l.b16 %v1704
      %v1849 = vunpack.c.l.b16 %v1705
      %v1850 = vunpack.c.l.b16 %v1706
      %v1851 = vunpack.c.l.b16 %v1707
      %v1852 = vunpack.c.l.b16 %v1708
      %v1853 = vunpack.c.l.b16 %v1709
      %v1854 = vunpack.c.l.b16 %v1710
      %v1855 = vunpack.c.l.b16 %v1711
      %v1856 = vunpack.c.l.b16 %v1712
      %v1857 = vunpack.c.l.b16 %v1713
      %v1858 = vunpack.c.l.b16 %v1714
      %v1859 = vunpack.c.l.b16 %v1715
      %v1860 = vunpack.c.l.b16 %v1716
      %v1861 = vunpack.c.l.b16 %v1717
      %v1862 = vunpack.c.l.b16 %v1718
      %v1863 = vunpack.c.l.b16 %v1719
      %v1864 = vunpack.c.l.b16 %v1720
      %v1865 = vunpack.c.l.b16 %v1721
      %v1866 = vunpack.c.l.b16 %v1722
      %v1867 = vunpack.c.l.b16 %v1723
      %v1868 = vunpack.c.l.b16 %v1724
      %v1869 = vunpack.c.l.b16 %v1725
      %v1870 = vunpack.c.l.b16 %v1726
      %v1871 = vunpack.c.l.b16 %v1727
      %v1872 = vunpack.c.l.b16 %v1728
      %v1873 = vunpack.c.l.b16 %v1729
      %v1874 = vunpack.c.l.b16 %v1730
      %v1875 = vunpack.c.l.b16 %v1731
      %v1876 = vunpack.c.l.b16 %v1732
      %v1877 = vunpack.c.l.b16 %v1733
      %v1878 = vunpack.c.l.b16 %v1734
      %v1879 = vunpack.c.l.b16 %v1735
      %v1880 = vunpack.c.l.b16 %v1736
      %v1881 = vpack.c.b16 %v1810, %v1809
      %v1882 = vpack.c.b16 %v1812, %v1811
      %v1883 = vpack.c.b16 %v1814, %v1813
      %v1884 = vpack.c.b16 %v1816, %v1815
      %v1885 = vpack.c.b16 %v1818, %v1817
      %v1886 = vpack.c.b16 %v1820, %v1819
      %v1887 = vpack.c.b16 %v1822, %v1821
      %v1888 = vpack.c.b16 %v1824, %v1823
      %v1889 = vpack.c.b16 %v1826, %v1825
      %v1890 = vpack.c.b16 %v1828, %v1827
      %v1891 = vpack.c.b16 %v1830, %v1829
      %v1892 = vpack.c.b16 %v1832, %v1831
      %v1893 = vpack.c.b16 %v1834, %v1833
      %v1894 = vpack.c.b16 %v1836, %v1835
      %v1895 = vpack.c.b16 %v1838, %v1837
      %v1896 = vpack.c.b16 %v1840, %v1839
      %v1897 = vpack.c.b16 %v1842, %v1841
      %v1898 = vpack.c.b16 %v1844, %v1843
      %v1899 = vpack.c.b16 %v1846, %v1845
      %v1900 = vpack.c.b16 %v1848, %v1847
      %v1901 = vpack.c.b16 %v1850, %v1849
      %v1902 = vpack.c.b16 %v1852, %v1851
      %v1903 = vpack.c.b16 %v1854, %v1853
      %v1904 = vpack.c.b16 %v1856, %v1855
      %v1905 = vpack.c.b16 %v1858, %v1857
      %v1906 = vpack.c.b16 %v1860, %v1859
      %v1907 = vpack.c.b16 %v1862, %v1861
      %v1908 = vpack.c.b16 %v1864, %v1863
      %v1909 = vpack.c.b16 %v1866, %v1865
      %v1910 = vpack.c.b16 %v1868, %v1867
      %v1911 = vpack.c.b16 %v1870, %v1869
      %v1912 = vpack.c.b16 %v1872, %v1871
      %v1913 = vpack.c.b16 %v1874, %v1873
      %v1914 = vpack.c.b16 %v1876, %v1875
      %v1915 = vpack.c.b16 %v1878, %v1877
      %v1916 = vpack.c.b16 %v1880, %v1879
      %v1953 = vsel %vm1407, %v1344, 0
      %v1955 = vsel %vm1407, %v1345, 0
      %v1957 = vsel %vm1407, %v1346, 0
      %v1959 = vsel %vm1407, %v1347, 0
      %v1961 = vsel %vm1407, %v1348, 0
      %v1963 = vsel %vm1407, %v1349, 0
      %v1965 = vsel %vm1407, %v1350, 0
      %v1967 = vsel %vm1407, %v1351, 0
      %v1969 = vsel %vm1407, %v1352, 0
      %v1971 = vsel %vm1407, %v1353, 0
      %v1973 = vsel %vm1407, %v1354, 0
      %v1975 = vsel %vm1407, %v1355, 0
      %v1977 = vsel %vm1407, %v1356, 0
      %v1979 = vsel %vm1407, %v1357, 0
      %v1982 = vsel %vm1407, %v1358, 0
      %v1984 = vsel %vm1407, 0, 0
      %1986 = vmatprep.subr.bf16.mxu0 0
      %1987 = vmatpush1.bf16.msra.mxu0 %v1881
      %1988 = vmatprep.subr.bf16.mxu0 0
      %1989 = vmatpush1.bf16.msra.mxu0 %v1882
      %1990 = vmatprep.subr.bf16.mxu0 0
      %1991 = vmatpush1.bf16.msra.mxu0 %v1883
      %1992 = vmatprep.subr.bf16.mxu0 0
      %1993 = vmatpush1.bf16.msra.mxu0 %v1884
      %1994 = vmatprep.subr.bf16.mxu0 0
      %1995 = vmatpush1.bf16.msra.mxu0 %v1885
      %1996 = vmatprep.subr.bf16.mxu0 0
      %1997 = vmatpush1.bf16.msra.mxu0 %v1886
      %1998 = vmatprep.subr.bf16.mxu0 0
      %1999 = vmatpush1.bf16.msra.mxu0 %v1887
      %2000 = vmatprep.subr.bf16.mxu0 0
      %2001 = vmatpush1.bf16.msra.mxu0 %v1888
      %2002 = vmatprep.subr.bf16.mxu0 0
      %2003 = vmatpush1.bf16.msra.mxu0 %v1889
      %2004 = vmatprep.subr.bf16.mxu0 0
      %2005 = vmatpush1.bf16.msra.mxu0 %v1890
      %2006 = vmatprep.subr.bf16.mxu0 0
      %2007 = vmatpush1.bf16.msra.mxu0 %v1891
      %2008 = vmatprep.subr.bf16.mxu0 0
      %2009 = vmatpush1.bf16.msra.mxu0 %v1892
      %2010 = vmatprep.subr.bf16.mxu0 0
      %2011 = vmatpush1.bf16.msra.mxu0 %v1893
      %2012 = vmatprep.subr.bf16.mxu0 0
      %2013 = vmatpush1.bf16.msra.mxu0 %v1894
      %2014 = vmatprep.subr.bf16.mxu0 0
      %2015 = vmatpush1.bf16.msra.mxu0 %v1895
      %2016 = vmatprep.subr.bf16.mxu0 0
      %2017 = vmatpush1.bf16.msra.mxu0 %v1896
      %2018 = vmatprep.mubr.bf16.mxu0 %v1603
      %2019 = vmatmul.mubr.bf16.gmra.mrb[0].mxu0 0
      %v2020 = vpop.f32.mrb[0].mxu0
      %v2021 = vadd.f32 0.0, %v2020
      %v2022 = vpop.f32.mrb[0].mxu0
      %v2023 = vpop.f32.mrb[0].mxu0
      %v2024 = vadd.f32 0.0, %v2023
      %v2025 = vpop.f32.mrb[0].mxu0
      %2026 = vmatprep.mubr.bf16.mxu0 %v1607
      %2027 = vmatmul.mubr.bf16.gmra.mrb[0].mxu0 %v1410
      %v2028 = vpop.f32.mrb[0].mxu0
      %v2029 = vadd.f32 0.0, %v2028
      %v2030 = vpop.f32.mrb[0].mxu0
      %v2031 = vpop.f32.mrb[0].mxu0
      %v2032 = vadd.f32 0.0, %v2031
      %v2033 = vpop.f32.mrb[0].mxu0
      %2034 = vmatprep.mubr.bf16.mxu0 %v1611
      %2035 = vmatmul.mubr.bf16.gmra.mrb[0].mxu0 %v1414
      %v2036 = vpop.f32.mrb[0].mxu0
      %v2037 = vadd.f32 0.0, %v2036
      %v2038 = vpop.f32.mrb[0].mxu0
      %v2039 = vpop.f32.mrb[0].mxu0
      %v2040 = vadd.f32 0.0, %v2039
      %v2041 = vpop.f32.mrb[0].mxu0
      %2042 = vmatprep.mubr.bf16.mxu0 %v1615
      %2043 = vmatmul.mubr.bf16.gmra.mrb[0].mxu0 %v1418
      %v2044 = vpop.f32.mrb[0].mxu0
      %v2045 = vadd.f32 0.0, %v2044
      %v2046 = vpop.f32.mrb[0].mxu0
      %v2047 = vpop.f32.mrb[0].mxu0
      %v2048 = vadd.f32 0.0, %v2047
      %v2049 = vpop.f32.mrb[0].mxu0
      %2050 = vmatprep.mubr.bf16.mxu0 %v1619
      %2051 = vmatmul.mubr.bf16.gmra.mrb[0].mxu0 %v1422
      %v2052 = vpop.f32.mrb[0].mxu0
      %v2053 = vadd.f32 0.0, %v2052
      %v2054 = vpop.f32.mrb[0].mxu0
      %v2055 = vpop.f32.mrb[0].mxu0
      %v2056 = vadd.f32 0.0, %v2055
      %v2057 = vpop.f32.mrb[0].mxu0
      %2058 = vmatprep.mubr.bf16.mxu0 %v1623
      %2059 = vmatmul.mubr.bf16.gmra.mrb[0].mxu0 %v1426
      %v2060 = vpop.f32.mrb[0].mxu0
      %v2061 = vadd.f32 0.0, %v2060
      %v2062 = vpop.f32.mrb[0].mxu0
      %v2063 = vpop.f32.mrb[0].mxu0
      %v2064 = vadd.f32 0.0, %v2063
      %v2065 = vpop.f32.mrb[0].mxu0
      %2066 = vmatprep.mubr.bf16.mxu0 %v1627
      %2067 = vmatmul.mubr.bf16.gmra.mrb[0].mxu0 %v1430
      %v2068 = vpop.f32.mrb[0].mxu0
      %v2069 = vadd.f32 0.0, %v2068
      %v2070 = vpop.f32.mrb[0].mxu0
      %v2071 = vpop.f32.mrb[0].mxu0
      %v2072 = vadd.f32 0.0, %v2071
      %v2073 = vpop.f32.mrb[0].mxu0
      %2074 = vmatprep.mubr.bf16.mxu0 %v1631
      %2075 = vmatmul.mubr.bf16.gmra.mrb[0].mxu0 %v1434
      %v2076 = vpop.f32.mrb[0].mxu0
      %v2077 = vadd.f32 0.0, %v2076
      %v2078 = vpop.f32.mrb[0].mxu0
      %v2079 = vpop.f32.mrb[0].mxu0
      %v2080 = vadd.f32 0.0, %v2079
      %v2081 = vpop.f32.mrb[0].mxu0
      %2082 = vmatprep.mubr.bf16.mxu0 %v1635
      %2083 = vmatmul.mubr.bf16.gmra.mrb[0].mxu0 %v1438
      %v2084 = vpop.f32.mrb[0].mxu0
      %v2085 = vadd.f32 0.0, %v2084
      %v2086 = vpop.f32.mrb[0].mxu0
      %v2087 = vpop.f32.mrb[0].mxu0
      %v2088 = vadd.f32 0.0, %v2087
      %v2089 = vpop.f32.mrb[0].mxu0
      %2090 = vmatprep.mubr.bf16.mxu0 %v1639
      %2091 = vmatmul.mubr.bf16.gmra.mrb[0].mxu0 %v1442
      %v2092 = vpop.f32.mrb[0].mxu0
      %v2093 = vadd.f32 0.0, %v2092
      %v2094 = vpop.f32.mrb[0].mxu0
      %v2095 = vpop.f32.mrb[0].mxu0
      %v2096 = vadd.f32 0.0, %v2095
      %v2097 = vpop.f32.mrb[0].mxu0
      %2098 = vmatprep.mubr.bf16.mxu0 %v1643
      %2099 = vmatmul.mubr.bf16.gmra.mrb[0].mxu0 %v1446
      %v2100 = vpop.f32.mrb[0].mxu0
      %v2101 = vadd.f32 0.0, %v2100
      %v2102 = vpop.f32.mrb[0].mxu0
      %v2103 = vpop.f32.mrb[0].mxu0
      %v2104 = vadd.f32 0.0, %v2103
      %v2105 = vpop.f32.mrb[0].mxu0
      %2106 = vmatprep.mubr.bf16.mxu0 %v1647
      %2107 = vmatmul.mubr.bf16.gmra.mrb[0].mxu0 %v1450
      %v2108 = vpop.f32.mrb[0].mxu0
      %v2109 = vadd.f32 0.0, %v2108
      %v2110 = vpop.f32.mrb[0].mxu0
      %v2111 = vpop.f32.mrb[0].mxu0
      %v2112 = vadd.f32 0.0, %v2111
      %v2113 = vpop.f32.mrb[0].mxu0
      %2114 = vmatprep.mubr.bf16.mxu0 %v1651
      %2115 = vmatmul.mubr.bf16.gmra.mrb[0].mxu0 %v1454
      %v2116 = vpop.f32.mrb[0].mxu0
      %v2117 = vadd.f32 0.0, %v2116
      %v2118 = vpop.f32.mrb[0].mxu0
      %v2119 = vpop.f32.mrb[0].mxu0
      %v2120 = vadd.f32 0.0, %v2119
      %v2121 = vpop.f32.mrb[0].mxu0
      %2122 = vmatprep.mubr.bf16.mxu0 %v1655
      %2123 = vmatmul.mubr.bf16.gmra.mrb[0].mxu0 %v1458
      %v2124 = vpop.f32.mrb[0].mxu0
      %v2125 = vadd.f32 0.0, %v2124
      %v2126 = vpop.f32.mrb[0].mxu0
      %v2127 = vpop.f32.mrb[0].mxu0
      %v2128 = vadd.f32 0.0, %v2127
      %v2129 = vpop.f32.mrb[0].mxu0
      %2130 = vmatprep.mubr.bf16.mxu0 %v1659
      %2131 = vmatmul.mubr.bf16.gmra.mrb[0].mxu0 %v1462
      %v2132 = vpop.f32.mrb[0].mxu0
      %v2133 = vadd.f32 0.0, %v2132
      %v2134 = vpop.f32.mrb[0].mxu0
      %v2135 = vpop.f32.mrb[0].mxu0
      %v2136 = vadd.f32 0.0, %v2135
      %v2137 = vpop.f32.mrb[0].mxu0
      %2138 = vmatprep.mubr.bf16.mxu0 %v1663
      %2139 = vmatmul.mubr.bf16.gmra.mrb[0].mxu0 %v1466
      %v2140 = vpop.f32.mrb[0].mxu0
      %v2141 = vadd.f32 0.0, %v2140
      %v2142 = vpop.f32.mrb[0].mxu0
      %v2143 = vpop.f32.mrb[0].mxu0
      %v2144 = vadd.f32 0.0, %v2143
      %v2145 = vpop.f32.mrb[0].mxu0
      %2146 = vdwg.mxu0
      %2147 = vmatprep.subr.bf16.mxu0 0
      %2148 = vmatpush1.bf16.msra.mxu0 %v1897
      %2149 = vmatprep.subr.bf16.mxu0 0
      %2150 = vmatpush1.bf16.msra.mxu0 %v1898
      %2151 = vmatprep.subr.bf16.mxu0 0
      %2152 = vmatpush1.bf16.msra.mxu0 %v1899
      %2153 = vmatprep.subr.bf16.mxu0 0
      %2154 = vmatpush1.bf16.msra.mxu0 %v1900
      %2155 = vmatprep.subr.bf16.mxu0 0
      %2156 = vmatpush1.bf16.msra.mxu0 %v1901
      %2157 = vmatprep.subr.bf16.mxu0 0
      %2158 = vmatpush1.bf16.msra.mxu0 %v1902
      %2159 = vmatprep.subr.bf16.mxu0 0
      %2160 = vmatpush1.bf16.msra.mxu0 %v1903
      %2161 = vmatprep.subr.bf16.mxu0 0
      %2162 = vmatpush1.bf16.msra.mxu0 %v1904
      %2163 = vmatprep.subr.bf16.mxu0 0
      %2164 = vmatpush1.bf16.msra.mxu0 %v1905
      %2165 = vmatprep.subr.bf16.mxu0 0
      %2166 = vmatpush1.bf16.msra.mxu0 %v1906
      %2167 = vmatprep.subr.bf16.mxu0 0
      %2168 = vmatpush1.bf16.msra.mxu0 %v1907
      %2169 = vmatprep.subr.bf16.mxu0 0
      %2170 = vmatpush1.bf16.msra.mxu0 %v1908
      %2171 = vmatprep.subr.bf16.mxu0 0
      %2172 = vmatpush1.bf16.msra.mxu0 %v1909
      %2173 = vmatprep.subr.bf16.mxu0 0
      %2174 = vmatpush1.bf16.msra.mxu0 %v1910
      %2175 = vmatprep.subr.bf16.mxu0 0
      %2176 = vmatpush1.bf16.msra.mxu0 %v1911
      %2177 = vmatprep.subr.bf16.mxu0 0
      %2178 = vmatpush1.bf16.msra.mxu0 %v1912
      %2179 = vmatprep.mubr.bf16.mxu0 %v1414
      %2180 = vmatmul.mubr.bf16.gmra.mrb[0].mxu0 %v1569
      %v2181 = vpop.f32.mrb[0].mxu0
      %v2182 = vadd.f32 %v2021, %v2181
      %v2183 = vpop.f32.mrb[0].mxu0
      %v2184 = vpop.f32.mrb[0].mxu0
      %v2185 = vadd.f32 %v2024, %v2184
      %v2186 = vpop.f32.mrb[0].mxu0
      %2187 = vmatprep.mubr.bf16.mxu0 %v1418
      %2188 = vmatmul.mubr.bf16.gmra.mrb[0].mxu0 %v1570
      %v2189 = vpop.f32.mrb[0].mxu0
      %v2190 = vadd.f32 %v2029, %v2189
      %v2191 = vpop.f32.mrb[0].mxu0
      %v2192 = vpop.f32.mrb[0].mxu0
      %v2193 = vadd.f32 %v2032, %v2192
      %v2194 = vpop.f32.mrb[0].mxu0
      %2195 = vmatprep.mubr.bf16.mxu0 %v1422
      %2196 = vmatmul.mubr.bf16.gmra.mrb[0].mxu0 %v1571
      %v2197 = vpop.f32.mrb[0].mxu0
      %v2198 = vadd.f32 %v2037, %v2197
      %v2199 = vpop.f32.mrb[0].mxu0
      %v2200 = vpop.f32.mrb[0].mxu0
      %v2201 = vadd.f32 %v2040, %v2200
      %v2202 = vpop.f32.mrb[0].mxu0
      %2203 = vmatprep.mubr.bf16.mxu0 %v1426
      %2204 = vmatmul.mubr.bf16.gmra.mrb[0].mxu0 %v1572
      %v2205 = vpop.f32.mrb[0].mxu0
      %v2206 = vadd.f32 %v2045, %v2205
      %v2207 = vpop.f32.mrb[0].mxu0
      %v2208 = vpop.f32.mrb[0].mxu0
      %v2209 = vadd.f32 %v2048, %v2208
      %v2210 = vpop.f32.mrb[0].mxu0
      %2211 = vmatprep.mubr.bf16.mxu0 %v1430
      %2212 = vmatmul.mubr.bf16.gmra.mrb[0].mxu0 %v1573
      %v2213 = vpop.f32.mrb[0].mxu0
      %v2214 = vadd.f32 %v2053, %v2213
      %v2215 = vpop.f32.mrb[0].mxu0
      %v2216 = vpop.f32.mrb[0].mxu0
      %v2217 = vadd.f32 %v2056, %v2216
      %v2218 = vpop.f32.mrb[0].mxu0
      %2219 = vmatprep.mubr.bf16.mxu0 %v1434
      %2220 = vmatmul.mubr.bf16.gmra.mrb[0].mxu0 %v1574
      %v2221 = vpop.f32.mrb[0].mxu0
      %v2222 = vadd.f32 %v2061, %v2221
      %v2223 = vpop.f32.mrb[0].mxu0
      %v2224 = vpop.f32.mrb[0].mxu0
      %v2225 = vadd.f32 %v2064, %v2224
      %v2226 = vpop.f32.mrb[0].mxu0
      %2227 = vmatprep.mubr.bf16.mxu0 %v1438
      %2228 = vmatmul.mubr.bf16.gmra.mrb[0].mxu0 %v1575
      %v2229 = vpop.f32.mrb[0].mxu0
      %v2230 = vadd.f32 %v2069, %v2229
      %v2231 = vpop.f32.mrb[0].mxu0
      %v2232 = vpop.f32.mrb[0].mxu0
      %v2233 = vadd.f32 %v2072, %v2232
      %v2234 = vpop.f32.mrb[0].mxu0
      %2235 = vmatprep.mubr.bf16.mxu0 %v1442
      %2236 = vmatmul.mubr.bf16.gmra.mrb[0].mxu0 %v1576
      %v2237 = vpop.f32.mrb[0].mxu0
      %v2238 = vadd.f32 %v2077, %v2237
      %v2239 = vpop.f32.mrb[0].mxu0
      %v2240 = vpop.f32.mrb[0].mxu0
      %v2241 = vadd.f32 %v2080, %v2240
      %v2242 = vpop.f32.mrb[0].mxu0
      %2243 = vmatprep.mubr.bf16.mxu0 %v1446
      %2244 = vmatmul.mubr.bf16.gmra.mrb[0].mxu0 %v1577
      %v2245 = vpop.f32.mrb[0].mxu0
      %v2246 = vadd.f32 %v2085, %v2245
      %v2247 = vpop.f32.mrb[0].mxu0
      %v2248 = vpop.f32.mrb[0].mxu0
      %v2249 = vadd.f32 %v2088, %v2248
      %v2250 = vpop.f32.mrb[0].mxu0
      %2251 = vmatprep.mubr.bf16.mxu0 %v1450
      %2252 = vmatmul.mubr.bf16.gmra.mrb[0].mxu0 %v1578
      %v2253 = vpop.f32.mrb[0].mxu0
      %v2254 = vadd.f32 %v2093, %v2253
      %v2255 = vpop.f32.mrb[0].mxu0
      %v2256 = vpop.f32.mrb[0].mxu0
      %v2257 = vadd.f32 %v2096, %v2256
      %v2258 = vpop.f32.mrb[0].mxu0
      %2259 = vmatprep.mubr.bf16.mxu0 %v1454
      %2260 = vmatmul.mubr.bf16.gmra.mrb[0].mxu0 %v1579
      %v2261 = vpop.f32.mrb[0].mxu0
      %v2262 = vadd.f32 %v2101, %v2261
      %v2263 = vpop.f32.mrb[0].mxu0
      %v2264 = vpop.f32.mrb[0].mxu0
      %v2265 = vadd.f32 %v2104, %v2264
      %v2266 = vpop.f32.mrb[0].mxu0
      %2267 = vmatprep.mubr.bf16.mxu0 %v1458
      %2268 = vmatmul.mubr.bf16.gmra.mrb[0].mxu0 %v1580
      %v2269 = vpop.f32.mrb[0].mxu0
      %v2270 = vadd.f32 %v2109, %v2269
      %v2271 = vpop.f32.mrb[0].mxu0
      %v2272 = vpop.f32.mrb[0].mxu0
      %v2273 = vadd.f32 %v2112, %v2272
      %v2274 = vpop.f32.mrb[0].mxu0
      %2275 = vmatprep.mubr.bf16.mxu0 %v1462
      %2276 = vmatmul.mubr.bf16.gmra.mrb[0].mxu0 %v1581
      %v2277 = vpop.f32.mrb[0].mxu0
      %v2278 = vadd.f32 %v2117, %v2277
      %v2279 = vpop.f32.mrb[0].mxu0
      %v2280 = vpop.f32.mrb[0].mxu0
      %v2281 = vadd.f32 %v2120, %v2280
      %v2282 = vpop.f32.mrb[0].mxu0
      %2283 = vmatprep.mubr.bf16.mxu0 %v1466
      %2284 = vmatmul.mubr.bf16.gmra.mrb[0].mxu0 %v1582
      %v2285 = vpop.f32.mrb[0].mxu0
      %v2286 = vadd.f32 %v2125, %v2285
      %v2287 = vpop.f32.mrb[0].mxu0
      %v2288 = vpop.f32.mrb[0].mxu0
      %v2289 = vadd.f32 %v2128, %v2288
      %v2290 = vpop.f32.mrb[0].mxu0
      %2291 = vmatprep.mubr.bf16.mxu0 %v1470
      %2292 = vmatmul.mubr.bf16.gmra.mrb[0].mxu0 %v1583
      %v2293 = vpop.f32.mrb[0].mxu0
      %v2294 = vadd.f32 %v2133, %v2293
      %v2295 = vpop.f32.mrb[0].mxu0
      %v2296 = vpop.f32.mrb[0].mxu0
      %v2297 = vadd.f32 %v2136, %v2296
      %v2298 = vpop.f32.mrb[0].mxu0
      %2299 = vmatprep.mubr.bf16.mxu0 0
      %2300 = vmatmul.mubr.bf16.gmra.mrb[0].mxu0 %v1584
      %v2301 = vpop.f32.mrb[0].mxu0
      %v2302 = vadd.f32 %v2141, %v2301
      %v2303 = vpop.f32.mrb[0].mxu0
      %v2304 = vpop.f32.mrb[0].mxu0
      %v2305 = vadd.f32 %v2144, %v2304
      %v2306 = vpop.f32.mrb[0].mxu0
      %2307 = vdwg.mxu0
      %2308 = vmatprep.subr.bf16.mxu0 0
      %2309 = vmatpush1.bf16.msra.mxu0 %v1913
      %2310 = vmatprep.subr.bf16.mxu0 0
      %2311 = vmatpush1.bf16.msra.mxu0 %v1914
      %2312 = vmatprep.subr.bf16.mxu0 0
      %2313 = vmatpush1.bf16.msra.mxu0 %v1915
      %2314 = vmatprep.subr.bf16.mxu0 0
      %2315 = vmatpush1.bf16.msra.mxu0 %v1916
      %2316 = vmatprep.subr.bf16.mxu0 0
      %2317 = vmatpush1.bf16.msra.mxu0 0
      %2318 = vmatprep.subr.bf16.mxu0 0
      %2319 = vmatpush1.bf16.msra.mxu0 0
      %2320 = vmatprep.subr.bf16.mxu0 0
      %2321 = vmatpush1.bf16.msra.mxu0 0
      %2322 = vmatprep.subr.bf16.mxu0 0
      %2323 = vmatpush1.bf16.msra.mxu0 0
      %2324 = vmatprep.subr.bf16.mxu0 0
      %2325 = vmatpush1.bf16.msra.mxu0 0
      %2326 = vmatprep.subr.bf16.mxu0 0
      %2327 = vmatpush1.bf16.msra.mxu0 0
      %2328 = vmatprep.subr.bf16.mxu0 0
      %2329 = vmatpush1.bf16.msra.mxu0 0
      %2330 = vmatprep.subr.bf16.mxu0 0
      %2331 = vmatpush1.bf16.msra.mxu0 0
      %2332 = vmatprep.subr.bf16.mxu0 0
      %2333 = vmatpush1.bf16.msra.mxu0 0
      %2334 = vmatprep.subr.bf16.mxu0 0
      %2335 = vmatpush1.bf16.msra.mxu0 0
      %2336 = vmatprep.subr.bf16.mxu0 0
      %2337 = vmatpush1.bf16.msra.mxu0 0
      %2338 = vmatprep.subr.bf16.mxu0 0
      %2339 = vmatpush1.bf16.msra.mxu0 0
      %2340 = vmatprep.mubr.bf16.mxu0 0
      %2341 = vmatmul.mubr.bf16.gmra.mrb[0].mxu0 %v1953
      %v2342 = vpop.f32.mrb[0].mxu0
      %v2343 = vadd.f32 %v2182, %v2342
      %v2344 = vpop.f32.mrb[0].mxu0
      %v2345 = vpop.f32.mrb[0].mxu0
      %v2346 = vadd.f32 %v2185, %v2345
      %v2347 = vpop.f32.mrb[0].mxu0
      %2348 = vmatprep.mubr.bf16.mxu0 0
      %2349 = vmatmul.mubr.bf16.gmra.mrb[0].mxu0 %v1955
      %v2350 = vpop.f32.mrb[0].mxu0
      %v2351 = vadd.f32 %v2190, %v2350
      %v2352 = vpop.f32.mrb[0].mxu0
      %v2353 = vpop.f32.mrb[0].mxu0
      %v2354 = vadd.f32 %v2193, %v2353
      %v2355 = vpop.f32.mrb[0].mxu0
      %2356 = vmatprep.mubr.bf16.mxu0 0
      %2357 = vmatmul.mubr.bf16.gmra.mrb[0].mxu0 %v1957
      %v2358 = vpop.f32.mrb[0].mxu0
      %v2359 = vadd.f32 %v2198, %v2358
      %v2360 = vpop.f32.mrb[0].mxu0
      %v2361 = vpop.f32.mrb[0].mxu0
      %v2362 = vadd.f32 %v2201, %v2361
      %v2363 = vpop.f32.mrb[0].mxu0
      %2364 = vmatprep.mubr.bf16.mxu0 0
      %2365 = vmatmul.mubr.bf16.gmra.mrb[0].mxu0 %v1959
      %v2366 = vpop.f32.mrb[0].mxu0
      %v2367 = vadd.f32 %v2206, %v2366
      %v2368 = vpop.f32.mrb[0].mxu0
      %v2369 = vpop.f32.mrb[0].mxu0
      %v2370 = vadd.f32 %v2209, %v2369
      %v2371 = vpop.f32.mrb[0].mxu0
      %2372 = vmatprep.mubr.bf16.mxu0 0
      %2373 = vmatmul.mubr.bf16.gmra.mrb[0].mxu0 %v1961
      %v2374 = vpop.f32.mrb[0].mxu0
      %v2375 = vadd.f32 %v2214, %v2374
      %v2376 = vpop.f32.mrb[0].mxu0
      %v2377 = vpop.f32.mrb[0].mxu0
      %v2378 = vadd.f32 %v2217, %v2377
      %v2379 = vpop.f32.mrb[0].mxu0
      %2380 = vmatprep.mubr.bf16.mxu0 0
      %2381 = vmatmul.mubr.bf16.gmra.mrb[0].mxu0 %v1963
      %v2382 = vpop.f32.mrb[0].mxu0
      %v2383 = vadd.f32 %v2222, %v2382
      %v2384 = vpop.f32.mrb[0].mxu0
      %v2385 = vpop.f32.mrb[0].mxu0
      %v2386 = vadd.f32 %v2225, %v2385
      %v2387 = vpop.f32.mrb[0].mxu0
      %2388 = vmatprep.mubr.bf16.mxu0 0
      %2389 = vmatmul.mubr.bf16.gmra.mrb[0].mxu0 %v1965
      %v2390 = vpop.f32.mrb[0].mxu0
      %v2391 = vadd.f32 %v2230, %v2390
      %v2392 = vpop.f32.mrb[0].mxu0
      %v2393 = vpop.f32.mrb[0].mxu0
      %v2394 = vadd.f32 %v2233, %v2393
      %v2395 = vpop.f32.mrb[0].mxu0
      %2396 = vmatprep.mubr.bf16.mxu0 0
      %2397 = vmatmul.mubr.bf16.gmra.mrb[0].mxu0 %v1967
      %v2398 = vpop.f32.mrb[0].mxu0
      %v2399 = vadd.f32 %v2238, %v2398
      %v2400 = vpop.f32.mrb[0].mxu0
      %v2401 = vpop.f32.mrb[0].mxu0
      %v2402 = vadd.f32 %v2241, %v2401
      %v2403 = vpop.f32.mrb[0].mxu0
      %2404 = vmatprep.mubr.bf16.mxu0 0
      %2405 = vmatmul.mubr.bf16.gmra.mrb[0].mxu0 %v1969
      %v2406 = vpop.f32.mrb[0].mxu0
      %v2407 = vadd.f32 %v2246, %v2406
      %v2408 = vpop.f32.mrb[0].mxu0
      %v2409 = vpop.f32.mrb[0].mxu0
      %v2410 = vadd.f32 %v2249, %v2409
      %v2411 = vpop.f32.mrb[0].mxu0
      %2412 = vmatprep.mubr.bf16.mxu0 0
      %2413 = vmatmul.mubr.bf16.gmra.mrb[0].mxu0 %v1971
      %v2414 = vpop.f32.mrb[0].mxu0
      %v2415 = vadd.f32 %v2254, %v2414
      %v2416 = vpop.f32.mrb[0].mxu0
      %v2417 = vpop.f32.mrb[0].mxu0
      %v2418 = vadd.f32 %v2257, %v2417
      %v2419 = vpop.f32.mrb[0].mxu0
      %2420 = vmatprep.mubr.bf16.mxu0 0
      %2421 = vmatmul.mubr.bf16.gmra.mrb[0].mxu0 %v1973
      %v2422 = vpop.f32.mrb[0].mxu0
      %v2423 = vadd.f32 %v2262, %v2422
      %v2424 = vpop.f32.mrb[0].mxu0
      %v2425 = vpop.f32.mrb[0].mxu0
      %v2426 = vadd.f32 %v2265, %v2425
      %v2427 = vpop.f32.mrb[0].mxu0
      %2428 = vmatprep.mubr.bf16.mxu0 0
      %2429 = vmatmul.mubr.bf16.gmra.mrb[0].mxu0 %v1975
      %v2430 = vpop.f32.mrb[0].mxu0
      %v2431 = vadd.f32 %v2270, %v2430
      %v2432 = vpop.f32.mrb[0].mxu0
      %v2433 = vpop.f32.mrb[0].mxu0
      %v2434 = vadd.f32 %v2273, %v2433
      %v2435 = vpop.f32.mrb[0].mxu0
      %2436 = vmatprep.mubr.bf16.mxu0 0
      %2437 = vmatmul.mubr.bf16.gmra.mrb[0].mxu0 %v1977
      %v2438 = vpop.f32.mrb[0].mxu0
      %v2439 = vadd.f32 %v2278, %v2438
      %v2440 = vpop.f32.mrb[0].mxu0
      %v2441 = vpop.f32.mrb[0].mxu0
      %v2442 = vadd.f32 %v2281, %v2441
      %v2443 = vpop.f32.mrb[0].mxu0
      %2444 = vmatprep.mubr.bf16.mxu0 0
      %2445 = vmatmul.mubr.bf16.gmra.mrb[0].mxu0 %v1979
      %v2446 = vpop.f32.mrb[0].mxu0
      %v2447 = vadd.f32 %v2286, %v2446
      %v2448 = vpop.f32.mrb[0].mxu0
      %v2449 = vpop.f32.mrb[0].mxu0
      %v2450 = vadd.f32 %v2289, %v2449
      %v2451 = vpop.f32.mrb[0].mxu0
      %2452 = vmatprep.mubr.bf16.mxu0 0
      %2453 = vmatmul.mubr.bf16.gmra.mrb[0].mxu0 %v1982
      %v2454 = vpop.f32.mrb[0].mxu0
      %v2455 = vadd.f32 %v2294, %v2454
      %v2456 = vpop.f32.mrb[0].mxu0
      %v2457 = vpop.f32.mrb[0].mxu0
      %v2458 = vadd.f32 %v2297, %v2457
      %v2459 = vpop.f32.mrb[0].mxu0
      %2460 = vmatprep.mubr.bf16.mxu0 0
      %2461 = vmatmul.mubr.bf16.gmra.mrb[0].mxu0 %v1984
      %v2462 = vpop.f32.mrb[0].mxu0
      %v2463 = vadd.f32 %v2302, %v2462
      %v2464 = vpop.f32.mrb[0].mxu0
      %v2465 = vpop.f32.mrb[0].mxu0
      %v2466 = vadd.f32 %v2305, %v2465
      %v2467 = vpop.f32.mrb[0].mxu0
      %2468 = vdwg.mxu0
      %v2469 = vpack.c.bf16 %v2346, %v2343
      %v2470 = vpack.c.bf16 %v2354, %v2351
      %v2471 = vpack.c.bf16 %v2362, %v2359
      %v2472 = vpack.c.bf16 %v2370, %v2367
      %v2473 = vpack.c.bf16 %v2378, %v2375
      %v2474 = vpack.c.bf16 %v2386, %v2383
      %v2475 = vpack.c.bf16 %v2394, %v2391
      %v2476 = vpack.c.bf16 %v2402, %v2399
      %v2477 = vpack.c.bf16 %v2410, %v2407
      %v2478 = vpack.c.bf16 %v2418, %v2415
      %v2479 = vpack.c.bf16 %v2426, %v2423
      %v2480 = vpack.c.bf16 %v2434, %v2431
      %v2481 = vpack.c.bf16 %v2442, %v2439
      %v2482 = vpack.c.bf16 %v2450, %v2447
      %v2483 = vpack.c.bf16 %v2458, %v2455
      %v2484 = vpack.c.bf16 %v2466, %v2463
      %v2501 = vunpack.c.l.b16 %v2469
      %v2502 = vunpack.c.h.b16 %v2469
      %v2503 = vunpack.c.l.b16 %v2470
      %v2504 = vunpack.c.h.b16 %v2470
      %v2505 = vunpack.c.l.b16 %v2471
      %v2506 = vunpack.c.h.b16 %v2471
      %v2507 = vunpack.c.l.b16 %v2472
      %v2508 = vunpack.c.h.b16 %v2472
      %v2509 = vunpack.c.l.b16 %v2473
      %v2510 = vunpack.c.h.b16 %v2473
      %v2511 = vunpack.c.l.b16 %v2474
      %v2512 = vunpack.c.h.b16 %v2474
      %v2513 = vunpack.c.l.b16 %v2475
      %v2514 = vunpack.c.h.b16 %v2475
      %v2515 = vunpack.c.l.b16 %v2476
      %v2516 = vunpack.c.h.b16 %v2476
      %v2517 = vunpack.c.l.b16 %v2477
      %v2518 = vunpack.c.h.b16 %v2477
      %v2519 = vunpack.c.l.b16 %v2478
      %v2520 = vunpack.c.h.b16 %v2478
      %v2521 = vunpack.c.l.b16 %v2479
      %v2522 = vunpack.c.h.b16 %v2479
      %v2523 = vunpack.c.l.b16 %v2480
      %v2524 = vunpack.c.h.b16 %v2480
      %v2525 = vunpack.c.l.b16 %v2481
      %v2526 = vunpack.c.h.b16 %v2481
      %v2527 = vunpack.c.l.b16 %v2482
      %v2528 = vunpack.c.h.b16 %v2482
      %v2529 = vunpack.c.l.b16 %v2483
      %v2530 = vunpack.c.h.b16 %v2483
      %v2531 = vunpack.c.l.b16 %v2484
      %v2532 = vunpack.c.h.b16 %v2484
      %v2533 = vpack.c.b16 %v2501, %v2501
      %v2534 = vpack.c.b16 %v2502, %v2502
      %v2535 = vpack.c.b16 %v2503, %v2503
      %v2536 = vpack.c.b16 %v2504, %v2504
      %v2537 = vpack.c.b16 %v2505, %v2505
      %v2538 = vpack.c.b16 %v2506, %v2506
      %v2539 = vpack.c.b16 %v2507, %v2507
      %v2540 = vpack.c.b16 %v2508, %v2508
      %v2541 = vpack.c.b16 %v2509, %v2509
      %v2542 = vpack.c.b16 %v2510, %v2510
      %v2543 = vpack.c.b16 %v2511, %v2511
      %v2544 = vpack.c.b16 %v2512, %v2512
      %v2545 = vpack.c.b16 %v2513, %v2513
      %v2546 = vpack.c.b16 %v2514, %v2514
      %v2547 = vpack.c.b16 %v2515, %v2515
      %v2548 = vpack.c.b16 %v2516, %v2516
      %v2549 = vpack.c.b16 %v2517, %v2517
      %v2550 = vpack.c.b16 %v2518, %v2518
      %v2551 = vpack.c.b16 %v2519, %v2519
      %v2552 = vpack.c.b16 %v2520, %v2520
      %v2553 = vpack.c.b16 %v2521, %v2521
      %v2554 = vpack.c.b16 %v2522, %v2522
      %v2555 = vpack.c.b16 %v2523, %v2523
      %v2556 = vpack.c.b16 %v2524, %v2524
      %v2557 = vpack.c.b16 %v2525, %v2525
      %v2558 = vpack.c.b16 %v2526, %v2526
      %v2559 = vpack.c.b16 %v2527, %v2527
      %v2560 = vpack.c.b16 %v2528, %v2528
      %v2561 = vpack.c.b16 %v2529, %v2529
      %v2562 = vpack.c.b16 %v2530, %v2530
      %v2563 = vpack.c.b16 %v2531, %v2531
      %v2564 = vpack.c.b16 %v2532, %v2532
      %vm2597 = vcmask 519168
      %2598 = vst.msk [vmem:[%s232] sm:$0xf] %vm2597, %v2533
      %2599 = vst.msk [vmem:[%s232 + $0x4] sm:$0xf] %vm2597, %v2534
      %2600 = vst.msk [vmem:[%s232 + $0x8] sm:$0xf] %vm2597, %v2535
      %2601 = vst.msk [vmem:[%s232 + $0xc] sm:$0xf] %vm2597, %v2536
      %2602 = vst.msk [vmem:[%s232 + $0x10] sm:$0xf] %vm2597, %v2537
      %2603 = vst.msk [vmem:[%s232 + $0x14] sm:$0xf] %vm2597, %v2538
      %2604 = vst.msk [vmem:[%s232 + $0x18] sm:$0xf] %vm2597, %v2539
      %2605 = vst.msk [vmem:[%s232 + $0x1c] sm:$0xf] %vm2597, %v2540
      %2606 = vst.msk [vmem:[%s232 + $0x20] sm:$0xf] %vm2597, %v2541
      %2607 = vst.msk [vmem:[%s232 + $0x24] sm:$0xf] %vm2597, %v2542
      %2608 = vst.msk [vmem:[%s232 + $0x28] sm:$0xf] %vm2597, %v2543
      %2609 = vst.msk [vmem:[%s232 + $0x2c] sm:$0xf] %vm2597, %v2544
      %2610 = vst.msk [vmem:[%s232 + $0x30] sm:$0xf] %vm2597, %v2545
      %2611 = vst.msk [vmem:[%s232 + $0x34] sm:$0xf] %vm2597, %v2546
      %2612 = vst.msk [vmem:[%s232 + $0x38] sm:$0xf] %vm2597, %v2547
      %2613 = vst.msk [vmem:[%s232 + $0x3c] sm:$0xf] %vm2597, %v2548
      %2614 = vst.msk [vmem:[%s232 + $0x40] sm:$0xf] %vm2597, %v2549
      %2615 = vst.msk [vmem:[%s232 + $0x44] sm:$0xf] %vm2597, %v2550
      %2616 = vst.msk [vmem:[%s232 + $0x48] sm:$0xf] %vm2597, %v2551
      %2617 = vst.msk [vmem:[%s232 + $0x4c] sm:$0xf] %vm2597, %v2552
      %2618 = vst.msk [vmem:[%s232 + $0x50] sm:$0xf] %vm2597, %v2553
      %2619 = vst.msk [vmem:[%s232 + $0x54] sm:$0xf] %vm2597, %v2554
      %2620 = vst.msk [vmem:[%s232 + $0x58] sm:$0xf] %vm2597, %v2555
      %2621 = vst.msk [vmem:[%s232 + $0x5c] sm:$0xf] %vm2597, %v2556
      %2622 = vst.msk [vmem:[%s232 + $0x60] sm:$0xf] %vm2597, %v2557
      %2623 = vst.msk [vmem:[%s232 + $0x64] sm:$0xf] %vm2597, %v2558
      %2624 = vst.msk [vmem:[%s232 + $0x68] sm:$0xf] %vm2597, %v2559
      %2625 = vst.msk [vmem:[%s232 + $0x6c] sm:$0xf] %vm2597, %v2560
      %2626 = vst.msk [vmem:[%s232 + $0x70] sm:$0xf] %vm2597, %v2561
      %2627 = vst.msk [vmem:[%s232 + $0x74] sm:$0xf] %vm2597, %v2562
      %2628 = vst.msk [vmem:[%s232 + $0x78] sm:$0xf] %vm2597, %v2563
      %2629 = vst.msk [vmem:[%s232 + $0x7c] sm:$0xf] %vm2597, %v2564
      %v2630 = vunpack.c.l.bf16 %v2469
      %v2631 = vunpack.c.h.bf16 %v2469
      %v2632 = vunpack.c.l.bf16 %v2470
      %v2633 = vunpack.c.h.bf16 %v2470
      %v2634 = vunpack.c.l.bf16 %v2471
      %v2635 = vunpack.c.h.bf16 %v2471
      %v2636 = vunpack.c.l.bf16 %v2472
      %v2637 = vunpack.c.h.bf16 %v2472
      %v2638 = vunpack.c.l.bf16 %v2473
      %v2639 = vunpack.c.h.bf16 %v2473
      %v2640 = vunpack.c.l.bf16 %v2474
      %v2641 = vunpack.c.h.bf16 %v2474
      %v2642 = vunpack.c.l.bf16 %v2475
      %v2643 = vunpack.c.h.bf16 %v2475
      %v2644 = vunpack.c.l.bf16 %v2476
      %v2645 = vunpack.c.h.bf16 %v2476
      %v2646 = vunpack.c.l.bf16 %v2477
      %v2647 = vunpack.c.h.bf16 %v2477
      %v2648 = vunpack.c.l.bf16 %v2478
      %v2649 = vunpack.c.h.bf16 %v2478
      %v2650 = vunpack.c.l.bf16 %v2479
      %v2651 = vunpack.c.h.bf16 %v2479
      %v2652 = vunpack.c.l.bf16 %v2480
      %v2653 = vunpack.c.h.bf16 %v2480
      %v2654 = vunpack.c.l.bf16 %v2481
      %v2655 = vunpack.c.h.bf16 %v2481
      %v2656 = vunpack.c.l.bf16 %v2482
      %v2657 = vunpack.c.h.bf16 %v2482
      %v2658 = vunpack.c.l.bf16 %v2483
      %v2659 = vunpack.c.h.bf16 %v2483
      %v2660 = vunpack.c.l.bf16 %v2484
      %v2661 = vunpack.c.h.bf16 %v2484
      %v2662 = vsel %vm1407, %v2630, 0.0
      %v2663 = vsel %vm1407, %v2631, 0.0
      %v2664 = vadd.f32 %v2662, %v2663
      %v2665 = vsel %vm1407, %v2632, 0.0
      %v2666 = vadd.f32 %v2664, %v2665
      %v2667 = vsel %vm1407, %v2633, 0.0
      %v2668 = vadd.f32 %v2666, %v2667
      %v2669 = vsel %vm1407, %v2634, 0.0
      %v2670 = vadd.f32 %v2668, %v2669
      %v2671 = vsel %vm1407, %v2635, 0.0
      %v2672 = vadd.f32 %v2670, %v2671
      %v2673 = vsel %vm1407, %v2636, 0.0
      %v2674 = vadd.f32 %v2672, %v2673
      %v2675 = vsel %vm1407, %v2637, 0.0
      %v2676 = vadd.f32 %v2674, %v2675
      %v2677 = vsel %vm1407, %v2638, 0.0
      %v2678 = vadd.f32 %v2676, %v2677
      %v2679 = vsel %vm1407, %v2639, 0.0
      %v2680 = vadd.f32 %v2678, %v2679
      %v2681 = vsel %vm1407, %v2640, 0.0
      %v2682 = vadd.f32 %v2680, %v2681
      %v2683 = vsel %vm1407, %v2641, 0.0
      %v2684 = vadd.f32 %v2682, %v2683
      %v2685 = vsel %vm1407, %v2642, 0.0
      %v2686 = vadd.f32 %v2684, %v2685
      %v2687 = vsel %vm1407, %v2643, 0.0
      %v2688 = vadd.f32 %v2686, %v2687
      %v2689 = vsel %vm1407, %v2644, 0.0
      %v2690 = vadd.f32 %v2688, %v2689
      %v2691 = vsel %vm1407, %v2645, 0.0
      %v2692 = vadd.f32 %v2690, %v2691
      %v2693 = vsel %vm1407, %v2646, 0.0
      %v2694 = vadd.f32 %v2692, %v2693
      %v2695 = vsel %vm1407, %v2647, 0.0
      %v2696 = vadd.f32 %v2694, %v2695
      %v2697 = vsel %vm1407, %v2648, 0.0
      %v2698 = vadd.f32 %v2696, %v2697
      %v2699 = vsel %vm1407, %v2649, 0.0
      %v2700 = vadd.f32 %v2698, %v2699
      %v2701 = vsel %vm1407, %v2650, 0.0
      %v2702 = vadd.f32 %v2700, %v2701
      %v2703 = vsel %vm1407, %v2651, 0.0
      %v2704 = vadd.f32 %v2702, %v2703
      %v2705 = vsel %vm1407, %v2652, 0.0
      %v2706 = vadd.f32 %v2704, %v2705
      %v2707 = vsel %vm1407, %v2653, 0.0
      %v2708 = vadd.f32 %v2706, %v2707
      %v2709 = vsel %vm1407, %v2654, 0.0
      %v2710 = vadd.f32 %v2708, %v2709
      %v2711 = vsel %vm1407, %v2655, 0.0
      %v2712 = vadd.f32 %v2710, %v2711
      %v2713 = vsel %vm1407, %v2656, 0.0
      %v2714 = vadd.f32 %v2712, %v2713
      %v2715 = vsel %vm1407, %v2657, 0.0
      %v2716 = vadd.f32 %v2714, %v2715
      %v2717 = vsel %vm1407, %v2658, 0.0
      %v2718 = vadd.f32 %v2716, %v2717
      %v2719 = vsel %vm1407, %v2659, 0.0
      %v2720 = vadd.f32 %v2718, %v2719
      %v2721 = vsel %vm1407, %v2660, 0.0
      %v2722 = vadd.f32 %v2720, %v2721
      %v2723 = vsel %vm1407, %v2661, 0.0
      %v2724 = vadd.f32 %v2722, %v2723
      %v2725 = vrot.slane %v2724, 4
      %v2726 = vadd.f32 %v2724, %v2725
      %v2727 = vrot.slane %v2726, 2
      %v2728 = vadd.f32 %v2726, %v2727
      %v2729 = vrot.slane %v2728, 1
      %v2730 = vadd.f32 %v2728, %v2729
      %v2731 = vmul.f32 %v2630, %v2630
      %v2732 = vmul.f32 %v2631, %v2631
      %v2733 = vmul.f32 %v2632, %v2632
      %v2734 = vmul.f32 %v2633, %v2633
      %v2735 = vmul.f32 %v2634, %v2634
      %v2736 = vmul.f32 %v2635, %v2635
      %v2737 = vmul.f32 %v2636, %v2636
      %v2738 = vmul.f32 %v2637, %v2637
      %v2739 = vmul.f32 %v2638, %v2638
      %v2740 = vmul.f32 %v2639, %v2639
      %v2741 = vmul.f32 %v2640, %v2640
      %v2742 = vmul.f32 %v2641, %v2641
      %v2743 = vmul.f32 %v2642, %v2642
      %v2744 = vmul.f32 %v2643, %v2643
      %v2745 = vmul.f32 %v2644, %v2644
      %v2746 = vmul.f32 %v2645, %v2645
      %v2747 = vmul.f32 %v2646, %v2646
      %v2748 = vmul.f32 %v2647, %v2647
      %v2749 = vmul.f32 %v2648, %v2648
      %v2750 = vmul.f32 %v2649, %v2649
      %v2751 = vmul.f32 %v2650, %v2650
      %v2752 = vmul.f32 %v2651, %v2651
      %v2753 = vmul.f32 %v2652, %v2652
      %v2754 = vmul.f32 %v2653, %v2653
      %v2755 = vmul.f32 %v2654, %v2654
      %v2756 = vmul.f32 %v2655, %v2655
      %v2757 = vmul.f32 %v2656, %v2656
      %v2758 = vmul.f32 %v2657, %v2657
      %v2759 = vmul.f32 %v2658, %v2658
      %v2760 = vmul.f32 %v2659, %v2659
      %v2761 = vmul.f32 %v2660, %v2660
      %v2762 = vmul.f32 %v2661, %v2661
      %v2763 = vsel %vm1407, %v2731, 0.0
      %v2764 = vsel %vm1407, %v2732, 0.0
      %v2765 = vadd.f32 %v2763, %v2764
      %v2766 = vsel %vm1407, %v2733, 0.0
      %v2767 = vadd.f32 %v2765, %v2766
      %v2768 = vsel %vm1407, %v2734, 0.0
      %v2769 = vadd.f32 %v2767, %v2768
      %v2770 = vsel %vm1407, %v2735, 0.0
      %v2771 = vadd.f32 %v2769, %v2770
      %v2772 = vsel %vm1407, %v2736, 0.0
      %v2773 = vadd.f32 %v2771, %v2772
      %v2774 = vsel %vm1407, %v2737, 0.0
      %v2775 = vadd.f32 %v2773, %v2774
      %v2776 = vsel %vm1407, %v2738, 0.0
      %v2777 = vadd.f32 %v2775, %v2776
      %v2778 = vsel %vm1407, %v2739, 0.0
      %v2779 = vadd.f32 %v2777, %v2778
      %v2780 = vsel %vm1407, %v2740, 0.0
      %v2781 = vadd.f32 %v2779, %v2780
      %v2782 = vsel %vm1407, %v2741, 0.0
      %v2783 = vadd.f32 %v2781, %v2782
      %v2784 = vsel %vm1407, %v2742, 0.0
      %v2785 = vadd.f32 %v2783, %v2784
      %v2786 = vsel %vm1407, %v2743, 0.0
      %v2787 = vadd.f32 %v2785, %v2786
      %v2788 = vsel %vm1407, %v2744, 0.0
      %v2789 = vadd.f32 %v2787, %v2788
      %v2790 = vsel %vm1407, %v2745, 0.0
      %v2791 = vadd.f32 %v2789, %v2790
      %v2792 = vsel %vm1407, %v2746, 0.0
      %v2793 = vadd.f32 %v2791, %v2792
      %v2794 = vsel %vm1407, %v2747, 0.0
      %v2795 = vadd.f32 %v2793, %v2794
      %v2796 = vsel %vm1407, %v2748, 0.0
      %v2797 = vadd.f32 %v2795, %v2796
      %v2798 = vsel %vm1407, %v2749, 0.0
      %v2799 = vadd.f32 %v2797, %v2798
      %v2800 = vsel %vm1407, %v2750, 0.0
      %v2801 = vadd.f32 %v2799, %v2800
      %v2802 = vsel %vm1407, %v2751, 0.0
      %v2803 = vadd.f32 %v2801, %v2802
      %v2804 = vsel %vm1407, %v2752, 0.0
      %v2805 = vadd.f32 %v2803, %v2804
      %v2806 = vsel %vm1407, %v2753, 0.0
      %v2807 = vadd.f32 %v2805, %v2806
      %v2808 = vsel %vm1407, %v2754, 0.0
      %v2809 = vadd.f32 %v2807, %v2808
      %v2810 = vsel %vm1407, %v2755, 0.0
      %v2811 = vadd.f32 %v2809, %v2810
      %v2812 = vsel %vm1407, %v2756, 0.0
      %v2813 = vadd.f32 %v2811, %v2812
      %v2814 = vsel %vm1407, %v2757, 0.0
      %v2815 = vadd.f32 %v2813, %v2814
      %v2816 = vsel %vm1407, %v2758, 0.0
      %v2817 = vadd.f32 %v2815, %v2816
      %v2818 = vsel %vm1407, %v2759, 0.0
      %v2819 = vadd.f32 %v2817, %v2818
      %v2820 = vsel %vm1407, %v2760, 0.0
      %v2821 = vadd.f32 %v2819, %v2820
      %v2822 = vsel %vm1407, %v2761, 0.0
      %v2823 = vadd.f32 %v2821, %v2822
      %v2824 = vsel %vm1407, %v2762, 0.0
      %v2825 = vadd.f32 %v2823, %v2824
      %v2826 = vrot.slane %v2825, 4
      %v2827 = vadd.f32 %v2825, %v2826
      %v2828 = vrot.slane %v2827, 2
      %v2829 = vadd.f32 %v2827, %v2828
      %v2830 = vrot.slane %v2829, 1
      %v2831 = vadd.f32 %v2829, %v2830
      %2833 = vrot.lane.b32.xlu0 %v2831, 64
      %v2834 = vpop.permute.xlu0 %2833
      %v2836 = vsel %vm1407, %v2730, %v2834
      %2837 = vst [vmem:[%s236] sm:$0x1] %v2836
      %s2838 = smul.u32 32, %s17
      %p2839 = scmp.lt.s32.totalorder %s2838, 63
      %s2840 = scalar_select %p2839, %s2838, 63
      %s2841 = smul.addr %s2840, 4
      %s2842 = scalar_lea.vmem %s4, %s2841
      %p2843 = scmp.lt.s32.totalorder %s17, 1
      %s2844 = scalar_select %p2843, %s17, 1
      %s2845 = scalar_lea.vmem %s5, %s2844
      // Predicated region
      $region37: #{_lambda_.5} parent=35 // pred_check
        %p2846 = pneg %p124
      $region38: #{_lambda_.5} parent=35 // pred_check_branch
        %2848 = sbr.rel (%p2846) target = $region40
      $region39: #{_lambda_.5} parent=35 // pred_region
        %s2849 = smul.u32 32, %s17
      $region40: #{_lambda_.5} parent=35 // pred_fallthru
        _
      // Predicated region
      $region41: #{_lambda_.5} parent=35 // pred_check
        %p2850 = pneg %p150
      $region42: #{_lambda_.5} parent=35 // pred_check_branch
        %2852 = sbr.rel (%p2850) target = $region44
      $region43: #{_lambda_.5} parent=35 // pred_region
        _
      $region44: #{_lambda_.5} parent=35 // pred_fallthru
        _
    $region36: #{_lambda_.5} parent=5 // pred_fallthru
      _
    %p2853 = scmp.le.s32.totalorder 2, %s12
    // Predicated region
    $region45: #{_lambda_.5} parent=5 // pred_check
      %p2854 = pneg %p2853
    $region46: #{_lambda_.5} parent=5 // pred_check_branch
      %2856 = sbr.rel (%p2854) target = $region48
    $region47: #{_lambda_.5} parent=5 // pred_region
      %s2857 = ssub.s32 %s12, 2
      // Predicated region
      $region49: #{_lambda_.5} parent=47 // pred_check
        %p2858 = pneg %p130
      $region50: #{_lambda_.5} parent=47 // pred_check_branch
        %2860 = sbr.rel (%p2858) target = $region52
      $region51: #{_lambda_.5} parent=47 // pred_region
        %s2861 = smul.u32 32, %s18
        %p2862 = scmp.lt.s32.totalorder %s2861, 63
        %s2863 = scalar_select %p2862, %s2861, 63
        %s2864 = smul.addr %s2863, 4
        %s2865 = scalar_lea.vmem %s4, %s2864
      $region52: #{_lambda_.5} parent=47 // pred_fallthru
        _
      // Predicated region
      $region53: #{_lambda_.5} parent=47 // pred_check
        %p2866 = pneg %p156
      $region54: #{_lambda_.5} parent=47 // pred_check_branch
        %2868 = sbr.rel (%p2866) target = $region56
      $region55: #{_lambda_.5} parent=47 // pred_region
        %p2869 = scmp.lt.s32.totalorder %s18, 1
        %s2870 = scalar_select %p2869, %s18, 1
        %s2871 = scalar_lea.vmem %s5, %s2870
      $region56: #{_lambda_.5} parent=47 // pred_fallthru
        _
    $region48: #{_lambda_.5} parent=5 // pred_fallthru
      _
  $region6: #{_lambda_.5} parent=0 // loop_footer
    %s16 = sadd.s32 1, %s12
  $region7: #{_lambda_.5} parent=0 // loop_footer_branch
    %11 = sbr.rel target = $region3
  $region8: #{_lambda_.5} parent=0 // loop_exit
    _

</llo_original>
